<compile_context>
chip_gen: v7x
topology: tpu7x:2x2x1
jax: 0.10.0
libtpu: 0.0.40
codegen_flags: <defaults>
</compile_context>

<pallas_src>
import jax
import jax.numpy as jnp
from jax import lax
from jax.experimental import pallas as pl
from jax.experimental.pallas import tpu as pltpu

EPS = 1e-5

# Static layer configuration: (C_in, C_out, L_in) per conv layer (k=5, s=2, p=2).
_LAYERS = ((2, 32, 256), (32, 64, 128), (64, 128, 64), (128, 256, 32))
_L_FINAL = 16
_C_FINAL = 256

# Row layout of the single packed parameter slab (lanes = 256, f32):
#   weights : layer l at rows [_W_OFF[l], _W_OFF[l]+5*Cin_l), lanes [0, Cout_l)
#   bn/bias : rows [_P_OFF[l], _P_OFF[l]+3) = [conv bias; bn gamma; bn beta]
#   fc      : wf rows [_WF_OFF, _WF_OFF+16) with wf[l, c] = fc_w[c*16 + l];
#             fc bias at (_FCB_OFF, 0)
_W_OFF = (0, 16, 176, 496)            # 8-aligned starts for 10/160/320/640 rows
_P_OFF = (1136, 1144, 1152, 1160)
_WF_OFF = 1168
_FCB_OFF = 1184
_SLAB_ROWS = 1192                     # multiple of 8
_SLAB_LANES = 256

_VMEM = pl.BlockSpec(memory_space=pltpu.MemorySpace.VMEM)


# ------------------------------ fused kernel ------------------------------- #

def _fused_disc_kernel(x_ref, slab_ref, o_ref, buf1, buf2, buf3, buf4, col_ref):
    """4x (Conv1d k5 s2 p2 + BatchNorm1d(train) + Tanh) + Linear, all in VMEM."""
    bufs = (buf1, buf2, buf3, buf4)
    bsz = x_ref.shape[0]

    # Stage x (B, L, C) into layer-1's zero-padded buffer (pad = 2 each side).
    c0, _, l0 = _LAYERS[0]
    buf1[:, 0:2, :] = jnp.zeros((bsz, 2, c0), jnp.float32)
    buf1[:, 2 + l0:4 + l0, :] = jnp.zeros((bsz, 2, c0), jnp.float32)
    buf1[:, 2:2 + l0, :] = x_ref[...]

    act = None
    for li, (cin, cout, lin) in enumerate(_LAYERS):
        lout = lin // 2
        m = bsz * lout
        in_buf = bufs[li]
        w_row = _W_OFF[li]
        p_row = _P_OFF[li]

        # -- im2col: 5 stride-2 sublane taps -> one shared VMEM slab ----------
        # (single scratch reused by all four layers; one native strided load
        #  plus one contiguous banded store per tap)
        for k in range(5):
            tap = in_buf[:, pl.ds(k, lout, stride=2), :].reshape(m, cin)
            col_ref[0:m, k * cin:(k + 1) * cin] = tap

        # -- conv as ONE (M, 5*Cin) @ (5*Cin, Cout) MXU matmul ---------------
        xcol = col_ref[0:m, 0:5 * cin]
        w = slab_ref[w_row:w_row + 5 * cin, 0:cout]
        y = jnp.dot(xcol, w, preferred_element_type=jnp.float32)
        y = y + slab_ref[p_row:p_row + 1, 0:cout]            # conv bias

        # -- BatchNorm1d (training-mode batch stats, biased var), two-pass ---
        inv_m = 1.0 / m
        mean = jnp.sum(y, axis=0, keepdims=True) * inv_m
        d = y - mean
        var = jnp.sum(d * d, axis=0, keepdims=True) * inv_m
        xn = d * lax.rsqrt(var + EPS)
        gamma = slab_ref[p_row + 1:p_row + 2, 0:cout]
        beta = slab_ref[p_row + 2:p_row + 3, 0:cout]
        act = jnp.tanh(gamma * xn + beta)                    # (M, Cout)

        # -- stage into the next layer's zero-padded buffer (stays in VMEM) --
        if li + 1 < len(_LAYERS):
            nxt = bufs[li + 1]
            nxt[:, 0:2, :] = jnp.zeros((bsz, 2, cout), jnp.float32)
            nxt[:, 2 + lout:4 + lout, :] = jnp.zeros((bsz, 2, cout), jnp.float32)
            nxt[:, 2:2 + lout, :] = act.reshape(bsz, lout, cout)

    # -- final Linear folded into the epilogue: PyTorch flattens (C, L), so ---
    # wf[l, c] = fc_w[c*16 + l]; out[b] = sum_{l,c} act[b,l,c] * wf[l,c] + bias.
    y4 = act.reshape(bsz, _L_FINAL, _C_FINAL)
    wf = slab_ref[_WF_OFF:_WF_OFF + _L_FINAL, 0:_C_FINAL]
    red = jnp.sum(jnp.sum(y4 * wf[None, :, :], axis=2), axis=1, keepdims=True)
    o_ref[...] = red + slab_ref[_FCB_OFF:_FCB_OFF + 1, 0:1]


def _fused_forward(x_nlc, slab):
    bsz = x_nlc.shape[0]
    scratch = [pltpu.VMEM((bsz, lin + 4, cin), jnp.float32)
               for (cin, _cout, lin) in _LAYERS]
    # One im2col slab, reused by every layer (max M rows, max 5*Cin lanes).
    scratch.append(pltpu.VMEM((bsz * (_LAYERS[0][2] // 2), 5 * _LAYERS[-1][0]),
                              jnp.float32))
    return pl.pallas_call(
        _fused_disc_kernel,
        out_shape=jax.ShapeDtypeStruct((bsz, 1), jnp.float32),
        in_specs=[_VMEM, _VMEM],
        out_specs=_VMEM,
        scratch_shapes=scratch,
    )(x_nlc, slab)


@jax.jit
def discriminator_forward(x_ncl, slab):
    """x_ncl: (B, 2, 256) float32 (PyTorch NCL layout). Returns (B, 1)."""
    # TODO(synk): fold this NCL->NLC relayout into the kernel (review item 4);
    # kept here (inside the same jit, one 4 KB op) to avoid depending on the
    # in-kernel lane<->sublane transpose lowering for a (2, 256) block.
    x_nlc = jnp.transpose(x_ncl, (0, 2, 1))
    return _fused_forward(x_nlc, slab)


# ------------------------- parameter construction --------------------------- #

def _make_params(key):
    """Deterministic synthetic parameters matching the PyTorch module shapes."""
    specs = [(2, 32), (32, 64), (64, 128), (128, 256)]
    params = []
    keys = jax.random.split(key, len(specs) * 2 + 2)
    for i, (cin, cout) in enumerate(specs):
        bound = 1.0 / jnp.sqrt(cin * 5.0)
        w = jax.random.uniform(keys[2 * i], (cout, cin, 5), jnp.float32, -bound, bound)
        b = jax.random.uniform(keys[2 * i + 1], (cout,), jnp.float32, -bound, bound)
        gamma = jnp.ones((cout,), jnp.float32)       # BatchNorm1d init
        beta = jnp.zeros((cout,), jnp.float32)
        params.append((w, b, gamma, beta))
    bound = 1.0 / jnp.sqrt(256.0 * 16.0)
    fc_w = jax.random.uniform(keys[-2], (256 * 16, 1), jnp.float32, -bound, bound)
    fc_b = jax.random.uniform(keys[-1], (1,), jnp.float32, -bound, bound)
    return params, fc_w, fc_b


def _pack_params(params, fc_w, fc_b):
    """One-time packing of ALL parameters into a single (1192, 256) f32 slab."""
    slab = jnp.zeros((_SLAB_ROWS, _SLAB_LANES), jnp.float32)
    for l, (w, b, gamma, beta) in enumerate(params):
        cout, cin, k = w.shape
        # matmul row index = k*Cin + ci, so w_mat[k*Cin + ci, co] = w[co, ci, k]
        w_mat = jnp.transpose(w, (2, 1, 0)).reshape(k * cin, cout)
        slab = slab.at[_W_OFF[l]:_W_OFF[l] + k * cin, 0:cout].set(w_mat)
        slab = slab.at[_P_OFF[l]:_P_OFF[l] + 3, 0:cout].set(
            jnp.stack([b, gamma, beta], axis=0))
    wf = fc_w[:, 0].reshape(_C_FINAL, _L_FINAL).T    # (16, 256): wf[l,c]=fc_w[c*16+l]
    slab = slab.at[_WF_OFF:_WF_OFF + _L_FINAL, :].set(wf)
    slab = slab.at[_FCB_OFF, 0].set(fc_b[0])
    return slab


# ------------------------------ pure-JAX reference -------------------------- #

def _reference_forward(x_ncl, params, fc_w, fc_b):
    out = x_ncl
    for (w, b, gamma, beta) in params:
        y = lax.conv_general_dilated(
            out, w, window_strides=(2,), padding=[(2, 2)],
            dimension_numbers=("NCH", "OIH", "NCH"),
        ) + b[None, :, None]
        mean = jnp.mean(y, axis=(0, 2), keepdims=True)
        var = jnp.mean((y - mean) ** 2, axis=(0, 2), keepdims=True)
        xn = (y - mean) * lax.rsqrt(var + EPS)
        out = jnp.tanh(gamma[None, :, None] * xn + beta[None, :, None])
    flat = out.reshape(out.shape[0], 256 * 16)
    return flat @ fc_w + fc_b[None, :]


# ----------------------------------- main ----------------------------------- #

if __name__ == "__main__":
    key = jax.random.PRNGKey(0)
    k_x, k_p = jax.random.split(key)

    B, C_in, L = 2, 2, 256                           # L=256 so 4x stride-2 -> 16
    x = jax.random.normal(k_x, (B, C_in, L), jnp.float32)

    params, fc_w, fc_b = _make_params(k_p)
    slab = _pack_params(params, fc_w, fc_b)          # packed once, outside jit

    out = jax.block_until_ready(discriminator_forward(x, slab))
    ref = jax.block_until_ready(_reference_forward(x, params, fc_w, fc_b))

    assert out.shape == (B, 1)
    assert jnp.allclose(out, ref, rtol=1e-4, atol=1e-4), (out, ref)

    print("KERNEL_OK")
</pallas_src>

<mosaic_0001>
module attributes {stable_mosaic.version = 11 : i64} {
  func.func @_fused_disc_kernel(%arg0: memref<2x256x2xf32, #tpu.memory_space<vmem>>, %arg1: memref<1192x256xf32, #tpu.memory_space<vmem>>, %arg2: memref<2x1xf32, #tpu.memory_space<vmem>>, %arg3: memref<2x260x2xf32, #tpu.memory_space<vmem>>, %arg4: memref<2x132x32xf32, #tpu.memory_space<vmem>>, %arg5: memref<2x68x64xf32, #tpu.memory_space<vmem>>, %arg6: memref<2x36x128xf32, #tpu.memory_space<vmem>>, %arg7: memref<256x640xf32, #tpu.memory_space<vmem>>) attributes {dimension_semantics = [], scalar_prefetch = 0 : i64, scratch_operands = 5 : i64, tpu.core_type = #tpu.core_type<tc>} {
    %cst = arith.constant 0.000000e+00 : f32
    %0 = vector.broadcast %cst : f32 to vector<2x2x2xf32>
    %c0 = arith.constant 0 : index
    %c0_0 = arith.constant 0 : index
    %c0_1 = arith.constant 0 : index
    %1 = vector.load %arg3[%c0, %c0_0, %c0_1] : memref<2x260x2xf32, #tpu.memory_space<vmem>>, vector<2x2x2xf32>
    tpu.vector_store %arg3[%c0, %c0_0, %c0_1], %0 {strides = array<i32>} : memref<2x260x2xf32, #tpu.memory_space<vmem>>, vector<2x2x2xf32>,
    %cst_2 = arith.constant 0.000000e+00 : f32
    %2 = vector.broadcast %cst_2 : f32 to vector<2x2x2xf32>
    %c0_3 = arith.constant 0 : index
    %c258 = arith.constant 258 : index
    %c0_4 = arith.constant 0 : index
    %3 = vector.load %arg3[%c0_3, %c258, %c0_4] : memref<2x260x2xf32, #tpu.memory_space<vmem>>, vector<2x2x2xf32>
    tpu.vector_store %arg3[%c0_3, %c258, %c0_4], %2 {strides = array<i32>} : memref<2x260x2xf32, #tpu.memory_space<vmem>>, vector<2x2x2xf32>,
    %c0_5 = arith.constant 0 : index
    %c0_6 = arith.constant 0 : index
    %c0_7 = arith.constant 0 : index
    %4 = vector.load %arg0[%c0_5, %c0_6, %c0_7] : memref<2x256x2xf32, #tpu.memory_space<vmem>>, vector<2x256x2xf32>
    %c0_8 = arith.constant 0 : index
    %c2 = arith.constant 2 : index
    %c0_9 = arith.constant 0 : index
    %5 = vector.load %arg3[%c0_8, %c2, %c0_9] : memref<2x260x2xf32, #tpu.memory_space<vmem>>, vector<2x256x2xf32>
    tpu.vector_store %arg3[%c0_8, %c2, %c0_9], %4 {strides = array<i32>} : memref<2x260x2xf32, #tpu.memory_space<vmem>>, vector<2x256x2xf32>,
    %c0_10 = arith.constant 0 : index
    %c0_11 = arith.constant 0 : index
    %c0_12 = arith.constant 0 : index
    %6 = tpu.strided_load %arg3[%c0_10, %c0_11, %c0_12] {strides = array<i32: 1, 2, 1>} : memref<2x260x2xf32, #tpu.memory_space<vmem>>, vector<2x128x2xf32>
    %7 = vector.shape_cast %6 : vector<2x128x2xf32> to vector<256x2xf32>
    %c0_13 = arith.constant 0 : index
    %c0_14 = arith.constant 0 : index
    %8 = vector.load %arg7[%c0_13, %c0_14] : memref<256x640xf32, #tpu.memory_space<vmem>>, vector<256x2xf32>
    tpu.vector_store %arg7[%c0_13, %c0_14], %7 {strides = array<i32>} : memref<256x640xf32, #tpu.memory_space<vmem>>, vector<256x2xf32>,
    %c0_15 = arith.constant 0 : index
    %c1 = arith.constant 1 : index
    %c0_16 = arith.constant 0 : index
    %9 = tpu.strided_load %arg3[%c0_15, %c1, %c0_16] {strides = array<i32: 1, 2, 1>} : memref<2x260x2xf32, #tpu.memory_space<vmem>>, vector<2x128x2xf32>
    %10 = vector.shape_cast %9 : vector<2x128x2xf32> to vector<256x2xf32>
    %c0_17 = arith.constant 0 : index
    %c2_18 = arith.constant 2 : index
    %11 = vector.load %arg7[%c0_17, %c2_18] : memref<256x640xf32, #tpu.memory_space<vmem>>, vector<256x2xf32>
    tpu.vector_store %arg7[%c0_17, %c2_18], %10 {strides = array<i32>} : memref<256x640xf32, #tpu.memory_space<vmem>>, vector<256x2xf32>,
    %c0_19 = arith.constant 0 : index
    %c2_20 = arith.constant 2 : index
    %c0_21 = arith.constant 0 : index
    %12 = tpu.strided_load %arg3[%c0_19, %c2_20, %c0_21] {strides = array<i32: 1, 2, 1>} : memref<2x260x2xf32, #tpu.memory_space<vmem>>, vector<2x128x2xf32>
    %13 = vector.shape_cast %12 : vector<2x128x2xf32> to vector<256x2xf32>
    %c0_22 = arith.constant 0 : index
    %c4 = arith.constant 4 : index
    %14 = vector.load %arg7[%c0_22, %c4] : memref<256x640xf32, #tpu.memory_space<vmem>>, vector<256x2xf32>
    tpu.vector_store %arg7[%c0_22, %c4], %13 {strides = array<i32>} : memref<256x640xf32, #tpu.memory_space<vmem>>, vector<256x2xf32>,
    %c0_23 = arith.constant 0 : index
    %c3 = arith.constant 3 : index
    %c0_24 = arith.constant 0 : index
    %15 = tpu.strided_load %arg3[%c0_23, %c3, %c0_24] {strides = array<i32: 1, 2, 1>} : memref<2x260x2xf32, #tpu.memory_space<vmem>>, vector<2x128x2xf32>
    %16 = vector.shape_cast %15 : vector<2x128x2xf32> to vector<256x2xf32>
    %c0_25 = arith.constant 0 : index
    %c6 = arith.constant 6 : index
    %17 = vector.load %arg7[%c0_25, %c6] : memref<256x640xf32, #tpu.memory_space<vmem>>, vector<256x2xf32>
    tpu.vector_store %arg7[%c0_25, %c6], %16 {strides = array<i32>} : memref<256x640xf32, #tpu.memory_space<vmem>>, vector<256x2xf32>,
    %c0_26 = arith.constant 0 : index
    %c4_27 = arith.constant 4 : index
    %c0_28 = arith.constant 0 : index
    %18 = tpu.strided_load %arg3[%c0_26, %c4_27, %c0_28] {strides = array<i32: 1, 2, 1>} : memref<2x260x2xf32, #tpu.memory_space<vmem>>, vector<2x128x2xf32>
    %19 = vector.shape_cast %18 : vector<2x128x2xf32> to vector<256x2xf32>
    %c0_29 = arith.constant 0 : index
    %c8 = arith.constant 8 : index
    %20 = vector.load %arg7[%c0_29, %c8] : memref<256x640xf32, #tpu.memory_space<vmem>>, vector<256x2xf32>
    tpu.vector_store %arg7[%c0_29, %c8], %19 {strides = array<i32>} : memref<256x640xf32, #tpu.memory_space<vmem>>, vector<256x2xf32>,
    %c0_30 = arith.constant 0 : index
    %c0_31 = arith.constant 0 : index
    %21 = vector.load %arg7[%c0_30, %c0_31] : memref<256x640xf32, #tpu.memory_space<vmem>>, vector<256x10xf32>
    %c0_32 = arith.constant 0 : index
    %c0_33 = arith.constant 0 : index
    %22 = vector.load %arg1[%c0_32, %c0_33] : memref<1192x256xf32, #tpu.memory_space<vmem>>, vector<10x32xf32>
    %cst_34 = arith.constant dense<0.000000e+00> : vector<256x32xf32>
    %23 = tpu.matmul %21, %22, %cst_34 {dimension_numbers = #tpu.dot_dimension_numbers<[1], [0], [0], [1], [0, 0, 1, 1], [], []>} : vector<256x10xf32>, vector<10x32xf32>, vector<256x32xf32> -> vector<256x32xf32>
    %c1136 = arith.constant 1136 : index
    %c0_35 = arith.constant 0 : index
    %24 = vector.load %arg1[%c1136, %c0_35] : memref<1192x256xf32, #tpu.memory_space<vmem>>, vector<1x32xf32>
    %25 = vector.broadcast %24 : vector<1x32xf32> to vector<256x32xf32>
    %26 = arith.addf %23, %25 : vector<256x32xf32>
    %cst_36 = arith.constant dense<0.000000e+00> : vector<32xf32>
    %27 = vector.multi_reduction <add>, %26, %cst_36 [0] : vector<256x32xf32> to vector<32xf32>
    %28 = vector.shape_cast %27 : vector<32xf32> to vector<1x32xf32>
    %cst_37 = arith.constant 3.906250e-03 : f32
    %29 = vector.broadcast %cst_37 : f32 to vector<1x32xf32>
    %30 = arith.mulf %28, %29 : vector<1x32xf32>
    %31 = vector.broadcast %30 : vector<1x32xf32> to vector<256x32xf32>
    %32 = arith.subf %26, %31 : vector<256x32xf32>
    %33 = arith.mulf %32, %32 : vector<256x32xf32>
    %cst_38 = arith.constant dense<0.000000e+00> : vector<32xf32>
    %34 = vector.multi_reduction <add>, %33, %cst_38 [0] : vector<256x32xf32> to vector<32xf32>
    %35 = vector.shape_cast %34 : vector<32xf32> to vector<1x32xf32>
    %cst_39 = arith.constant 3.906250e-03 : f32
    %36 = vector.broadcast %cst_39 : f32 to vector<1x32xf32>
    %37 = arith.mulf %35, %36 : vector<1x32xf32>
    %cst_40 = arith.constant 9.99999974E-6 : f32
    %38 = vector.broadcast %cst_40 : f32 to vector<1x32xf32>
    %39 = arith.addf %37, %38 : vector<1x32xf32>
    %40 = math.rsqrt %39 : vector<1x32xf32>
    %41 = vector.broadcast %40 : vector<1x32xf32> to vector<256x32xf32>
    %42 = arith.mulf %32, %41 : vector<256x32xf32>
    %c1137 = arith.constant 1137 : index
    %c0_41 = arith.constant 0 : index
    %43 = vector.load %arg1[%c1137, %c0_41] : memref<1192x256xf32, #tpu.memory_space<vmem>>, vector<1x32xf32>
    %c1138 = arith.constant 1138 : index
    %c0_42 = arith.constant 0 : index
    %44 = vector.load %arg1[%c1138, %c0_42] : memref<1192x256xf32, #tpu.memory_space<vmem>>, vector<1x32xf32>
    %45 = vector.broadcast %43 : vector<1x32xf32> to vector<256x32xf32>
    %46 = arith.mulf %45, %42 : vector<256x32xf32>
    %47 = vector.broadcast %44 : vector<1x32xf32> to vector<256x32xf32>
    %48 = arith.addf %46, %47 : vector<256x32xf32>
    %49 = math.tanh %48 : vector<256x32xf32>
    %cst_43 = arith.constant 0.000000e+00 : f32
    %50 = vector.broadcast %cst_43 : f32 to vector<2x2x32xf32>
    %c0_44 = arith.constant 0 : index
    %c0_45 = arith.constant 0 : index
    %c0_46 = arith.constant 0 : index
    %51 = vector.load %arg4[%c0_44, %c0_45, %c0_46] : memref<2x132x32xf32, #tpu.memory_space<vmem>>, vector<2x2x32xf32>
    tpu.vector_store %arg4[%c0_44, %c0_45, %c0_46], %50 {strides = array<i32>} : memref<2x132x32xf32, #tpu.memory_space<vmem>>, vector<2x2x32xf32>,
    %cst_47 = arith.constant 0.000000e+00 : f32
    %52 = vector.broadcast %cst_47 : f32 to vector<2x2x32xf32>
    %c0_48 = arith.constant 0 : index
    %c130 = arith.constant 130 : index
    %c0_49 = arith.constant 0 : index
    %53 = vector.load %arg4[%c0_48, %c130, %c0_49] : memref<2x132x32xf32, #tpu.memory_space<vmem>>, vector<2x2x32xf32>
    tpu.vector_store %arg4[%c0_48, %c130, %c0_49], %52 {strides = array<i32>} : memref<2x132x32xf32, #tpu.memory_space<vmem>>, vector<2x2x32xf32>,
    %54 = vector.shape_cast %49 : vector<256x32xf32> to vector<2x128x32xf32>
    %c0_50 = arith.constant 0 : index
    %c2_51 = arith.constant 2 : index
    %c0_52 = arith.constant 0 : index
    %55 = vector.load %arg4[%c0_50, %c2_51, %c0_52] : memref<2x132x32xf32, #tpu.memory_space<vmem>>, vector<2x128x32xf32>
    tpu.vector_store %arg4[%c0_50, %c2_51, %c0_52], %54 {strides = array<i32>} : memref<2x132x32xf32, #tpu.memory_space<vmem>>, vector<2x128x32xf32>,
    %c0_53 = arith.constant 0 : index
    %c0_54 = arith.constant 0 : index
    %c0_55 = arith.constant 0 : index
    %56 = tpu.strided_load %arg4[%c0_53, %c0_54, %c0_55] {strides = array<i32: 1, 2, 1>} : memref<2x132x32xf32, #tpu.memory_space<vmem>>, vector<2x64x32xf32>
    %57 = vector.shape_cast %56 : vector<2x64x32xf32> to vector<128x32xf32>
    %c0_56 = arith.constant 0 : index
    %c0_57 = arith.constant 0 : index
    %58 = vector.load %arg7[%c0_56, %c0_57] : memref<256x640xf32, #tpu.memory_space<vmem>>, vector<128x32xf32>
    tpu.vector_store %arg7[%c0_56, %c0_57], %57 {strides = array<i32>} : memref<256x640xf32, #tpu.memory_space<vmem>>, vector<128x32xf32>,
    %c0_58 = arith.constant 0 : index
    %c1_59 = arith.constant 1 : index
    %c0_60 = arith.constant 0 : index
    %59 = tpu.strided_load %arg4[%c0_58, %c1_59, %c0_60] {strides = array<i32: 1, 2, 1>} : memref<2x132x32xf32, #tpu.memory_space<vmem>>, vector<2x64x32xf32>
    %60 = vector.shape_cast %59 : vector<2x64x32xf32> to vector<128x32xf32>
    %c0_61 = arith.constant 0 : index
    %c32 = arith.constant 32 : index
    %61 = vector.load %arg7[%c0_61, %c32] : memref<256x640xf32, #tpu.memory_space<vmem>>, vector<128x32xf32>
    tpu.vector_store %arg7[%c0_61, %c32], %60 {strides = array<i32>} : memref<256x640xf32, #tpu.memory_space<vmem>>, vector<128x32xf32>,
    %c0_62 = arith.constant 0 : index
    %c2_63 = arith.constant 2 : index
    %c0_64 = arith.constant 0 : index
    %62 = tpu.strided_load %arg4[%c0_62, %c2_63, %c0_64] {strides = array<i32: 1, 2, 1>} : memref<2x132x32xf32, #tpu.memory_space<vmem>>, vector<2x64x32xf32>
    %63 = vector.shape_cast %62 : vector<2x64x32xf32> to vector<128x32xf32>
    %c0_65 = arith.constant 0 : index
    %c64 = arith.constant 64 : index
    %64 = vector.load %arg7[%c0_65, %c64] : memref<256x640xf32, #tpu.memory_space<vmem>>, vector<128x32xf32>
    tpu.vector_store %arg7[%c0_65, %c64], %63 {strides = array<i32>} : memref<256x640xf32, #tpu.memory_space<vmem>>, vector<128x32xf32>,
    %c0_66 = arith.constant 0 : index
    %c3_67 = arith.constant 3 : index
    %c0_68 = arith.constant 0 : index
    %65 = tpu.strided_load %arg4[%c0_66, %c3_67, %c0_68] {strides = array<i32: 1, 2, 1>} : memref<2x132x32xf32, #tpu.memory_space<vmem>>, vector<2x64x32xf32>
    %66 = vector.shape_cast %65 : vector<2x64x32xf32> to vector<128x32xf32>
    %c0_69 = arith.constant 0 : index
    %c96 = arith.constant 96 : index
    %67 = vector.load %arg7[%c0_69, %c96] : memref<256x640xf32, #tpu.memory_space<vmem>>, vector<128x32xf32>
    tpu.vector_store %arg7[%c0_69, %c96], %66 {strides = array<i32>} : memref<256x640xf32, #tpu.memory_space<vmem>>, vector<128x32xf32>,
    %c0_70 = arith.constant 0 : index
    %c4_71 = arith.constant 4 : index
    %c0_72 = arith.constant 0 : index
    %68 = tpu.strided_load %arg4[%c0_70, %c4_71, %c0_72] {strides = array<i32: 1, 2, 1>} : memref<2x132x32xf32, #tpu.memory_space<vmem>>, vector<2x64x32xf32>
    %69 = vector.shape_cast %68 : vector<2x64x32xf32> to vector<128x32xf32>
    %c0_73 = arith.constant 0 : index
    %c128 = arith.constant 128 : index
    %70 = vector.load %arg7[%c0_73, %c128] : memref<256x640xf32, #tpu.memory_space<vmem>>, vector<128x32xf32>
    tpu.vector_store %arg7[%c0_73, %c128], %69 {strides = array<i32>} : memref<256x640xf32, #tpu.memory_space<vmem>>, vector<128x32xf32>,
    %c0_74 = arith.constant 0 : index
    %c0_75 = arith.constant 0 : index
    %71 = vector.load %arg7[%c0_74, %c0_75] : memref<256x640xf32, #tpu.memory_space<vmem>>, vector<128x160xf32>
    %c16 = arith.constant 16 : index
    %c0_76 = arith.constant 0 : index
    %72 = vector.load %arg1[%c16, %c0_76] : memref<1192x256xf32, #tpu.memory_space<vmem>>, vector<160x64xf32>
    %cst_77 = arith.constant dense<0.000000e+00> : vector<128x64xf32>
    %73 = tpu.matmul %71, %72, %cst_77 {dimension_numbers = #tpu.dot_dimension_numbers<[1], [0], [0], [1], [0, 0, 1, 1], [], []>} : vector<128x160xf32>, vector<160x64xf32>, vector<128x64xf32> -> vector<128x64xf32>
    %c1144 = arith.constant 1144 : index
    %c0_78 = arith.constant 0 : index
    %74 = vector.load %arg1[%c1144, %c0_78] : memref<1192x256xf32, #tpu.memory_space<vmem>>, vector<1x64xf32>
    %75 = vector.broadcast %74 : vector<1x64xf32> to vector<128x64xf32>
    %76 = arith.addf %73, %75 : vector<128x64xf32>
    %cst_79 = arith.constant dense<0.000000e+00> : vector<64xf32>
    %77 = vector.multi_reduction <add>, %76, %cst_79 [0] : vector<128x64xf32> to vector<64xf32>
    %78 = vector.shape_cast %77 : vector<64xf32> to vector<1x64xf32>
    %cst_80 = arith.constant 7.812500e-03 : f32
    %79 = vector.broadcast %cst_80 : f32 to vector<1x64xf32>
    %80 = arith.mulf %78, %79 : vector<1x64xf32>
    %81 = vector.broadcast %80 : vector<1x64xf32> to vector<128x64xf32>
    %82 = arith.subf %76, %81 : vector<128x64xf32>
    %83 = arith.mulf %82, %82 : vector<128x64xf32>
    %cst_81 = arith.constant dense<0.000000e+00> : vector<64xf32>
    %84 = vector.multi_reduction <add>, %83, %cst_81 [0] : vector<128x64xf32> to vector<64xf32>
    %85 = vector.shape_cast %84 : vector<64xf32> to vector<1x64xf32>
    %cst_82 = arith.constant 7.812500e-03 : f32
    %86 = vector.broadcast %cst_82 : f32 to vector<1x64xf32>
    %87 = arith.mulf %85, %86 : vector<1x64xf32>
    %cst_83 = arith.constant 9.99999974E-6 : f32
    %88 = vector.broadcast %cst_83 : f32 to vector<1x64xf32>
    %89 = arith.addf %87, %88 : vector<1x64xf32>
    %90 = math.rsqrt %89 : vector<1x64xf32>
    %91 = vector.broadcast %90 : vector<1x64xf32> to vector<128x64xf32>
    %92 = arith.mulf %82, %91 : vector<128x64xf32>
    %c1145 = arith.constant 1145 : index
    %c0_84 = arith.constant 0 : index
    %93 = vector.load %arg1[%c1145, %c0_84] : memref<1192x256xf32, #tpu.memory_space<vmem>>, vector<1x64xf32>
    %c1146 = arith.constant 1146 : index
    %c0_85 = arith.constant 0 : index
    %94 = vector.load %arg1[%c1146, %c0_85] : memref<1192x256xf32, #tpu.memory_space<vmem>>, vector<1x64xf32>
    %95 = vector.broadcast %93 : vector<1x64xf32> to vector<128x64xf32>
    %96 = arith.mulf %95, %92 : vector<128x64xf32>
    %97 = vector.broadcast %94 : vector<1x64xf32> to vector<128x64xf32>
    %98 = arith.addf %96, %97 : vector<128x64xf32>
    %99 = math.tanh %98 : vector<128x64xf32>
    %cst_86 = arith.constant 0.000000e+00 : f32
    %100 = vector.broadcast %cst_86 : f32 to vector<2x2x64xf32>
    %c0_87 = arith.constant 0 : index
    %c0_88 = arith.constant 0 : index
    %c0_89 = arith.constant 0 : index
    %101 = vector.load %arg5[%c0_87, %c0_88, %c0_89] : memref<2x68x64xf32, #tpu.memory_space<vmem>>, vector<2x2x64xf32>
    tpu.vector_store %arg5[%c0_87, %c0_88, %c0_89], %100 {strides = array<i32>} : memref<2x68x64xf32, #tpu.memory_space<vmem>>, vector<2x2x64xf32>,
    %cst_90 = arith.constant 0.000000e+00 : f32
    %102 = vector.broadcast %cst_90 : f32 to vector<2x2x64xf32>
    %c0_91 = arith.constant 0 : index
    %c66 = arith.constant 66 : index
    %c0_92 = arith.constant 0 : index
    %103 = vector.load %arg5[%c0_91, %c66, %c0_92] : memref<2x68x64xf32, #tpu.memory_space<vmem>>, vector<2x2x64xf32>
    tpu.vector_store %arg5[%c0_91, %c66, %c0_92], %102 {strides = array<i32>} : memref<2x68x64xf32, #tpu.memory_space<vmem>>, vector<2x2x64xf32>,
    %104 = vector.shape_cast %99 : vector<128x64xf32> to vector<2x64x64xf32>
    %c0_93 = arith.constant 0 : index
    %c2_94 = arith.constant 2 : index
    %c0_95 = arith.constant 0 : index
    %105 = vector.load %arg5[%c0_93, %c2_94, %c0_95] : memref<2x68x64xf32, #tpu.memory_space<vmem>>, vector<2x64x64xf32>
    tpu.vector_store %arg5[%c0_93, %c2_94, %c0_95], %104 {strides = array<i32>} : memref<2x68x64xf32, #tpu.memory_space<vmem>>, vector<2x64x64xf32>,
    %c0_96 = arith.constant 0 : index
    %c0_97 = arith.constant 0 : index
    %c0_98 = arith.constant 0 : index
    %106 = tpu.strided_load %arg5[%c0_96, %c0_97, %c0_98] {strides = array<i32: 1, 2, 1>} : memref<2x68x64xf32, #tpu.memory_space<vmem>>, vector<2x32x64xf32>
    %107 = vector.shape_cast %106 : vector<2x32x64xf32> to vector<64x64xf32>
    %c0_99 = arith.constant 0 : index
    %c0_100 = arith.constant 0 : index
    %108 = vector.load %arg7[%c0_99, %c0_100] : memref<256x640xf32, #tpu.memory_space<vmem>>, vector<64x64xf32>
    tpu.vector_store %arg7[%c0_99, %c0_100], %107 {strides = array<i32>} : memref<256x640xf32, #tpu.memory_space<vmem>>, vector<64x64xf32>,
    %c0_101 = arith.constant 0 : index
    %c1_102 = arith.constant 1 : index
    %c0_103 = arith.constant 0 : index
    %109 = tpu.strided_load %arg5[%c0_101, %c1_102, %c0_103] {strides = array<i32: 1, 2, 1>} : memref<2x68x64xf32, #tpu.memory_space<vmem>>, vector<2x32x64xf32>
    %110 = vector.shape_cast %109 : vector<2x32x64xf32> to vector<64x64xf32>
    %c0_104 = arith.constant 0 : index
    %c64_105 = arith.constant 64 : index
    %111 = vector.load %arg7[%c0_104, %c64_105] : memref<256x640xf32, #tpu.memory_space<vmem>>, vector<64x64xf32>
    tpu.vector_store %arg7[%c0_104, %c64_105], %110 {strides = array<i32>} : memref<256x640xf32, #tpu.memory_space<vmem>>, vector<64x64xf32>,
    %c0_106 = arith.constant 0 : index
    %c2_107 = arith.constant 2 : index
    %c0_108 = arith.constant 0 : index
    %112 = tpu.strided_load %arg5[%c0_106, %c2_107, %c0_108] {strides = array<i32: 1, 2, 1>} : memref<2x68x64xf32, #tpu.memory_space<vmem>>, vector<2x32x64xf32>
    %113 = vector.shape_cast %112 : vector<2x32x64xf32> to vector<64x64xf32>
    %c0_109 = arith.constant 0 : index
    %c128_110 = arith.constant 128 : index
    %114 = vector.load %arg7[%c0_109, %c128_110] : memref<256x640xf32, #tpu.memory_space<vmem>>, vector<64x64xf32>
    tpu.vector_store %arg7[%c0_109, %c128_110], %113 {strides = array<i32>} : memref<256x640xf32, #tpu.memory_space<vmem>>, vector<64x64xf32>,
    %c0_111 = arith.constant 0 : index
    %c3_112 = arith.constant 3 : index
    %c0_113 = arith.constant 0 : index
    %115 = tpu.strided_load %arg5[%c0_111, %c3_112, %c0_113] {strides = array<i32: 1, 2, 1>} : memref<2x68x64xf32, #tpu.memory_space<vmem>>, vector<2x32x64xf32>
    %116 = vector.shape_cast %115 : vector<2x32x64xf32> to vector<64x64xf32>
    %c0_114 = arith.constant 0 : index
    %c192 = arith.constant 192 : index
    %117 = vector.load %arg7[%c0_114, %c192] : memref<256x640xf32, #tpu.memory_space<vmem>>, vector<64x64xf32>
    tpu.vector_store %arg7[%c0_114, %c192], %116 {strides = array<i32>} : memref<256x640xf32, #tpu.memory_space<vmem>>, vector<64x64xf32>,
    %c0_115 = arith.constant 0 : index
    %c4_116 = arith.constant 4 : index
    %c0_117 = arith.constant 0 : index
    %118 = tpu.strided_load %arg5[%c0_115, %c4_116, %c0_117] {strides = array<i32: 1, 2, 1>} : memref<2x68x64xf32, #tpu.memory_space<vmem>>, vector<2x32x64xf32>
    %119 = vector.shape_cast %118 : vector<2x32x64xf32> to vector<64x64xf32>
    %c0_118 = arith.constant 0 : index
    %c256 = arith.constant 256 : index
    %120 = vector.load %arg7[%c0_118, %c256] : memref<256x640xf32, #tpu.memory_space<vmem>>, vector<64x64xf32>
    tpu.vector_store %arg7[%c0_118, %c256], %119 {strides = array<i32>} : memref<256x640xf32, #tpu.memory_space<vmem>>, vector<64x64xf32>,
    %c0_119 = arith.constant 0 : index
    %c0_120 = arith.constant 0 : index
    %121 = vector.load %arg7[%c0_119, %c0_120] : memref<256x640xf32, #tpu.memory_space<vmem>>, vector<64x320xf32>
    %c176 = arith.constant 176 : index
    %c0_121 = arith.constant 0 : index
    %122 = vector.load %arg1[%c176, %c0_121] : memref<1192x256xf32, #tpu.memory_space<vmem>>, vector<320x128xf32>
    %cst_122 = arith.constant dense<0.000000e+00> : vector<64x128xf32>
    %123 = tpu.matmul %121, %122, %cst_122 {dimension_numbers = #tpu.dot_dimension_numbers<[1], [0], [0], [1], [0, 0, 1, 1], [], []>} : vector<64x320xf32>, vector<320x128xf32>, vector<64x128xf32> -> vector<64x128xf32>
    %c1152 = arith.constant 1152 : index
    %c0_123 = arith.constant 0 : index
    %124 = vector.load %arg1[%c1152, %c0_123] : memref<1192x256xf32, #tpu.memory_space<vmem>>, vector<1x128xf32>
    %125 = vector.broadcast %124 : vector<1x128xf32> to vector<64x128xf32>
    %126 = arith.addf %123, %125 : vector<64x128xf32>
    %cst_124 = arith.constant dense<0.000000e+00> : vector<128xf32>
    %127 = vector.multi_reduction <add>, %126, %cst_124 [0] : vector<64x128xf32> to vector<128xf32>
    %128 = vector.shape_cast %127 : vector<128xf32> to vector<1x128xf32>
    %cst_125 = arith.constant 1.562500e-02 : f32
    %129 = vector.broadcast %cst_125 : f32 to vector<1x128xf32>
    %130 = arith.mulf %128, %129 : vector<1x128xf32>
    %131 = vector.broadcast %130 : vector<1x128xf32> to vector<64x128xf32>
    %132 = arith.subf %126, %131 : vector<64x128xf32>
    %133 = arith.mulf %132, %132 : vector<64x128xf32>
    %cst_126 = arith.constant dense<0.000000e+00> : vector<128xf32>
    %134 = vector.multi_reduction <add>, %133, %cst_126 [0] : vector<64x128xf32> to vector<128xf32>
    %135 = vector.shape_cast %134 : vector<128xf32> to vector<1x128xf32>
    %cst_127 = arith.constant 1.562500e-02 : f32
    %136 = vector.broadcast %cst_127 : f32 to vector<1x128xf32>
    %137 = arith.mulf %135, %136 : vector<1x128xf32>
    %cst_128 = arith.constant 9.99999974E-6 : f32
    %138 = vector.broadcast %cst_128 : f32 to vector<1x128xf32>
    %139 = arith.addf %137, %138 : vector<1x128xf32>
    %140 = math.rsqrt %139 : vector<1x128xf32>
    %141 = vector.broadcast %140 : vector<1x128xf32> to vector<64x128xf32>
    %142 = arith.mulf %132, %141 : vector<64x128xf32>
    %c1153 = arith.constant 1153 : index
    %c0_129 = arith.constant 0 : index
    %143 = vector.load %arg1[%c1153, %c0_129] : memref<1192x256xf32, #tpu.memory_space<vmem>>, vector<1x128xf32>
    %c1154 = arith.constant 1154 : index
    %c0_130 = arith.constant 0 : index
    %144 = vector.load %arg1[%c1154, %c0_130] : memref<1192x256xf32, #tpu.memory_space<vmem>>, vector<1x128xf32>
    %145 = vector.broadcast %143 : vector<1x128xf32> to vector<64x128xf32>
    %146 = arith.mulf %145, %142 : vector<64x128xf32>
    %147 = vector.broadcast %144 : vector<1x128xf32> to vector<64x128xf32>
    %148 = arith.addf %146, %147 : vector<64x128xf32>
    %149 = math.tanh %148 : vector<64x128xf32>
    %cst_131 = arith.constant 0.000000e+00 : f32
    %150 = vector.broadcast %cst_131 : f32 to vector<2x2x128xf32>
    %c0_132 = arith.constant 0 : index
    %c0_133 = arith.constant 0 : index
    %c0_134 = arith.constant 0 : index
    %151 = vector.load %arg6[%c0_132, %c0_133, %c0_134] : memref<2x36x128xf32, #tpu.memory_space<vmem>>, vector<2x2x128xf32>
    tpu.vector_store %arg6[%c0_132, %c0_133, %c0_134], %150 {strides = array<i32>} : memref<2x36x128xf32, #tpu.memory_space<vmem>>, vector<2x2x128xf32>,
    %cst_135 = arith.constant 0.000000e+00 : f32
    %152 = vector.broadcast %cst_135 : f32 to vector<2x2x128xf32>
    %c0_136 = arith.constant 0 : index
    %c34 = arith.constant 34 : index
    %c0_137 = arith.constant 0 : index
    %153 = vector.load %arg6[%c0_136, %c34, %c0_137] : memref<2x36x128xf32, #tpu.memory_space<vmem>>, vector<2x2x128xf32>
    tpu.vector_store %arg6[%c0_136, %c34, %c0_137], %152 {strides = array<i32>} : memref<2x36x128xf32, #tpu.memory_space<vmem>>, vector<2x2x128xf32>,
    %154 = vector.shape_cast %149 : vector<64x128xf32> to vector<2x32x128xf32>
    %c0_138 = arith.constant 0 : index
    %c2_139 = arith.constant 2 : index
    %c0_140 = arith.constant 0 : index
    %155 = vector.load %arg6[%c0_138, %c2_139, %c0_140] : memref<2x36x128xf32, #tpu.memory_space<vmem>>, vector<2x32x128xf32>
    tpu.vector_store %arg6[%c0_138, %c2_139, %c0_140], %154 {strides = array<i32>} : memref<2x36x128xf32, #tpu.memory_space<vmem>>, vector<2x32x128xf32>,
    %c0_141 = arith.constant 0 : index
    %c0_142 = arith.constant 0 : index
    %c0_143 = arith.constant 0 : index
    %156 = tpu.strided_load %arg6[%c0_141, %c0_142, %c0_143] {strides = array<i32: 1, 2, 1>} : memref<2x36x128xf32, #tpu.memory_space<vmem>>, vector<2x16x128xf32>
    %157 = vector.shape_cast %156 : vector<2x16x128xf32> to vector<32x128xf32>
    %c0_144 = arith.constant 0 : index
    %c0_145 = arith.constant 0 : index
    %158 = vector.load %arg7[%c0_144, %c0_145] : memref<256x640xf32, #tpu.memory_space<vmem>>, vector<32x128xf32>
    tpu.vector_store %arg7[%c0_144, %c0_145], %157 {strides = array<i32>} : memref<256x640xf32, #tpu.memory_space<vmem>>, vector<32x128xf32>,
    %c0_146 = arith.constant 0 : index
    %c1_147 = arith.constant 1 : index
    %c0_148 = arith.constant 0 : index
    %159 = tpu.strided_load %arg6[%c0_146, %c1_147, %c0_148] {strides = array<i32: 1, 2, 1>} : memref<2x36x128xf32, #tpu.memory_space<vmem>>, vector<2x16x128xf32>
    %160 = vector.shape_cast %159 : vector<2x16x128xf32> to vector<32x128xf32>
    %c0_149 = arith.constant 0 : index
    %c128_150 = arith.constant 128 : index
    %161 = vector.load %arg7[%c0_149, %c128_150] : memref<256x640xf32, #tpu.memory_space<vmem>>, vector<32x128xf32>
    tpu.vector_store %arg7[%c0_149, %c128_150], %160 {strides = array<i32>} : memref<256x640xf32, #tpu.memory_space<vmem>>, vector<32x128xf32>,
    %c0_151 = arith.constant 0 : index
    %c2_152 = arith.constant 2 : index
    %c0_153 = arith.constant 0 : index
    %162 = tpu.strided_load %arg6[%c0_151, %c2_152, %c0_153] {strides = array<i32: 1, 2, 1>} : memref<2x36x128xf32, #tpu.memory_space<vmem>>, vector<2x16x128xf32>
    %163 = vector.shape_cast %162 : vector<2x16x128xf32> to vector<32x128xf32>
    %c0_154 = arith.constant 0 : index
    %c256_155 = arith.constant 256 : index
    %164 = vector.load %arg7[%c0_154, %c256_155] : memref<256x640xf32, #tpu.memory_space<vmem>>, vector<32x128xf32>
    tpu.vector_store %arg7[%c0_154, %c256_155], %163 {strides = array<i32>} : memref<256x640xf32, #tpu.memory_space<vmem>>, vector<32x128xf32>,
    %c0_156 = arith.constant 0 : index
    %c3_157 = arith.constant 3 : index
    %c0_158 = arith.constant 0 : index
    %165 = tpu.strided_load %arg6[%c0_156, %c3_157, %c0_158] {strides = array<i32: 1, 2, 1>} : memref<2x36x128xf32, #tpu.memory_space<vmem>>, vector<2x16x128xf32>
    %166 = vector.shape_cast %165 : vector<2x16x128xf32> to vector<32x128xf32>
    %c0_159 = arith.constant 0 : index
    %c384 = arith.constant 384 : index
    %167 = vector.load %arg7[%c0_159, %c384] : memref<256x640xf32, #tpu.memory_space<vmem>>, vector<32x128xf32>
    tpu.vector_store %arg7[%c0_159, %c384], %166 {strides = array<i32>} : memref<256x640xf32, #tpu.memory_space<vmem>>, vector<32x128xf32>,
    %c0_160 = arith.constant 0 : index
    %c4_161 = arith.constant 4 : index
    %c0_162 = arith.constant 0 : index
    %168 = tpu.strided_load %arg6[%c0_160, %c4_161, %c0_162] {strides = array<i32: 1, 2, 1>} : memref<2x36x128xf32, #tpu.memory_space<vmem>>, vector<2x16x128xf32>
    %169 = vector.shape_cast %168 : vector<2x16x128xf32> to vector<32x128xf32>
    %c0_163 = arith.constant 0 : index
    %c512 = arith.constant 512 : index
    %170 = vector.load %arg7[%c0_163, %c512] : memref<256x640xf32, #tpu.memory_space<vmem>>, vector<32x128xf32>
    tpu.vector_store %arg7[%c0_163, %c512], %169 {strides = array<i32>} : memref<256x640xf32, #tpu.memory_space<vmem>>, vector<32x128xf32>,
    %c0_164 = arith.constant 0 : index
    %c0_165 = arith.constant 0 : index
    %171 = vector.load %arg7[%c0_164, %c0_165] : memref<256x640xf32, #tpu.memory_space<vmem>>, vector<32x640xf32>
    %c496 = arith.constant 496 : index
    %c0_166 = arith.constant 0 : index
    %172 = vector.load %arg1[%c496, %c0_166] : memref<1192x256xf32, #tpu.memory_space<vmem>>, vector<640x256xf32>
    %cst_167 = arith.constant dense<0.000000e+00> : vector<32x256xf32>
    %173 = tpu.matmul %171, %172, %cst_167 {dimension_numbers = #tpu.dot_dimension_numbers<[1], [0], [0], [1], [0, 0, 1, 1], [], []>} : vector<32x640xf32>, vector<640x256xf32>, vector<32x256xf32> -> vector<32x256xf32>
    %c1160 = arith.constant 1160 : index
    %c0_168 = arith.constant 0 : index
    %174 = vector.load %arg1[%c1160, %c0_168] : memref<1192x256xf32, #tpu.memory_space<vmem>>, vector<1x256xf32>
    %175 = vector.broadcast %174 : vector<1x256xf32> to vector<32x256xf32>
    %176 = arith.addf %173, %175 : vector<32x256xf32>
    %cst_169 = arith.constant dense<0.000000e+00> : vector<256xf32>
    %177 = vector.multi_reduction <add>, %176, %cst_169 [0] : vector<32x256xf32> to vector<256xf32>
    %178 = vector.shape_cast %177 : vector<256xf32> to vector<1x256xf32>
    %cst_170 = arith.constant 3.125000e-02 : f32
    %179 = vector.broadcast %cst_170 : f32 to vector<1x256xf32>
    %180 = arith.mulf %178, %179 : vector<1x256xf32>
    %181 = vector.broadcast %180 : vector<1x256xf32> to vector<32x256xf32>
    %182 = arith.subf %176, %181 : vector<32x256xf32>
    %183 = arith.mulf %182, %182 : vector<32x256xf32>
    %cst_171 = arith.constant dense<0.000000e+00> : vector<256xf32>
    %184 = vector.multi_reduction <add>, %183, %cst_171 [0] : vector<32x256xf32> to vector<256xf32>
    %185 = vector.shape_cast %184 : vector<256xf32> to vector<1x256xf32>
    %cst_172 = arith.constant 3.125000e-02 : f32
    %186 = vector.broadcast %cst_172 : f32 to vector<1x256xf32>
    %187 = arith.mulf %185, %186 : vector<1x256xf32>
    %cst_173 = arith.constant 9.99999974E-6 : f32
    %188 = vector.broadcast %cst_173 : f32 to vector<1x256xf32>
    %189 = arith.addf %187, %188 : vector<1x256xf32>
    %190 = math.rsqrt %189 : vector<1x256xf32>
    %191 = vector.broadcast %190 : vector<1x256xf32> to vector<32x256xf32>
    %192 = arith.mulf %182, %191 : vector<32x256xf32>
    %c1161 = arith.constant 1161 : index
    %c0_174 = arith.constant 0 : index
    %193 = vector.load %arg1[%c1161, %c0_174] : memref<1192x256xf32, #tpu.memory_space<vmem>>, vector<1x256xf32>
    %c1162 = arith.constant 1162 : index
    %c0_175 = arith.constant 0 : index
    %194 = vector.load %arg1[%c1162, %c0_175] : memref<1192x256xf32, #tpu.memory_space<vmem>>, vector<1x256xf32>
    %195 = vector.broadcast %193 : vector<1x256xf32> to vector<32x256xf32>
    %196 = arith.mulf %195, %192 : vector<32x256xf32>
    %197 = vector.broadcast %194 : vector<1x256xf32> to vector<32x256xf32>
    %198 = arith.addf %196, %197 : vector<32x256xf32>
    %199 = math.tanh %198 : vector<32x256xf32>
    %200 = vector.shape_cast %199 : vector<32x256xf32> to vector<2x16x256xf32>
    %c1168 = arith.constant 1168 : index
    %c0_176 = arith.constant 0 : index
    %201 = vector.load %arg1[%c1168, %c0_176] : memref<1192x256xf32, #tpu.memory_space<vmem>>, vector<16x256xf32>
    %202 = vector.shape_cast %201 : vector<16x256xf32> to vector<1x16x256xf32>
    %203 = vector.broadcast %202 : vector<1x16x256xf32> to vector<2x16x256xf32>
    %204 = arith.mulf %200, %203 : vector<2x16x256xf32>
    %cst_177 = arith.constant dense<0.000000e+00> : vector<2x16xf32>
    %205 = vector.multi_reduction <add>, %204, %cst_177 [2] : vector<2x16x256xf32> to vector<2x16xf32>
    %cst_178 = arith.constant dense<0.000000e+00> : vector<2xf32>
    %206 = vector.multi_reduction <add>, %205, %cst_178 [1] : vector<2x16xf32> to vector<2xf32>
    %207 = vector.shape_cast %206 : vector<2xf32> to vector<2x1xf32>
    %c1184 = arith.constant 1184 : index
    %c0_179 = arith.constant 0 : index
    %208 = vector.load %arg1[%c1184, %c0_179] : memref<1192x256xf32, #tpu.memory_space<vmem>>, vector<1x1xf32>
    %209 = vector.broadcast %208 : vector<1x1xf32> to vector<2x1xf32>
    %210 = arith.addf %207, %209 : vector<2x1xf32>
    %c0_180 = arith.constant 0 : index
    %c0_181 = arith.constant 0 : index
    %211 = vector.load %arg2[%c0_180, %c0_181] : memref<2x1xf32, #tpu.memory_space<vmem>>, vector<2x1xf32>
    tpu.vector_store %arg2[%c0_180, %c0_181], %210 {strides = array<i32>} : memref<2x1xf32, #tpu.memory_space<vmem>>, vector<2x1xf32>,
    return
  }
}

</mosaic_0001>

<llo_original>
// kernel: discriminator_forward.1
$region0: #{discriminator_forward.1}
  #allocation0 [shape = 'u32[]', space=smem, size = 0x4, offset = 0x4, fixed_abs, tag = 'smem constant byte address 0x4 - core index']
  #allocation1 [shape = 'u32[144,128]{1,0:T(1,128)}', space=vmem, size = 0x12000, scoped, tag = 'internal scratch']
  #allocation2 [shape = 'f32[2,260,2]{2,1,0:T(8,128)}', space=vmem, size = 0x42000, scoped, tag = 'scratch operand']
  #allocation3 [shape = 'f32[2,132,32]{2,1,0:T(8,128)}', space=vmem, size = 0x22000, scoped, tag = 'scratch operand']
  #allocation4 [shape = 'f32[2,68,64]{2,1,0:T(8,128)}', space=vmem, size = 0x12000, scoped, tag = 'scratch operand']
  #allocation5 [shape = 'f32[2,36,128]{2,1,0:T(8,128)}', space=vmem, size = 0xa000, scoped, tag = 'scratch operand']
  #allocation6 [shape = 'f32[256,640]{1,0:T(8,128)}', space=vmem, size = 0xa0000, scoped, tag = 'scratch operand']
  %s0 = inlined_call_operand.vmem [shape: f32[2,256,2], index: 0, kind: input, shape index: {}]
  %s1 = inlined_call_operand.hbm [shape: f32[1192,256], index: 1, kind: input, shape index: {}]
  %s2 = inlined_call_operand.vmem [shape: f32[2,1], index: 2, kind: output, shape index: {}]
  %s3 = sld [smem:[#allocation0]]
  $region22: #{discriminator_forward.1} parent=0
    _
  %s5 = ssub.s32 1, %s3
  %s6 = scalar_select 0, %s5, %s3
  $region1: #{discriminator_forward.1} parent=0
    #allocation7 [shape = 'u8[1220608]{0}', space=vmem, size = 0x12a000, scoped, tag = 'input window, operand 1, single buffered']
    #allocation8 [shape = 's32[1]{0}', space=sflag, size = 0x4, scoped, tag = 'scoped memory for discriminator_forward.1']
    %7 = vsyncpa [#allocation8], 0
    // Predicated region
    $region2: #{discriminator_forward.1} parent=1 // pred_check
      _
    $region3: #{discriminator_forward.1} parent=1 // pred_check_branch
      %9 = sbr.rel (0) target = $region5
    $region4: #{discriminator_forward.1} parent=1 // pred_region
      _
    $region5: #{discriminator_forward.1} parent=1 // pred_fallthru
      _
    // Predicated region
    $region6: #{discriminator_forward.1} parent=1 // pred_check
      _
    $region7: #{discriminator_forward.1} parent=1 // pred_check_branch
      %11 = sbr.rel (0) target = $region9
    $region8: #{discriminator_forward.1} parent=1 // pred_region
      %s13 = ssub.s32 38144, 38144
      %14 = vsyncadd [#allocation8], %s13
      %s15 = sshll.u32 [#allocation7], 4
      %s16 = int_to_ptr.vmem [resolvable:$true] %s15
      %21 = dma.hbm_to_vmem [thread:$0]  %s1, 38144, %s16, [#allocation8], 256, 256, 16
    $region9: #{discriminator_forward.1} parent=1 // pred_fallthru
      _
    // Predicated region
    $region10: #{discriminator_forward.1} parent=1 // pred_check
      _
    $region11: #{discriminator_forward.1} parent=1 // pred_check_branch
      %23 = sbr.rel (0) target = $region13
    $region12: #{discriminator_forward.1} parent=1 // pred_region
      %24 = dma.done [#allocation8], 38144
    $region13: #{discriminator_forward.1} parent=1 // pred_fallthru
      _
    %vm25 = vcmask 9216
    %26 = vst.msk [vmem:[#allocation2] sm:$0x3] %vm25, 0.0
    %27 = vst.msk [vmem:[#allocation2 + $0x108] sm:$0x3] %vm25, 0.0
    %28 = vst.msk [vmem:[#allocation2 + $0x102] sm:$0x3] %vm25, 0.0
    %29 = vst.msk [vmem:[#allocation2 + $0x20a] sm:$0x3] %vm25, 0.0
    %v30 = vld [vmem:[%s0] sm:$0xff]
    %v31 = vld [vmem:[%s0 + $0x8] sm:$0xff]
    %v32 = vld [vmem:[%s0 + $0x10] sm:$0xff]
    %v33 = vld [vmem:[%s0 + $0x18] sm:$0xff]
    %v34 = vld [vmem:[%s0 + $0x20] sm:$0xff]
    %v35 = vld [vmem:[%s0 + $0x28] sm:$0xff]
    %v36 = vld [vmem:[%s0 + $0x30] sm:$0xff]
    %v37 = vld [vmem:[%s0 + $0x38] sm:$0xff]
    %v38 = vld [vmem:[%s0 + $0x40] sm:$0xff]
    %v39 = vld [vmem:[%s0 + $0x48] sm:$0xff]
    %v40 = vld [vmem:[%s0 + $0x50] sm:$0xff]
    %v41 = vld [vmem:[%s0 + $0x58] sm:$0xff]
    %v42 = vld [vmem:[%s0 + $0x60] sm:$0xff]
    %v43 = vld [vmem:[%s0 + $0x68] sm:$0xff]
    %v44 = vld [vmem:[%s0 + $0x70] sm:$0xff]
    %v45 = vld [vmem:[%s0 + $0x78] sm:$0xff]
    %v46 = vld [vmem:[%s0 + $0x80] sm:$0xff]
    %v47 = vld [vmem:[%s0 + $0x88] sm:$0xff]
    %v48 = vld [vmem:[%s0 + $0x90] sm:$0xff]
    %v49 = vld [vmem:[%s0 + $0x98] sm:$0xff]
    %v50 = vld [vmem:[%s0 + $0xa0] sm:$0xff]
    %v51 = vld [vmem:[%s0 + $0xa8] sm:$0xff]
    %v52 = vld [vmem:[%s0 + $0xb0] sm:$0xff]
    %v53 = vld [vmem:[%s0 + $0xb8] sm:$0xff]
    %v54 = vld [vmem:[%s0 + $0xc0] sm:$0xff]
    %v55 = vld [vmem:[%s0 + $0xc8] sm:$0xff]
    %v56 = vld [vmem:[%s0 + $0xd0] sm:$0xff]
    %v57 = vld [vmem:[%s0 + $0xd8] sm:$0xff]
    %v58 = vld [vmem:[%s0 + $0xe0] sm:$0xff]
    %v59 = vld [vmem:[%s0 + $0xe8] sm:$0xff]
    %v60 = vld [vmem:[%s0 + $0xf0] sm:$0xff]
    %v61 = vld [vmem:[%s0 + $0xf8] sm:$0xff]
    %v62 = vld [vmem:[%s0 + $0x100] sm:$0xff]
    %v63 = vld [vmem:[%s0 + $0x108] sm:$0xff]
    %v64 = vld [vmem:[%s0 + $0x110] sm:$0xff]
    %v65 = vld [vmem:[%s0 + $0x118] sm:$0xff]
    %v66 = vld [vmem:[%s0 + $0x120] sm:$0xff]
    %v67 = vld [vmem:[%s0 + $0x128] sm:$0xff]
    %v68 = vld [vmem:[%s0 + $0x130] sm:$0xff]
    %v69 = vld [vmem:[%s0 + $0x138] sm:$0xff]
    %v70 = vld [vmem:[%s0 + $0x140] sm:$0xff]
    %v71 = vld [vmem:[%s0 + $0x148] sm:$0xff]
    %v72 = vld [vmem:[%s0 + $0x150] sm:$0xff]
    %v73 = vld [vmem:[%s0 + $0x158] sm:$0xff]
    %v74 = vld [vmem:[%s0 + $0x160] sm:$0xff]
    %v75 = vld [vmem:[%s0 + $0x168] sm:$0xff]
    %v76 = vld [vmem:[%s0 + $0x170] sm:$0xff]
    %v77 = vld [vmem:[%s0 + $0x178] sm:$0xff]
    %v78 = vld [vmem:[%s0 + $0x180] sm:$0xff]
    %v79 = vld [vmem:[%s0 + $0x188] sm:$0xff]
    %v80 = vld [vmem:[%s0 + $0x190] sm:$0xff]
    %v81 = vld [vmem:[%s0 + $0x198] sm:$0xff]
    %v82 = vld [vmem:[%s0 + $0x1a0] sm:$0xff]
    %v83 = vld [vmem:[%s0 + $0x1a8] sm:$0xff]
    %v84 = vld [vmem:[%s0 + $0x1b0] sm:$0xff]
    %v85 = vld [vmem:[%s0 + $0x1b8] sm:$0xff]
    %v86 = vld [vmem:[%s0 + $0x1c0] sm:$0xff]
    %v87 = vld [vmem:[%s0 + $0x1c8] sm:$0xff]
    %v88 = vld [vmem:[%s0 + $0x1d0] sm:$0xff]
    %v89 = vld [vmem:[%s0 + $0x1d8] sm:$0xff]
    %v90 = vld [vmem:[%s0 + $0x1e0] sm:$0xff]
    %v91 = vld [vmem:[%s0 + $0x1e8] sm:$0xff]
    %v92 = vld [vmem:[%s0 + $0x1f0] sm:$0xff]
    %v93 = vld [vmem:[%s0 + $0x1f8] sm:$0xff]
    %vm94 = vcmask 15360
    %95 = vst.msk [vmem:[#allocation2 + $0x2] sm:$0xff] %vm94, %v30
    %96 = vst.msk [vmem:[#allocation2 + $0xa] sm:$0xff] %vm94, %v31
    %97 = vst.msk [vmem:[#allocation2 + $0x12] sm:$0xff] %vm94, %v32
    %98 = vst.msk [vmem:[#allocation2 + $0x1a] sm:$0xff] %vm94, %v33
    %99 = vst.msk [vmem:[#allocation2 + $0x22] sm:$0xff] %vm94, %v34
    %100 = vst.msk [vmem:[#allocation2 + $0x2a] sm:$0xff] %vm94, %v35
    %101 = vst.msk [vmem:[#allocation2 + $0x32] sm:$0xff] %vm94, %v36
    %102 = vst.msk [vmem:[#allocation2 + $0x3a] sm:$0xff] %vm94, %v37
    %103 = vst.msk [vmem:[#allocation2 + $0x42] sm:$0xff] %vm94, %v38
    %104 = vst.msk [vmem:[#allocation2 + $0x4a] sm:$0xff] %vm94, %v39
    %105 = vst.msk [vmem:[#allocation2 + $0x52] sm:$0xff] %vm94, %v40
    %106 = vst.msk [vmem:[#allocation2 + $0x5a] sm:$0xff] %vm94, %v41
    %107 = vst.msk [vmem:[#allocation2 + $0x62] sm:$0xff] %vm94, %v42
    %108 = vst.msk [vmem:[#allocation2 + $0x6a] sm:$0xff] %vm94, %v43
    %109 = vst.msk [vmem:[#allocation2 + $0x72] sm:$0xff] %vm94, %v44
    %110 = vst.msk [vmem:[#allocation2 + $0x7a] sm:$0xff] %vm94, %v45
    %111 = vst.msk [vmem:[#allocation2 + $0x82] sm:$0xff] %vm94, %v46
    %112 = vst.msk [vmem:[#allocation2 + $0x8a] sm:$0xff] %vm94, %v47
    %113 = vst.msk [vmem:[#allocation2 + $0x92] sm:$0xff] %vm94, %v48
    %114 = vst.msk [vmem:[#allocation2 + $0x9a] sm:$0xff] %vm94, %v49
    %115 = vst.msk [vmem:[#allocation2 + $0xa2] sm:$0xff] %vm94, %v50
    %116 = vst.msk [vmem:[#allocation2 + $0xaa] sm:$0xff] %vm94, %v51
    %117 = vst.msk [vmem:[#allocation2 + $0xb2] sm:$0xff] %vm94, %v52
    %118 = vst.msk [vmem:[#allocation2 + $0xba] sm:$0xff] %vm94, %v53
    %119 = vst.msk [vmem:[#allocation2 + $0xc2] sm:$0xff] %vm94, %v54
    %120 = vst.msk [vmem:[#allocation2 + $0xca] sm:$0xff] %vm94, %v55
    %121 = vst.msk [vmem:[#allocation2 + $0xd2] sm:$0xff] %vm94, %v56
    %122 = vst.msk [vmem:[#allocation2 + $0xda] sm:$0xff] %vm94, %v57
    %123 = vst.msk [vmem:[#allocation2 + $0xe2] sm:$0xff] %vm94, %v58
    %124 = vst.msk [vmem:[#allocation2 + $0xea] sm:$0xff] %vm94, %v59
    %125 = vst.msk [vmem:[#allocation2 + $0xf2] sm:$0xff] %vm94, %v60
    %126 = vst.msk [vmem:[#allocation2 + $0xfa] sm:$0xff] %vm94, %v61
    %127 = vst.msk [vmem:[#allocation2 + $0x10a] sm:$0xff] %vm94, %v62
    %128 = vst.msk [vmem:[#allocation2 + $0x112] sm:$0xff] %vm94, %v63
    %129 = vst.msk [vmem:[#allocation2 + $0x11a] sm:$0xff] %vm94, %v64
    %130 = vst.msk [vmem:[#allocation2 + $0x122] sm:$0xff] %vm94, %v65
    %131 = vst.msk [vmem:[#allocation2 + $0x12a] sm:$0xff] %vm94, %v66
    %132 = vst.msk [vmem:[#allocation2 + $0x132] sm:$0xff] %vm94, %v67
    %133 = vst.msk [vmem:[#allocation2 + $0x13a] sm:$0xff] %vm94, %v68
    %134 = vst.msk [vmem:[#allocation2 + $0x142] sm:$0xff] %vm94, %v69
    %135 = vst.msk [vmem:[#allocation2 + $0x14a] sm:$0xff] %vm94, %v70
    %136 = vst.msk [vmem:[#allocation2 + $0x152] sm:$0xff] %vm94, %v71
    %137 = vst.msk [vmem:[#allocation2 + $0x15a] sm:$0xff] %vm94, %v72
    %138 = vst.msk [vmem:[#allocation2 + $0x162] sm:$0xff] %vm94, %v73
    %139 = vst.msk [vmem:[#allocation2 + $0x16a] sm:$0xff] %vm94, %v74
    %140 = vst.msk [vmem:[#allocation2 + $0x172] sm:$0xff] %vm94, %v75
    %141 = vst.msk [vmem:[#allocation2 + $0x17a] sm:$0xff] %vm94, %v76
    %142 = vst.msk [vmem:[#allocation2 + $0x182] sm:$0xff] %vm94, %v77
    %143 = vst.msk [vmem:[#allocation2 + $0x18a] sm:$0xff] %vm94, %v78
    %144 = vst.msk [vmem:[#allocation2 + $0x192] sm:$0xff] %vm94, %v79
    %145 = vst.msk [vmem:[#allocation2 + $0x19a] sm:$0xff] %vm94, %v80
    %146 = vst.msk [vmem:[#allocation2 + $0x1a2] sm:$0xff] %vm94, %v81
    %147 = vst.msk [vmem:[#allocation2 + $0x1aa] sm:$0xff] %vm94, %v82
    %148 = vst.msk [vmem:[#allocation2 + $0x1b2] sm:$0xff] %vm94, %v83
    %149 = vst.msk [vmem:[#allocation2 + $0x1ba] sm:$0xff] %vm94, %v84
    %150 = vst.msk [vmem:[#allocation2 + $0x1c2] sm:$0xff] %vm94, %v85
    %151 = vst.msk [vmem:[#allocation2 + $0x1ca] sm:$0xff] %vm94, %v86
    %152 = vst.msk [vmem:[#allocation2 + $0x1d2] sm:$0xff] %vm94, %v87
    %153 = vst.msk [vmem:[#allocation2 + $0x1da] sm:$0xff] %vm94, %v88
    %154 = vst.msk [vmem:[#allocation2 + $0x1e2] sm:$0xff] %vm94, %v89
    %155 = vst.msk [vmem:[#allocation2 + $0x1ea] sm:$0xff] %vm94, %v90
    %156 = vst.msk [vmem:[#allocation2 + $0x1f2] sm:$0xff] %vm94, %v91
    %157 = vst.msk [vmem:[#allocation2 + $0x1fa] sm:$0xff] %vm94, %v92
    %158 = vst.msk [vmem:[#allocation2 + $0x202] sm:$0xff] %vm94, %v93
    %v159 = vld [vmem:[#allocation2] ss:$2 sm:$0xff]
    %s160 = scalar_lea.vmem [#allocation2], 16
    %v161 = vld [vmem:[%s160] ss:$2 sm:$0xff]
    %s162 = scalar_lea.vmem [#allocation2], 32
    %v163 = vld [vmem:[%s162] ss:$2 sm:$0xff]
    %s164 = scalar_lea.vmem [#allocation2], 48
    %v165 = vld [vmem:[%s164] ss:$2 sm:$0xff]
    %s166 = scalar_lea.vmem [#allocation2], 64
    %v167 = vld [vmem:[%s166] ss:$2 sm:$0xff]
    %s168 = scalar_lea.vmem [#allocation2], 80
    %v169 = vld [vmem:[%s168] ss:$2 sm:$0xff]
    %s170 = scalar_lea.vmem [#allocation2], 96
    %v171 = vld [vmem:[%s170] ss:$2 sm:$0xff]
    %s172 = scalar_lea.vmem [#allocation2], 112
    %v173 = vld [vmem:[%s172] ss:$2 sm:$0xff]
    %s174 = scalar_lea.vmem [#allocation2], 128
    %v175 = vld [vmem:[%s174] ss:$2 sm:$0xff]
    %s176 = scalar_lea.vmem [#allocation2], 144
    %v177 = vld [vmem:[%s176] ss:$2 sm:$0xff]
    %s178 = scalar_lea.vmem [#allocation2], 160
    %v179 = vld [vmem:[%s178] ss:$2 sm:$0xff]
    %s180 = scalar_lea.vmem [#allocation2], 176
    %v181 = vld [vmem:[%s180] ss:$2 sm:$0xff]
    %s182 = scalar_lea.vmem [#allocation2], 192
    %v183 = vld [vmem:[%s182] ss:$2 sm:$0xff]
    %s184 = scalar_lea.vmem [#allocation2], 208
    %v185 = vld [vmem:[%s184] ss:$2 sm:$0xff]
    %s186 = scalar_lea.vmem [#allocation2], 224
    %v187 = vld [vmem:[%s186] ss:$2 sm:$0xff]
    %s188 = scalar_lea.vmem [#allocation2], 240
    %v189 = vld [vmem:[%s188] ss:$2 sm:$0xff]
    %s190 = scalar_lea.vmem [#allocation2], 264
    %v191 = vld [vmem:[%s190] ss:$2 sm:$0xff]
    %s192 = scalar_lea.vmem [#allocation2], 280
    %v193 = vld [vmem:[%s192] ss:$2 sm:$0xff]
    %s194 = scalar_lea.vmem [#allocation2], 296
    %v195 = vld [vmem:[%s194] ss:$2 sm:$0xff]
    %s196 = scalar_lea.vmem [#allocation2], 312
    %v197 = vld [vmem:[%s196] ss:$2 sm:$0xff]
    %s198 = scalar_lea.vmem [#allocation2], 328
    %v199 = vld [vmem:[%s198] ss:$2 sm:$0xff]
    %s200 = scalar_lea.vmem [#allocation2], 344
    %v201 = vld [vmem:[%s200] ss:$2 sm:$0xff]
    %s202 = scalar_lea.vmem [#allocation2], 360
    %v203 = vld [vmem:[%s202] ss:$2 sm:$0xff]
    %s204 = scalar_lea.vmem [#allocation2], 376
    %v205 = vld [vmem:[%s204] ss:$2 sm:$0xff]
    %s206 = scalar_lea.vmem [#allocation2], 392
    %v207 = vld [vmem:[%s206] ss:$2 sm:$0xff]
    %s208 = scalar_lea.vmem [#allocation2], 408
    %v209 = vld [vmem:[%s208] ss:$2 sm:$0xff]
    %s210 = scalar_lea.vmem [#allocation2], 424
    %v211 = vld [vmem:[%s210] ss:$2 sm:$0xff]
    %s212 = scalar_lea.vmem [#allocation2], 440
    %v213 = vld [vmem:[%s212] ss:$2 sm:$0xff]
    %s214 = scalar_lea.vmem [#allocation2], 456
    %v215 = vld [vmem:[%s214] ss:$2 sm:$0xff]
    %s216 = scalar_lea.vmem [#allocation2], 472
    %v217 = vld [vmem:[%s216] ss:$2 sm:$0xff]
    %s218 = scalar_lea.vmem [#allocation2], 488
    %v219 = vld [vmem:[%s218] ss:$2 sm:$0xff]
    %s220 = scalar_lea.vmem [#allocation2], 504
    %v221 = vld [vmem:[%s220] ss:$2 sm:$0xff]
    %222 = vst.msk [vmem:[#allocation6] sm:$0xff] %vm94, %v159
    %223 = vst.msk [vmem:[#allocation6 + $0x28] sm:$0xff] %vm94, %v161
    %224 = vst.msk [vmem:[#allocation6 + $0x50] sm:$0xff] %vm94, %v163
    %225 = vst.msk [vmem:[#allocation6 + $0x78] sm:$0xff] %vm94, %v165
    %226 = vst.msk [vmem:[#allocation6 + $0xa0] sm:$0xff] %vm94, %v167
    %227 = vst.msk [vmem:[#allocation6 + $0xc8] sm:$0xff] %vm94, %v169
    %228 = vst.msk [vmem:[#allocation6 + $0xf0] sm:$0xff] %vm94, %v171
    %229 = vst.msk [vmem:[#allocation6 + $0x118] sm:$0xff] %vm94, %v173
    %230 = vst.msk [vmem:[#allocation6 + $0x140] sm:$0xff] %vm94, %v175
    %231 = vst.msk [vmem:[#allocation6 + $0x168] sm:$0xff] %vm94, %v177
    %232 = vst.msk [vmem:[#allocation6 + $0x190] sm:$0xff] %vm94, %v179
    %233 = vst.msk [vmem:[#allocation6 + $0x1b8] sm:$0xff] %vm94, %v181
    %234 = vst.msk [vmem:[#allocation6 + $0x1e0] sm:$0xff] %vm94, %v183
    %235 = vst.msk [vmem:[#allocation6 + $0x208] sm:$0xff] %vm94, %v185
    %236 = vst.msk [vmem:[#allocation6 + $0x230] sm:$0xff] %vm94, %v187
    %237 = vst.msk [vmem:[#allocation6 + $0x258] sm:$0xff] %vm94, %v189
    %238 = vst.msk [vmem:[#allocation6 + $0x280] sm:$0xff] %vm94, %v191
    %239 = vst.msk [vmem:[#allocation6 + $0x2a8] sm:$0xff] %vm94, %v193
    %240 = vst.msk [vmem:[#allocation6 + $0x2d0] sm:$0xff] %vm94, %v195
    %241 = vst.msk [vmem:[#allocation6 + $0x2f8] sm:$0xff] %vm94, %v197
    %242 = vst.msk [vmem:[#allocation6 + $0x320] sm:$0xff] %vm94, %v199
    %243 = vst.msk [vmem:[#allocation6 + $0x348] sm:$0xff] %vm94, %v201
    %244 = vst.msk [vmem:[#allocation6 + $0x370] sm:$0xff] %vm94, %v203
    %245 = vst.msk [vmem:[#allocation6 + $0x398] sm:$0xff] %vm94, %v205
    %246 = vst.msk [vmem:[#allocation6 + $0x3c0] sm:$0xff] %vm94, %v207
    %247 = vst.msk [vmem:[#allocation6 + $0x3e8] sm:$0xff] %vm94, %v209
    %248 = vst.msk [vmem:[#allocation6 + $0x410] sm:$0xff] %vm94, %v211
    %249 = vst.msk [vmem:[#allocation6 + $0x438] sm:$0xff] %vm94, %v213
    %250 = vst.msk [vmem:[#allocation6 + $0x460] sm:$0xff] %vm94, %v215
    %251 = vst.msk [vmem:[#allocation6 + $0x488] sm:$0xff] %vm94, %v217
    %252 = vst.msk [vmem:[#allocation6 + $0x4b0] sm:$0xff] %vm94, %v219
    %253 = vst.msk [vmem:[#allocation6 + $0x4d8] sm:$0xff] %vm94, %v221
    %s254 = scalar_lea.vmem [#allocation2], 1
    %v255 = vld [vmem:[%s254] ss:$2 sm:$0xff]
    %s256 = scalar_lea.vmem [#allocation2], 17
    %v257 = vld [vmem:[%s256] ss:$2 sm:$0xff]
    %s258 = scalar_lea.vmem [#allocation2], 33
    %v259 = vld [vmem:[%s258] ss:$2 sm:$0xff]
    %s260 = scalar_lea.vmem [#allocation2], 49
    %v261 = vld [vmem:[%s260] ss:$2 sm:$0xff]
    %s262 = scalar_lea.vmem [#allocation2], 65
    %v263 = vld [vmem:[%s262] ss:$2 sm:$0xff]
    %s264 = scalar_lea.vmem [#allocation2], 81
    %v265 = vld [vmem:[%s264] ss:$2 sm:$0xff]
    %s266 = scalar_lea.vmem [#allocation2], 97
    %v267 = vld [vmem:[%s266] ss:$2 sm:$0xff]
    %s268 = scalar_lea.vmem [#allocation2], 113
    %v269 = vld [vmem:[%s268] ss:$2 sm:$0xff]
    %s270 = scalar_lea.vmem [#allocation2], 129
    %v271 = vld [vmem:[%s270] ss:$2 sm:$0xff]
    %s272 = scalar_lea.vmem [#allocation2], 145
    %v273 = vld [vmem:[%s272] ss:$2 sm:$0xff]
    %s274 = scalar_lea.vmem [#allocation2], 161
    %v275 = vld [vmem:[%s274] ss:$2 sm:$0xff]
    %s276 = scalar_lea.vmem [#allocation2], 177
    %v277 = vld [vmem:[%s276] ss:$2 sm:$0xff]
    %s278 = scalar_lea.vmem [#allocation2], 193
    %v279 = vld [vmem:[%s278] ss:$2 sm:$0xff]
    %s280 = scalar_lea.vmem [#allocation2], 209
    %v281 = vld [vmem:[%s280] ss:$2 sm:$0xff]
    %s282 = scalar_lea.vmem [#allocation2], 225
    %v283 = vld [vmem:[%s282] ss:$2 sm:$0xff]
    %s284 = scalar_lea.vmem [#allocation2], 241
    %v285 = vld [vmem:[%s284] ss:$2 sm:$0xff]
    %s286 = scalar_lea.vmem [#allocation2], 265
    %v287 = vld [vmem:[%s286] ss:$2 sm:$0xff]
    %s288 = scalar_lea.vmem [#allocation2], 281
    %v289 = vld [vmem:[%s288] ss:$2 sm:$0xff]
    %s290 = scalar_lea.vmem [#allocation2], 297
    %v291 = vld [vmem:[%s290] ss:$2 sm:$0xff]
    %s292 = scalar_lea.vmem [#allocation2], 313
    %v293 = vld [vmem:[%s292] ss:$2 sm:$0xff]
    %s294 = scalar_lea.vmem [#allocation2], 329
    %v295 = vld [vmem:[%s294] ss:$2 sm:$0xff]
    %s296 = scalar_lea.vmem [#allocation2], 345
    %v297 = vld [vmem:[%s296] ss:$2 sm:$0xff]
    %s298 = scalar_lea.vmem [#allocation2], 361
    %v299 = vld [vmem:[%s298] ss:$2 sm:$0xff]
    %s300 = scalar_lea.vmem [#allocation2], 377
    %v301 = vld [vmem:[%s300] ss:$2 sm:$0xff]
    %s302 = scalar_lea.vmem [#allocation2], 393
    %v303 = vld [vmem:[%s302] ss:$2 sm:$0xff]
    %s304 = scalar_lea.vmem [#allocation2], 409
    %v305 = vld [vmem:[%s304] ss:$2 sm:$0xff]
    %s306 = scalar_lea.vmem [#allocation2], 425
    %v307 = vld [vmem:[%s306] ss:$2 sm:$0xff]
    %s308 = scalar_lea.vmem [#allocation2], 441
    %v309 = vld [vmem:[%s308] ss:$2 sm:$0xff]
    %s310 = scalar_lea.vmem [#allocation2], 457
    %v311 = vld [vmem:[%s310] ss:$2 sm:$0xff]
    %s312 = scalar_lea.vmem [#allocation2], 473
    %v313 = vld [vmem:[%s312] ss:$2 sm:$0xff]
    %s314 = scalar_lea.vmem [#allocation2], 489
    %v315 = vld [vmem:[%s314] ss:$2 sm:$0xff]
    %s316 = scalar_lea.vmem [#allocation2], 505
    %v317 = vld [vmem:[%s316] ss:$2 sm:$0xff]
    %350 = vrot.lane.b32.xlu0 %v255, 2
    %v351 = vpop.permute.xlu0 %350
    %352 = vrot.lane.b32.xlu0 %v257, 2
    %v353 = vpop.permute.xlu0 %352
    %354 = vrot.lane.b32.xlu0 %v259, 2
    %v355 = vpop.permute.xlu0 %354
    %356 = vrot.lane.b32.xlu0 %v261, 2
    %v357 = vpop.permute.xlu0 %356
    %358 = vrot.lane.b32.xlu0 %v263, 2
    %v359 = vpop.permute.xlu0 %358
    %360 = vrot.lane.b32.xlu0 %v265, 2
    %v361 = vpop.permute.xlu0 %360
    %362 = vrot.lane.b32.xlu0 %v267, 2
    %v363 = vpop.permute.xlu0 %362
    %364 = vrot.lane.b32.xlu0 %v269, 2
    %v365 = vpop.permute.xlu0 %364
    %366 = vrot.lane.b32.xlu0 %v271, 2
    %v367 = vpop.permute.xlu0 %366
    %368 = vrot.lane.b32.xlu0 %v273, 2
    %v369 = vpop.permute.xlu0 %368
    %370 = vrot.lane.b32.xlu0 %v275, 2
    %v371 = vpop.permute.xlu0 %370
    %372 = vrot.lane.b32.xlu0 %v277, 2
    %v373 = vpop.permute.xlu0 %372
    %374 = vrot.lane.b32.xlu0 %v279, 2
    %v375 = vpop.permute.xlu0 %374
    %376 = vrot.lane.b32.xlu0 %v281, 2
    %v377 = vpop.permute.xlu0 %376
    %378 = vrot.lane.b32.xlu0 %v283, 2
    %v379 = vpop.permute.xlu0 %378
    %380 = vrot.lane.b32.xlu0 %v285, 2
    %v381 = vpop.permute.xlu0 %380
    %382 = vrot.lane.b32.xlu0 %v287, 2
    %v383 = vpop.permute.xlu0 %382
    %384 = vrot.lane.b32.xlu0 %v289, 2
    %v385 = vpop.permute.xlu0 %384
    %386 = vrot.lane.b32.xlu0 %v291, 2
    %v387 = vpop.permute.xlu0 %386
    %388 = vrot.lane.b32.xlu0 %v293, 2
    %v389 = vpop.permute.xlu0 %388
    %390 = vrot.lane.b32.xlu0 %v295, 2
    %v391 = vpop.permute.xlu0 %390
    %392 = vrot.lane.b32.xlu0 %v297, 2
    %v393 = vpop.permute.xlu0 %392
    %394 = vrot.lane.b32.xlu0 %v299, 2
    %v395 = vpop.permute.xlu0 %394
    %396 = vrot.lane.b32.xlu0 %v301, 2
    %v397 = vpop.permute.xlu0 %396
    %398 = vrot.lane.b32.xlu0 %v303, 2
    %v399 = vpop.permute.xlu0 %398
    %400 = vrot.lane.b32.xlu0 %v305, 2
    %v401 = vpop.permute.xlu0 %400
    %402 = vrot.lane.b32.xlu0 %v307, 2
    %v403 = vpop.permute.xlu0 %402
    %404 = vrot.lane.b32.xlu0 %v309, 2
    %v405 = vpop.permute.xlu0 %404
    %406 = vrot.lane.b32.xlu0 %v311, 2
    %v407 = vpop.permute.xlu0 %406
    %408 = vrot.lane.b32.xlu0 %v313, 2
    %v409 = vpop.permute.xlu0 %408
    %410 = vrot.lane.b32.xlu0 %v315, 2
    %v411 = vpop.permute.xlu0 %410
    %412 = vrot.lane.b32.xlu0 %v317, 2
    %v413 = vpop.permute.xlu0 %412
    %vm446 = vcmask 31760
    %447 = vst.msk [vmem:[#allocation6] sm:$0xff] %vm446, %v351
    %448 = vst.msk [vmem:[#allocation6 + $0x28] sm:$0xff] %vm446, %v353
    %449 = vst.msk [vmem:[#allocation6 + $0x50] sm:$0xff] %vm446, %v355
    %450 = vst.msk [vmem:[#allocation6 + $0x78] sm:$0xff] %vm446, %v357
    %451 = vst.msk [vmem:[#allocation6 + $0xa0] sm:$0xff] %vm446, %v359
    %452 = vst.msk [vmem:[#allocation6 + $0xc8] sm:$0xff] %vm446, %v361
    %453 = vst.msk [vmem:[#allocation6 + $0xf0] sm:$0xff] %vm446, %v363
    %454 = vst.msk [vmem:[#allocation6 + $0x118] sm:$0xff] %vm446, %v365
    %455 = vst.msk [vmem:[#allocation6 + $0x140] sm:$0xff] %vm446, %v367
    %456 = vst.msk [vmem:[#allocation6 + $0x168] sm:$0xff] %vm446, %v369
    %457 = vst.msk [vmem:[#allocation6 + $0x190] sm:$0xff] %vm446, %v371
    %458 = vst.msk [vmem:[#allocation6 + $0x1b8] sm:$0xff] %vm446, %v373
    %459 = vst.msk [vmem:[#allocation6 + $0x1e0] sm:$0xff] %vm446, %v375
    %460 = vst.msk [vmem:[#allocation6 + $0x208] sm:$0xff] %vm446, %v377
    %461 = vst.msk [vmem:[#allocation6 + $0x230] sm:$0xff] %vm446, %v379
    %462 = vst.msk [vmem:[#allocation6 + $0x258] sm:$0xff] %vm446, %v381
    %463 = vst.msk [vmem:[#allocation6 + $0x280] sm:$0xff] %vm446, %v383
    %464 = vst.msk [vmem:[#allocation6 + $0x2a8] sm:$0xff] %vm446, %v385
    %465 = vst.msk [vmem:[#allocation6 + $0x2d0] sm:$0xff] %vm446, %v387
    %466 = vst.msk [vmem:[#allocation6 + $0x2f8] sm:$0xff] %vm446, %v389
    %467 = vst.msk [vmem:[#allocation6 + $0x320] sm:$0xff] %vm446, %v391
    %468 = vst.msk [vmem:[#allocation6 + $0x348] sm:$0xff] %vm446, %v393
    %469 = vst.msk [vmem:[#allocation6 + $0x370] sm:$0xff] %vm446, %v395
    %470 = vst.msk [vmem:[#allocation6 + $0x398] sm:$0xff] %vm446, %v397
    %471 = vst.msk [vmem:[#allocation6 + $0x3c0] sm:$0xff] %vm446, %v399
    %472 = vst.msk [vmem:[#allocation6 + $0x3e8] sm:$0xff] %vm446, %v401
    %473 = vst.msk [vmem:[#allocation6 + $0x410] sm:$0xff] %vm446, %v403
    %474 = vst.msk [vmem:[#allocation6 + $0x438] sm:$0xff] %vm446, %v405
    %475 = vst.msk [vmem:[#allocation6 + $0x460] sm:$0xff] %vm446, %v407
    %476 = vst.msk [vmem:[#allocation6 + $0x488] sm:$0xff] %vm446, %v409
    %477 = vst.msk [vmem:[#allocation6 + $0x4b0] sm:$0xff] %vm446, %v411
    %478 = vst.msk [vmem:[#allocation6 + $0x4d8] sm:$0xff] %vm446, %v413
    %s479 = scalar_lea.vmem [#allocation2], 2
    %v480 = vld [vmem:[%s479] ss:$2 sm:$0xff]
    %s481 = scalar_lea.vmem [#allocation2], 18
    %v482 = vld [vmem:[%s481] ss:$2 sm:$0xff]
    %s483 = scalar_lea.vmem [#allocation2], 34
    %v484 = vld [vmem:[%s483] ss:$2 sm:$0xff]
    %s485 = scalar_lea.vmem [#allocation2], 50
    %v486 = vld [vmem:[%s485] ss:$2 sm:$0xff]
    %s487 = scalar_lea.vmem [#allocation2], 66
    %v488 = vld [vmem:[%s487] ss:$2 sm:$0xff]
    %s489 = scalar_lea.vmem [#allocation2], 82
    %v490 = vld [vmem:[%s489] ss:$2 sm:$0xff]
    %s491 = scalar_lea.vmem [#allocation2], 98
    %v492 = vld [vmem:[%s491] ss:$2 sm:$0xff]
    %s493 = scalar_lea.vmem [#allocation2], 114
    %v494 = vld [vmem:[%s493] ss:$2 sm:$0xff]
    %s495 = scalar_lea.vmem [#allocation2], 130
    %v496 = vld [vmem:[%s495] ss:$2 sm:$0xff]
    %s497 = scalar_lea.vmem [#allocation2], 146
    %v498 = vld [vmem:[%s497] ss:$2 sm:$0xff]
    %s499 = scalar_lea.vmem [#allocation2], 162
    %v500 = vld [vmem:[%s499] ss:$2 sm:$0xff]
    %s501 = scalar_lea.vmem [#allocation2], 178
    %v502 = vld [vmem:[%s501] ss:$2 sm:$0xff]
    %s503 = scalar_lea.vmem [#allocation2], 194
    %v504 = vld [vmem:[%s503] ss:$2 sm:$0xff]
    %s505 = scalar_lea.vmem [#allocation2], 210
    %v506 = vld [vmem:[%s505] ss:$2 sm:$0xff]
    %s507 = scalar_lea.vmem [#allocation2], 226
    %v508 = vld [vmem:[%s507] ss:$2 sm:$0xff]
    %s509 = scalar_lea.vmem [#allocation2], 242
    %v510 = vld [vmem:[%s509] ss:$2 sm:$0xff]
    %s511 = scalar_lea.vmem [#allocation2], 266
    %v512 = vld [vmem:[%s511] ss:$2 sm:$0xff]
    %s513 = scalar_lea.vmem [#allocation2], 282
    %v514 = vld [vmem:[%s513] ss:$2 sm:$0xff]
    %s515 = scalar_lea.vmem [#allocation2], 298
    %v516 = vld [vmem:[%s515] ss:$2 sm:$0xff]
    %s517 = scalar_lea.vmem [#allocation2], 314
    %v518 = vld [vmem:[%s517] ss:$2 sm:$0xff]
    %s519 = scalar_lea.vmem [#allocation2], 330
    %v520 = vld [vmem:[%s519] ss:$2 sm:$0xff]
    %s521 = scalar_lea.vmem [#allocation2], 346
    %v522 = vld [vmem:[%s521] ss:$2 sm:$0xff]
    %s523 = scalar_lea.vmem [#allocation2], 362
    %v524 = vld [vmem:[%s523] ss:$2 sm:$0xff]
    %s525 = scalar_lea.vmem [#allocation2], 378
    %v526 = vld [vmem:[%s525] ss:$2 sm:$0xff]
    %s527 = scalar_lea.vmem [#allocation2], 394
    %v528 = vld [vmem:[%s527] ss:$2 sm:$0xff]
    %s529 = scalar_lea.vmem [#allocation2], 410
    %v530 = vld [vmem:[%s529] ss:$2 sm:$0xff]
    %s531 = scalar_lea.vmem [#allocation2], 426
    %v532 = vld [vmem:[%s531] ss:$2 sm:$0xff]
    %s533 = scalar_lea.vmem [#allocation2], 442
    %v534 = vld [vmem:[%s533] ss:$2 sm:$0xff]
    %s535 = scalar_lea.vmem [#allocation2], 458
    %v536 = vld [vmem:[%s535] ss:$2 sm:$0xff]
    %s537 = scalar_lea.vmem [#allocation2], 474
    %v538 = vld [vmem:[%s537] ss:$2 sm:$0xff]
    %s539 = scalar_lea.vmem [#allocation2], 490
    %v540 = vld [vmem:[%s539] ss:$2 sm:$0xff]
    %s541 = scalar_lea.vmem [#allocation2], 506
    %v542 = vld [vmem:[%s541] ss:$2 sm:$0xff]
    %575 = vrot.lane.b32.xlu0 %v480, 4
    %v576 = vpop.permute.xlu0 %575
    %577 = vrot.lane.b32.xlu0 %v482, 4
    %v578 = vpop.permute.xlu0 %577
    %579 = vrot.lane.b32.xlu0 %v484, 4
    %v580 = vpop.permute.xlu0 %579
    %581 = vrot.lane.b32.xlu0 %v486, 4
    %v582 = vpop.permute.xlu0 %581
    %583 = vrot.lane.b32.xlu0 %v488, 4
    %v584 = vpop.permute.xlu0 %583
    %585 = vrot.lane.b32.xlu0 %v490, 4
    %v586 = vpop.permute.xlu0 %585
    %587 = vrot.lane.b32.xlu0 %v492, 4
    %v588 = vpop.permute.xlu0 %587
    %589 = vrot.lane.b32.xlu0 %v494, 4
    %v590 = vpop.permute.xlu0 %589
    %591 = vrot.lane.b32.xlu0 %v496, 4
    %v592 = vpop.permute.xlu0 %591
    %593 = vrot.lane.b32.xlu0 %v498, 4
    %v594 = vpop.permute.xlu0 %593
    %595 = vrot.lane.b32.xlu0 %v500, 4
    %v596 = vpop.permute.xlu0 %595
    %597 = vrot.lane.b32.xlu0 %v502, 4
    %v598 = vpop.permute.xlu0 %597
    %599 = vrot.lane.b32.xlu0 %v504, 4
    %v600 = vpop.permute.xlu0 %599
    %601 = vrot.lane.b32.xlu0 %v506, 4
    %v602 = vpop.permute.xlu0 %601
    %603 = vrot.lane.b32.xlu0 %v508, 4
    %v604 = vpop.permute.xlu0 %603
    %605 = vrot.lane.b32.xlu0 %v510, 4
    %v606 = vpop.permute.xlu0 %605
    %607 = vrot.lane.b32.xlu0 %v512, 4
    %v608 = vpop.permute.xlu0 %607
    %609 = vrot.lane.b32.xlu0 %v514, 4
    %v610 = vpop.permute.xlu0 %609
    %611 = vrot.lane.b32.xlu0 %v516, 4
    %v612 = vpop.permute.xlu0 %611
    %613 = vrot.lane.b32.xlu0 %v518, 4
    %v614 = vpop.permute.xlu0 %613
    %615 = vrot.lane.b32.xlu0 %v520, 4
    %v616 = vpop.permute.xlu0 %615
    %617 = vrot.lane.b32.xlu0 %v522, 4
    %v618 = vpop.permute.xlu0 %617
    %619 = vrot.lane.b32.xlu0 %v524, 4
    %v620 = vpop.permute.xlu0 %619
    %621 = vrot.lane.b32.xlu0 %v526, 4
    %v622 = vpop.permute.xlu0 %621
    %623 = vrot.lane.b32.xlu0 %v528, 4
    %v624 = vpop.permute.xlu0 %623
    %625 = vrot.lane.b32.xlu0 %v530, 4
    %v626 = vpop.permute.xlu0 %625
    %627 = vrot.lane.b32.xlu0 %v532, 4
    %v628 = vpop.permute.xlu0 %627
    %629 = vrot.lane.b32.xlu0 %v534, 4
    %v630 = vpop.permute.xlu0 %629
    %631 = vrot.lane.b32.xlu0 %v536, 4
    %v632 = vpop.permute.xlu0 %631
    %633 = vrot.lane.b32.xlu0 %v538, 4
    %v634 = vpop.permute.xlu0 %633
    %635 = vrot.lane.b32.xlu0 %v540, 4
    %v636 = vpop.permute.xlu0 %635
    %637 = vrot.lane.b32.xlu0 %v542, 4
    %v638 = vpop.permute.xlu0 %637
    %vm671 = vcmask 48160
    %672 = vst.msk [vmem:[#allocation6] sm:$0xff] %vm671, %v576
    %673 = vst.msk [vmem:[#allocation6 + $0x28] sm:$0xff] %vm671, %v578
    %674 = vst.msk [vmem:[#allocation6 + $0x50] sm:$0xff] %vm671, %v580
    %675 = vst.msk [vmem:[#allocation6 + $0x78] sm:$0xff] %vm671, %v582
    %676 = vst.msk [vmem:[#allocation6 + $0xa0] sm:$0xff] %vm671, %v584
    %677 = vst.msk [vmem:[#allocation6 + $0xc8] sm:$0xff] %vm671, %v586
    %678 = vst.msk [vmem:[#allocation6 + $0xf0] sm:$0xff] %vm671, %v588
    %679 = vst.msk [vmem:[#allocation6 + $0x118] sm:$0xff] %vm671, %v590
    %680 = vst.msk [vmem:[#allocation6 + $0x140] sm:$0xff] %vm671, %v592
    %681 = vst.msk [vmem:[#allocation6 + $0x168] sm:$0xff] %vm671, %v594
    %682 = vst.msk [vmem:[#allocation6 + $0x190] sm:$0xff] %vm671, %v596
    %683 = vst.msk [vmem:[#allocation6 + $0x1b8] sm:$0xff] %vm671, %v598
    %684 = vst.msk [vmem:[#allocation6 + $0x1e0] sm:$0xff] %vm671, %v600
    %685 = vst.msk [vmem:[#allocation6 + $0x208] sm:$0xff] %vm671, %v602
    %686 = vst.msk [vmem:[#allocation6 + $0x230] sm:$0xff] %vm671, %v604
    %687 = vst.msk [vmem:[#allocation6 + $0x258] sm:$0xff] %vm671, %v606
    %688 = vst.msk [vmem:[#allocation6 + $0x280] sm:$0xff] %vm671, %v608
    %689 = vst.msk [vmem:[#allocation6 + $0x2a8] sm:$0xff] %vm671, %v610
    %690 = vst.msk [vmem:[#allocation6 + $0x2d0] sm:$0xff] %vm671, %v612
    %691 = vst.msk [vmem:[#allocation6 + $0x2f8] sm:$0xff] %vm671, %v614
    %692 = vst.msk [vmem:[#allocation6 + $0x320] sm:$0xff] %vm671, %v616
    %693 = vst.msk [vmem:[#allocation6 + $0x348] sm:$0xff] %vm671, %v618
    %694 = vst.msk [vmem:[#allocation6 + $0x370] sm:$0xff] %vm671, %v620
    %695 = vst.msk [vmem:[#allocation6 + $0x398] sm:$0xff] %vm671, %v622
    %696 = vst.msk [vmem:[#allocation6 + $0x3c0] sm:$0xff] %vm671, %v624
    %697 = vst.msk [vmem:[#allocation6 + $0x3e8] sm:$0xff] %vm671, %v626
    %698 = vst.msk [vmem:[#allocation6 + $0x410] sm:$0xff] %vm671, %v628
    %699 = vst.msk [vmem:[#allocation6 + $0x438] sm:$0xff] %vm671, %v630
    %700 = vst.msk [vmem:[#allocation6 + $0x460] sm:$0xff] %vm671, %v632
    %701 = vst.msk [vmem:[#allocation6 + $0x488] sm:$0xff] %vm671, %v634
    %702 = vst.msk [vmem:[#allocation6 + $0x4b0] sm:$0xff] %vm671, %v636
    %703 = vst.msk [vmem:[#allocation6 + $0x4d8] sm:$0xff] %vm671, %v638
    %s704 = scalar_lea.vmem [#allocation2], 3
    %v705 = vld [vmem:[%s704] ss:$2 sm:$0xff]
    %s706 = scalar_lea.vmem [#allocation2], 19
    %v707 = vld [vmem:[%s706] ss:$2 sm:$0xff]
    %s708 = scalar_lea.vmem [#allocation2], 35
    %v709 = vld [vmem:[%s708] ss:$2 sm:$0xff]
    %s710 = scalar_lea.vmem [#allocation2], 51
    %v711 = vld [vmem:[%s710] ss:$2 sm:$0xff]
    %s712 = scalar_lea.vmem [#allocation2], 67
    %v713 = vld [vmem:[%s712] ss:$2 sm:$0xff]
    %s714 = scalar_lea.vmem [#allocation2], 83
    %v715 = vld [vmem:[%s714] ss:$2 sm:$0xff]
    %s716 = scalar_lea.vmem [#allocation2], 99
    %v717 = vld [vmem:[%s716] ss:$2 sm:$0xff]
    %s718 = scalar_lea.vmem [#allocation2], 115
    %v719 = vld [vmem:[%s718] ss:$2 sm:$0xff]
    %s720 = scalar_lea.vmem [#allocation2], 131
    %v721 = vld [vmem:[%s720] ss:$2 sm:$0xff]
    %s722 = scalar_lea.vmem [#allocation2], 147
    %v723 = vld [vmem:[%s722] ss:$2 sm:$0xff]
    %s724 = scalar_lea.vmem [#allocation2], 163
    %v725 = vld [vmem:[%s724] ss:$2 sm:$0xff]
    %s726 = scalar_lea.vmem [#allocation2], 179
    %v727 = vld [vmem:[%s726] ss:$2 sm:$0xff]
    %s728 = scalar_lea.vmem [#allocation2], 195
    %v729 = vld [vmem:[%s728] ss:$2 sm:$0xff]
    %s730 = scalar_lea.vmem [#allocation2], 211
    %v731 = vld [vmem:[%s730] ss:$2 sm:$0xff]
    %s732 = scalar_lea.vmem [#allocation2], 227
    %v733 = vld [vmem:[%s732] ss:$2 sm:$0xff]
    %s734 = scalar_lea.vmem [#allocation2], 243
    %v735 = vld [vmem:[%s734] ss:$2 sm:$0xff]
    %s736 = scalar_lea.vmem [#allocation2], 267
    %v737 = vld [vmem:[%s736] ss:$2 sm:$0xff]
    %s738 = scalar_lea.vmem [#allocation2], 283
    %v739 = vld [vmem:[%s738] ss:$2 sm:$0xff]
    %s740 = scalar_lea.vmem [#allocation2], 299
    %v741 = vld [vmem:[%s740] ss:$2 sm:$0xff]
    %s742 = scalar_lea.vmem [#allocation2], 315
    %v743 = vld [vmem:[%s742] ss:$2 sm:$0xff]
    %s744 = scalar_lea.vmem [#allocation2], 331
    %v745 = vld [vmem:[%s744] ss:$2 sm:$0xff]
    %s746 = scalar_lea.vmem [#allocation2], 347
    %v747 = vld [vmem:[%s746] ss:$2 sm:$0xff]
    %s748 = scalar_lea.vmem [#allocation2], 363
    %v749 = vld [vmem:[%s748] ss:$2 sm:$0xff]
    %s750 = scalar_lea.vmem [#allocation2], 379
    %v751 = vld [vmem:[%s750] ss:$2 sm:$0xff]
    %s752 = scalar_lea.vmem [#allocation2], 395
    %v753 = vld [vmem:[%s752] ss:$2 sm:$0xff]
    %s754 = scalar_lea.vmem [#allocation2], 411
    %v755 = vld [vmem:[%s754] ss:$2 sm:$0xff]
    %s756 = scalar_lea.vmem [#allocation2], 427
    %v757 = vld [vmem:[%s756] ss:$2 sm:$0xff]
    %s758 = scalar_lea.vmem [#allocation2], 443
    %v759 = vld [vmem:[%s758] ss:$2 sm:$0xff]
    %s760 = scalar_lea.vmem [#allocation2], 459
    %v761 = vld [vmem:[%s760] ss:$2 sm:$0xff]
    %s762 = scalar_lea.vmem [#allocation2], 475
    %v763 = vld [vmem:[%s762] ss:$2 sm:$0xff]
    %s764 = scalar_lea.vmem [#allocation2], 491
    %v765 = vld [vmem:[%s764] ss:$2 sm:$0xff]
    %s766 = scalar_lea.vmem [#allocation2], 507
    %v767 = vld [vmem:[%s766] ss:$2 sm:$0xff]
    %800 = vrot.lane.b32.xlu0 %v705, 6
    %v801 = vpop.permute.xlu0 %800
    %802 = vrot.lane.b32.xlu0 %v707, 6
    %v803 = vpop.permute.xlu0 %802
    %804 = vrot.lane.b32.xlu0 %v709, 6
    %v805 = vpop.permute.xlu0 %804
    %806 = vrot.lane.b32.xlu0 %v711, 6
    %v807 = vpop.permute.xlu0 %806
    %808 = vrot.lane.b32.xlu0 %v713, 6
    %v809 = vpop.permute.xlu0 %808
    %810 = vrot.lane.b32.xlu0 %v715, 6
    %v811 = vpop.permute.xlu0 %810
    %812 = vrot.lane.b32.xlu0 %v717, 6
    %v813 = vpop.permute.xlu0 %812
    %814 = vrot.lane.b32.xlu0 %v719, 6
    %v815 = vpop.permute.xlu0 %814
    %816 = vrot.lane.b32.xlu0 %v721, 6
    %v817 = vpop.permute.xlu0 %816
    %818 = vrot.lane.b32.xlu0 %v723, 6
    %v819 = vpop.permute.xlu0 %818
    %820 = vrot.lane.b32.xlu0 %v725, 6
    %v821 = vpop.permute.xlu0 %820
    %822 = vrot.lane.b32.xlu0 %v727, 6
    %v823 = vpop.permute.xlu0 %822
    %824 = vrot.lane.b32.xlu0 %v729, 6
    %v825 = vpop.permute.xlu0 %824
    %826 = vrot.lane.b32.xlu0 %v731, 6
    %v827 = vpop.permute.xlu0 %826
    %828 = vrot.lane.b32.xlu0 %v733, 6
    %v829 = vpop.permute.xlu0 %828
    %830 = vrot.lane.b32.xlu0 %v735, 6
    %v831 = vpop.permute.xlu0 %830
    %832 = vrot.lane.b32.xlu0 %v737, 6
    %v833 = vpop.permute.xlu0 %832
    %834 = vrot.lane.b32.xlu0 %v739, 6
    %v835 = vpop.permute.xlu0 %834
    %836 = vrot.lane.b32.xlu0 %v741, 6
    %v837 = vpop.permute.xlu0 %836
    %838 = vrot.lane.b32.xlu0 %v743, 6
    %v839 = vpop.permute.xlu0 %838
    %840 = vrot.lane.b32.xlu0 %v745, 6
    %v841 = vpop.permute.xlu0 %840
    %842 = vrot.lane.b32.xlu0 %v747, 6
    %v843 = vpop.permute.xlu0 %842
    %844 = vrot.lane.b32.xlu0 %v749, 6
    %v845 = vpop.permute.xlu0 %844
    %846 = vrot.lane.b32.xlu0 %v751, 6
    %v847 = vpop.permute.xlu0 %846
    %848 = vrot.lane.b32.xlu0 %v753, 6
    %v849 = vpop.permute.xlu0 %848
    %850 = vrot.lane.b32.xlu0 %v755, 6
    %v851 = vpop.permute.xlu0 %850
    %852 = vrot.lane.b32.xlu0 %v757, 6
    %v853 = vpop.permute.xlu0 %852
    %854 = vrot.lane.b32.xlu0 %v759, 6
    %v855 = vpop.permute.xlu0 %854
    %856 = vrot.lane.b32.xlu0 %v761, 6
    %v857 = vpop.permute.xlu0 %856
    %858 = vrot.lane.b32.xlu0 %v763, 6
    %v859 = vpop.permute.xlu0 %858
    %860 = vrot.lane.b32.xlu0 %v765, 6
    %v861 = vpop.permute.xlu0 %860
    %862 = vrot.lane.b32.xlu0 %v767, 6
    %v863 = vpop.permute.xlu0 %862
    %vm896 = vcmask 64560
    %897 = vst.msk [vmem:[#allocation6] sm:$0xff] %vm896, %v801
    %898 = vst.msk [vmem:[#allocation6 + $0x28] sm:$0xff] %vm896, %v803
    %899 = vst.msk [vmem:[#allocation6 + $0x50] sm:$0xff] %vm896, %v805
    %900 = vst.msk [vmem:[#allocation6 + $0x78] sm:$0xff] %vm896, %v807
    %901 = vst.msk [vmem:[#allocation6 + $0xa0] sm:$0xff] %vm896, %v809
    %902 = vst.msk [vmem:[#allocation6 + $0xc8] sm:$0xff] %vm896, %v811
    %903 = vst.msk [vmem:[#allocation6 + $0xf0] sm:$0xff] %vm896, %v813
    %904 = vst.msk [vmem:[#allocation6 + $0x118] sm:$0xff] %vm896, %v815
    %905 = vst.msk [vmem:[#allocation6 + $0x140] sm:$0xff] %vm896, %v817
    %906 = vst.msk [vmem:[#allocation6 + $0x168] sm:$0xff] %vm896, %v819
    %907 = vst.msk [vmem:[#allocation6 + $0x190] sm:$0xff] %vm896, %v821
    %908 = vst.msk [vmem:[#allocation6 + $0x1b8] sm:$0xff] %vm896, %v823
    %909 = vst.msk [vmem:[#allocation6 + $0x1e0] sm:$0xff] %vm896, %v825
    %910 = vst.msk [vmem:[#allocation6 + $0x208] sm:$0xff] %vm896, %v827
    %911 = vst.msk [vmem:[#allocation6 + $0x230] sm:$0xff] %vm896, %v829
    %912 = vst.msk [vmem:[#allocation6 + $0x258] sm:$0xff] %vm896, %v831
    %913 = vst.msk [vmem:[#allocation6 + $0x280] sm:$0xff] %vm896, %v833
    %914 = vst.msk [vmem:[#allocation6 + $0x2a8] sm:$0xff] %vm896, %v835
    %915 = vst.msk [vmem:[#allocation6 + $0x2d0] sm:$0xff] %vm896, %v837
    %916 = vst.msk [vmem:[#allocation6 + $0x2f8] sm:$0xff] %vm896, %v839
    %917 = vst.msk [vmem:[#allocation6 + $0x320] sm:$0xff] %vm896, %v841
    %918 = vst.msk [vmem:[#allocation6 + $0x348] sm:$0xff] %vm896, %v843
    %919 = vst.msk [vmem:[#allocation6 + $0x370] sm:$0xff] %vm896, %v845
    %920 = vst.msk [vmem:[#allocation6 + $0x398] sm:$0xff] %vm896, %v847
    %921 = vst.msk [vmem:[#allocation6 + $0x3c0] sm:$0xff] %vm896, %v849
    %922 = vst.msk [vmem:[#allocation6 + $0x3e8] sm:$0xff] %vm896, %v851
    %923 = vst.msk [vmem:[#allocation6 + $0x410] sm:$0xff] %vm896, %v853
    %924 = vst.msk [vmem:[#allocation6 + $0x438] sm:$0xff] %vm896, %v855
    %925 = vst.msk [vmem:[#allocation6 + $0x460] sm:$0xff] %vm896, %v857
    %926 = vst.msk [vmem:[#allocation6 + $0x488] sm:$0xff] %vm896, %v859
    %927 = vst.msk [vmem:[#allocation6 + $0x4b0] sm:$0xff] %vm896, %v861
    %928 = vst.msk [vmem:[#allocation6 + $0x4d8] sm:$0xff] %vm896, %v863
    %s929 = scalar_lea.vmem [#allocation2], 4
    %v930 = vld [vmem:[%s929] ss:$2 sm:$0xff]
    %s931 = scalar_lea.vmem [#allocation2], 20
    %v932 = vld [vmem:[%s931] ss:$2 sm:$0xff]
    %s933 = scalar_lea.vmem [#allocation2], 36
    %v934 = vld [vmem:[%s933] ss:$2 sm:$0xff]
    %s935 = scalar_lea.vmem [#allocation2], 52
    %v936 = vld [vmem:[%s935] ss:$2 sm:$0xff]
    %s937 = scalar_lea.vmem [#allocation2], 68
    %v938 = vld [vmem:[%s937] ss:$2 sm:$0xff]
    %s939 = scalar_lea.vmem [#allocation2], 84
    %v940 = vld [vmem:[%s939] ss:$2 sm:$0xff]
    %s941 = scalar_lea.vmem [#allocation2], 100
    %v942 = vld [vmem:[%s941] ss:$2 sm:$0xff]
    %s943 = scalar_lea.vmem [#allocation2], 116
    %v944 = vld [vmem:[%s943] ss:$2 sm:$0xff]
    %s945 = scalar_lea.vmem [#allocation2], 132
    %v946 = vld [vmem:[%s945] ss:$2 sm:$0xff]
    %s947 = scalar_lea.vmem [#allocation2], 148
    %v948 = vld [vmem:[%s947] ss:$2 sm:$0xff]
    %s949 = scalar_lea.vmem [#allocation2], 164
    %v950 = vld [vmem:[%s949] ss:$2 sm:$0xff]
    %s951 = scalar_lea.vmem [#allocation2], 180
    %v952 = vld [vmem:[%s951] ss:$2 sm:$0xff]
    %s953 = scalar_lea.vmem [#allocation2], 196
    %v954 = vld [vmem:[%s953] ss:$2 sm:$0xff]
    %s955 = scalar_lea.vmem [#allocation2], 212
    %v956 = vld [vmem:[%s955] ss:$2 sm:$0xff]
    %s957 = scalar_lea.vmem [#allocation2], 228
    %v958 = vld [vmem:[%s957] ss:$2 sm:$0xff]
    %s959 = scalar_lea.vmem [#allocation2], 244
    %v960 = vld [vmem:[%s959] ss:$2 sm:$0xff]
    %s961 = scalar_lea.vmem [#allocation2], 268
    %v962 = vld [vmem:[%s961] ss:$2 sm:$0xff]
    %s963 = scalar_lea.vmem [#allocation2], 284
    %v964 = vld [vmem:[%s963] ss:$2 sm:$0xff]
    %s965 = scalar_lea.vmem [#allocation2], 300
    %v966 = vld [vmem:[%s965] ss:$2 sm:$0xff]
    %s967 = scalar_lea.vmem [#allocation2], 316
    %v968 = vld [vmem:[%s967] ss:$2 sm:$0xff]
    %s969 = scalar_lea.vmem [#allocation2], 332
    %v970 = vld [vmem:[%s969] ss:$2 sm:$0xff]
    %s971 = scalar_lea.vmem [#allocation2], 348
    %v972 = vld [vmem:[%s971] ss:$2 sm:$0xff]
    %s973 = scalar_lea.vmem [#allocation2], 364
    %v974 = vld [vmem:[%s973] ss:$2 sm:$0xff]
    %s975 = scalar_lea.vmem [#allocation2], 380
    %v976 = vld [vmem:[%s975] ss:$2 sm:$0xff]
    %s977 = scalar_lea.vmem [#allocation2], 396
    %v978 = vld [vmem:[%s977] ss:$2 sm:$0xff]
    %s979 = scalar_lea.vmem [#allocation2], 412
    %v980 = vld [vmem:[%s979] ss:$2 sm:$0xff]
    %s981 = scalar_lea.vmem [#allocation2], 428
    %v982 = vld [vmem:[%s981] ss:$2 sm:$0xff]
    %s983 = scalar_lea.vmem [#allocation2], 444
    %v984 = vld [vmem:[%s983] ss:$2 sm:$0xff]
    %s985 = scalar_lea.vmem [#allocation2], 460
    %v986 = vld [vmem:[%s985] ss:$2 sm:$0xff]
    %s987 = scalar_lea.vmem [#allocation2], 476
    %v988 = vld [vmem:[%s987] ss:$2 sm:$0xff]
    %s989 = scalar_lea.vmem [#allocation2], 492
    %v990 = vld [vmem:[%s989] ss:$2 sm:$0xff]
    %s991 = scalar_lea.vmem [#allocation2], 508
    %v992 = vld [vmem:[%s991] ss:$2 sm:$0xff]
    %1025 = vrot.lane.b32.xlu0 %v930, 8
    %v1026 = vpop.permute.xlu0 %1025
    %1027 = vrot.lane.b32.xlu0 %v932, 8
    %v1028 = vpop.permute.xlu0 %1027
    %1029 = vrot.lane.b32.xlu0 %v934, 8
    %v1030 = vpop.permute.xlu0 %1029
    %1031 = vrot.lane.b32.xlu0 %v936, 8
    %v1032 = vpop.permute.xlu0 %1031
    %1033 = vrot.lane.b32.xlu0 %v938, 8
    %v1034 = vpop.permute.xlu0 %1033
    %1035 = vrot.lane.b32.xlu0 %v940, 8
    %v1036 = vpop.permute.xlu0 %1035
    %1037 = vrot.lane.b32.xlu0 %v942, 8
    %v1038 = vpop.permute.xlu0 %1037
    %1039 = vrot.lane.b32.xlu0 %v944, 8
    %v1040 = vpop.permute.xlu0 %1039
    %1041 = vrot.lane.b32.xlu0 %v946, 8
    %v1042 = vpop.permute.xlu0 %1041
    %1043 = vrot.lane.b32.xlu0 %v948, 8
    %v1044 = vpop.permute.xlu0 %1043
    %1045 = vrot.lane.b32.xlu0 %v950, 8
    %v1046 = vpop.permute.xlu0 %1045
    %1047 = vrot.lane.b32.xlu0 %v952, 8
    %v1048 = vpop.permute.xlu0 %1047
    %1049 = vrot.lane.b32.xlu0 %v954, 8
    %v1050 = vpop.permute.xlu0 %1049
    %1051 = vrot.lane.b32.xlu0 %v956, 8
    %v1052 = vpop.permute.xlu0 %1051
    %1053 = vrot.lane.b32.xlu0 %v958, 8
    %v1054 = vpop.permute.xlu0 %1053
    %1055 = vrot.lane.b32.xlu0 %v960, 8
    %v1056 = vpop.permute.xlu0 %1055
    %1057 = vrot.lane.b32.xlu0 %v962, 8
    %v1058 = vpop.permute.xlu0 %1057
    %1059 = vrot.lane.b32.xlu0 %v964, 8
    %v1060 = vpop.permute.xlu0 %1059
    %1061 = vrot.lane.b32.xlu0 %v966, 8
    %v1062 = vpop.permute.xlu0 %1061
    %1063 = vrot.lane.b32.xlu0 %v968, 8
    %v1064 = vpop.permute.xlu0 %1063
    %1065 = vrot.lane.b32.xlu0 %v970, 8
    %v1066 = vpop.permute.xlu0 %1065
    %1067 = vrot.lane.b32.xlu0 %v972, 8
    %v1068 = vpop.permute.xlu0 %1067
    %1069 = vrot.lane.b32.xlu0 %v974, 8
    %v1070 = vpop.permute.xlu0 %1069
    %1071 = vrot.lane.b32.xlu0 %v976, 8
    %v1072 = vpop.permute.xlu0 %1071
    %1073 = vrot.lane.b32.xlu0 %v978, 8
    %v1074 = vpop.permute.xlu0 %1073
    %1075 = vrot.lane.b32.xlu0 %v980, 8
    %v1076 = vpop.permute.xlu0 %1075
    %1077 = vrot.lane.b32.xlu0 %v982, 8
    %v1078 = vpop.permute.xlu0 %1077
    %1079 = vrot.lane.b32.xlu0 %v984, 8
    %v1080 = vpop.permute.xlu0 %1079
    %1081 = vrot.lane.b32.xlu0 %v986, 8
    %v1082 = vpop.permute.xlu0 %1081
    %1083 = vrot.lane.b32.xlu0 %v988, 8
    %v1084 = vpop.permute.xlu0 %1083
    %1085 = vrot.lane.b32.xlu0 %v990, 8
    %v1086 = vpop.permute.xlu0 %1085
    %1087 = vrot.lane.b32.xlu0 %v992, 8
    %v1088 = vpop.permute.xlu0 %1087
    %vm1121 = vcmask 80960
    %1122 = vst.msk [vmem:[#allocation6] sm:$0xff] %vm1121, %v1026
    %1123 = vst.msk [vmem:[#allocation6 + $0x28] sm:$0xff] %vm1121, %v1028
    %1124 = vst.msk [vmem:[#allocation6 + $0x50] sm:$0xff] %vm1121, %v1030
    %1125 = vst.msk [vmem:[#allocation6 + $0x78] sm:$0xff] %vm1121, %v1032
    %1126 = vst.msk [vmem:[#allocation6 + $0xa0] sm:$0xff] %vm1121, %v1034
    %1127 = vst.msk [vmem:[#allocation6 + $0xc8] sm:$0xff] %vm1121, %v1036
    %1128 = vst.msk [vmem:[#allocation6 + $0xf0] sm:$0xff] %vm1121, %v1038
    %1129 = vst.msk [vmem:[#allocation6 + $0x118] sm:$0xff] %vm1121, %v1040
    %1130 = vst.msk [vmem:[#allocation6 + $0x140] sm:$0xff] %vm1121, %v1042
    %1131 = vst.msk [vmem:[#allocation6 + $0x168] sm:$0xff] %vm1121, %v1044
    %1132 = vst.msk [vmem:[#allocation6 + $0x190] sm:$0xff] %vm1121, %v1046
    %1133 = vst.msk [vmem:[#allocation6 + $0x1b8] sm:$0xff] %vm1121, %v1048
    %1134 = vst.msk [vmem:[#allocation6 + $0x1e0] sm:$0xff] %vm1121, %v1050
    %1135 = vst.msk [vmem:[#allocation6 + $0x208] sm:$0xff] %vm1121, %v1052
    %1136 = vst.msk [vmem:[#allocation6 + $0x230] sm:$0xff] %vm1121, %v1054
    %1137 = vst.msk [vmem:[#allocation6 + $0x258] sm:$0xff] %vm1121, %v1056
    %1138 = vst.msk [vmem:[#allocation6 + $0x280] sm:$0xff] %vm1121, %v1058
    %1139 = vst.msk [vmem:[#allocation6 + $0x2a8] sm:$0xff] %vm1121, %v1060
    %1140 = vst.msk [vmem:[#allocation6 + $0x2d0] sm:$0xff] %vm1121, %v1062
    %1141 = vst.msk [vmem:[#allocation6 + $0x2f8] sm:$0xff] %vm1121, %v1064
    %1142 = vst.msk [vmem:[#allocation6 + $0x320] sm:$0xff] %vm1121, %v1066
    %1143 = vst.msk [vmem:[#allocation6 + $0x348] sm:$0xff] %vm1121, %v1068
    %1144 = vst.msk [vmem:[#allocation6 + $0x370] sm:$0xff] %vm1121, %v1070
    %1145 = vst.msk [vmem:[#allocation6 + $0x398] sm:$0xff] %vm1121, %v1072
    %1146 = vst.msk [vmem:[#allocation6 + $0x3c0] sm:$0xff] %vm1121, %v1074
    %1147 = vst.msk [vmem:[#allocation6 + $0x3e8] sm:$0xff] %vm1121, %v1076
    %1148 = vst.msk [vmem:[#allocation6 + $0x410] sm:$0xff] %vm1121, %v1078
    %1149 = vst.msk [vmem:[#allocation6 + $0x438] sm:$0xff] %vm1121, %v1080
    %1150 = vst.msk [vmem:[#allocation6 + $0x460] sm:$0xff] %vm1121, %v1082
    %1151 = vst.msk [vmem:[#allocation6 + $0x488] sm:$0xff] %vm1121, %v1084
    %1152 = vst.msk [vmem:[#allocation6 + $0x4b0] sm:$0xff] %vm1121, %v1086
    %1153 = vst.msk [vmem:[#allocation6 + $0x4d8] sm:$0xff] %vm1121, %v1088
    %v1154 = vld [vmem:[#allocation6] sm:$0xff]
    %v1155 = vld [vmem:[#allocation6 + $0x28] sm:$0xff]
    %v1156 = vld [vmem:[#allocation6 + $0x50] sm:$0xff]
    %v1157 = vld [vmem:[#allocation6 + $0x78] sm:$0xff]
    %v1158 = vld [vmem:[#allocation6 + $0xa0] sm:$0xff]
    %v1159 = vld [vmem:[#allocation6 + $0xc8] sm:$0xff]
    %v1160 = vld [vmem:[#allocation6 + $0xf0] sm:$0xff]
    %v1161 = vld [vmem:[#allocation6 + $0x118] sm:$0xff]
    %v1162 = vld [vmem:[#allocation6 + $0x140] sm:$0xff]
    %v1163 = vld [vmem:[#allocation6 + $0x168] sm:$0xff]
    %v1164 = vld [vmem:[#allocation6 + $0x190] sm:$0xff]
    %v1165 = vld [vmem:[#allocation6 + $0x1b8] sm:$0xff]
    %v1166 = vld [vmem:[#allocation6 + $0x1e0] sm:$0xff]
    %v1167 = vld [vmem:[#allocation6 + $0x208] sm:$0xff]
    %v1168 = vld [vmem:[#allocation6 + $0x230] sm:$0xff]
    %v1169 = vld [vmem:[#allocation6 + $0x258] sm:$0xff]
    %v1170 = vld [vmem:[#allocation6 + $0x280] sm:$0xff]
    %v1171 = vld [vmem:[#allocation6 + $0x2a8] sm:$0xff]
    %v1172 = vld [vmem:[#allocation6 + $0x2d0] sm:$0xff]
    %v1173 = vld [vmem:[#allocation6 + $0x2f8] sm:$0xff]
    %v1174 = vld [vmem:[#allocation6 + $0x320] sm:$0xff]
    %v1175 = vld [vmem:[#allocation6 + $0x348] sm:$0xff]
    %v1176 = vld [vmem:[#allocation6 + $0x370] sm:$0xff]
    %v1177 = vld [vmem:[#allocation6 + $0x398] sm:$0xff]
    %v1178 = vld [vmem:[#allocation6 + $0x3c0] sm:$0xff]
    %v1179 = vld [vmem:[#allocation6 + $0x3e8] sm:$0xff]
    %v1180 = vld [vmem:[#allocation6 + $0x410] sm:$0xff]
    %v1181 = vld [vmem:[#allocation6 + $0x438] sm:$0xff]
    %v1182 = vld [vmem:[#allocation6 + $0x460] sm:$0xff]
    %v1183 = vld [vmem:[#allocation6 + $0x488] sm:$0xff]
    %v1184 = vld [vmem:[#allocation6 + $0x4b0] sm:$0xff]
    %v1185 = vld [vmem:[#allocation6 + $0x4d8] sm:$0xff]
    %v1186 = vld [vmem:[#allocation7] sm:$0xff]
    %v1187 = vld [vmem:[#allocation7 + $0x10] sm:$0x3]
    %v1188 = vld [vmem:[#allocation7 + $0x8e0] ss:$0 sm:$0xff]
    %vm1189 = vcmask 80896
    %v1191 = vsel %vm1189, %v1154, 0
    %v1194 = vsel %vm1189, %v1155, 0
    %v1197 = vsel %vm1189, %v1156, 0
    %v1200 = vsel %vm1189, %v1157, 0
    %v1203 = vsel %vm1189, %v1158, 0
    %v1206 = vsel %vm1189, %v1159, 0
    %v1209 = vsel %vm1189, %v1160, 0
    %v1212 = vsel %vm1189, %v1161, 0
    %v1215 = vsel %vm1189, %v1162, 0
    %v1218 = vsel %vm1189, %v1163, 0
    %v1221 = vsel %vm1189, %v1164, 0
    %v1224 = vsel %vm1189, %v1165, 0
    %v1227 = vsel %vm1189, %v1166, 0
    %v1230 = vsel %vm1189, %v1167, 0
    %v1233 = vsel %vm1189, %v1168, 0
    %v1236 = vsel %vm1189, %v1169, 0
    %v1239 = vsel %vm1189, %v1170, 0
    %v1242 = vsel %vm1189, %v1171, 0
    %v1245 = vsel %vm1189, %v1172, 0
    %v1248 = vsel %vm1189, %v1173, 0
    %v1251 = vsel %vm1189, %v1174, 0
    %v1254 = vsel %vm1189, %v1175, 0
    %v1257 = vsel %vm1189, %v1176, 0
    %v1260 = vsel %vm1189, %v1177, 0
    %v1263 = vsel %vm1189, %v1178, 0
    %v1266 = vsel %vm1189, %v1179, 0
    %v1269 = vsel %vm1189, %v1180, 0
    %v1272 = vsel %vm1189, %v1181, 0
    %v1275 = vsel %vm1189, %v1182, 0
    %v1278 = vsel %vm1189, %v1183, 0
    %v1281 = vsel %vm1189, %v1184, 0
    %v1284 = vsel %vm1189, %v1185, 0
    %vm1286 = vcmask 1041408
    %v1288 = vsel %vm1286, %v1187, 0
    %1290 = vmatprep.subr.mxu0 0.0
    %1291 = vmatpush1.msra.mxu0 %v1186
    %1292 = vmatprep.subr.mxu0 0.0
    %1293 = vmatpush1.msra.mxu0 %v1288
    %1294 = vmatprep.subr.mxu0 0.0
    %1295 = vmatpush1.msra.mxu0 0.0
    %1296 = vmatprep.subr.mxu0 0.0
    %1297 = vmatpush1.msra.mxu0 0.0
    %1298 = vmatprep.subr.mxu0 0.0
    %1299 = vmatpush1.msra.mxu0 0.0
    %1300 = vmatprep.subr.mxu0 0.0
    %1301 = vmatpush1.msra.mxu0 0.0
    %1302 = vmatprep.subr.mxu0 0.0
    %1303 = vmatpush1.msra.mxu0 0.0
    %1304 = vmatprep.subr.mxu0 0.0
    %1305 = vmatpush1.msra.mxu0 0.0
    %1306 = vmatprep.subr.mxu0 0.0
    %1307 = vmatpush1.msra.mxu0 0.0
    %1308 = vmatprep.subr.mxu0 0.0
    %1309 = vmatpush1.msra.mxu0 0.0
    %1310 = vmatprep.subr.mxu0 0.0
    %1311 = vmatpush1.msra.mxu0 0.0
    %1312 = vmatprep.subr.mxu0 0.0
    %1313 = vmatpush1.msra.mxu0 0.0
    %1314 = vmatprep.subr.mxu0 0.0
    %1315 = vmatpush1.msra.mxu0 0.0
    %1316 = vmatprep.subr.mxu0 0.0
    %1317 = vmatpush1.msra.mxu0 0.0
    %1318 = vmatprep.subr.mxu0 0.0
    %1319 = vmatpush1.msra.mxu0 0.0
    %1320 = vmatprep.subr.mxu0 0.0
    %1321 = vmatpush1.msra.mxu0 0.0
    %1322 = vmatprep.subr.mxu0 0.0
    %1323 = vmatpush1.msra.mxu0 0.0
    %1324 = vmatprep.subr.mxu0 0.0
    %1325 = vmatpush1.msra.mxu0 0.0
    %1326 = vmatprep.subr.mxu0 0.0
    %1327 = vmatpush1.msra.mxu0 0.0
    %1328 = vmatprep.subr.mxu0 0.0
    %1329 = vmatpush1.msra.mxu0 0.0
    %1330 = vmatprep.subr.mxu0 0.0
    %1331 = vmatpush1.msra.mxu0 0.0
    %1332 = vmatprep.subr.mxu0 0.0
    %1333 = vmatpush1.msra.mxu0 0.0
    %1334 = vmatprep.subr.mxu0 0.0
    %1335 = vmatpush1.msra.mxu0 0.0
    %1336 = vmatprep.subr.mxu0 0.0
    %1337 = vmatpush1.msra.mxu0 0.0
    %1338 = vmatprep.subr.mxu0 0.0
    %1339 = vmatpush1.msra.mxu0 0.0
    %1340 = vmatprep.subr.mxu0 0.0
    %1341 = vmatpush1.msra.mxu0 0.0
    %1342 = vmatprep.subr.mxu0 0.0
    %1343 = vmatpush1.msra.mxu0 0.0
    %1344 = vmatprep.subr.mxu0 0.0
    %1345 = vmatpush1.msra.mxu0 0.0
    %1346 = vmatprep.subr.mxu0 0.0
    %1347 = vmatpush1.msra.mxu0 0.0
    %1348 = vmatprep.subr.mxu0 0.0
    %1349 = vmatpush1.msra.mxu0 0.0
    %1350 = vmatprep.subr.mxu0 0.0
    %1351 = vmatpush1.msra.mxu0 0.0
    %1352 = vmatprep.subr.mxu0 0.0
    %1353 = vmatpush1.msra.mxu0 0.0
    %1354 = vmatprep.mubr.f32.mxu0 0.0
    %1355 = vmatmul.mubr.f32.gmra.mrb[0].mxu0 %v1191
    %v1356 = vpop.f32.mrb[0].mxu0
    %v1357 = vadd.f32 %v1188, %v1356
    %v1358 = vpop.f32.mrb[0].mxu0
    %1359 = vmatprep.mubr.f32.mxu0 0.0
    %1360 = vmatmul.mubr.f32.gmra.mrb[0].mxu0 %v1194
    %v1361 = vpop.f32.mrb[0].mxu0
    %v1362 = vadd.f32 %v1188, %v1361
    %v1363 = vpop.f32.mrb[0].mxu0
    %1364 = vmatprep.mubr.f32.mxu0 0.0
    %1365 = vmatmul.mubr.f32.gmra.mrb[0].mxu0 %v1197
    %v1366 = vpop.f32.mrb[0].mxu0
    %v1367 = vadd.f32 %v1188, %v1366
    %v1368 = vpop.f32.mrb[0].mxu0
    %1369 = vmatprep.mubr.f32.mxu0 0.0
    %1370 = vmatmul.mubr.f32.gmra.mrb[0].mxu0 %v1200
    %v1371 = vpop.f32.mrb[0].mxu0
    %v1372 = vadd.f32 %v1188, %v1371
    %v1373 = vpop.f32.mrb[0].mxu0
    %1374 = vmatprep.mubr.f32.mxu0 0.0
    %1375 = vmatmul.mubr.f32.gmra.mrb[0].mxu0 %v1203
    %v1376 = vpop.f32.mrb[0].mxu0
    %v1377 = vadd.f32 %v1188, %v1376
    %v1378 = vpop.f32.mrb[0].mxu0
    %1379 = vmatprep.mubr.f32.mxu0 0.0
    %1380 = vmatmul.mubr.f32.gmra.mrb[0].mxu0 %v1206
    %v1381 = vpop.f32.mrb[0].mxu0
    %v1382 = vadd.f32 %v1188, %v1381
    %v1383 = vpop.f32.mrb[0].mxu0
    %1384 = vmatprep.mubr.f32.mxu0 0.0
    %1385 = vmatmul.mubr.f32.gmra.mrb[0].mxu0 %v1209
    %v1386 = vpop.f32.mrb[0].mxu0
    %v1387 = vadd.f32 %v1188, %v1386
    %v1388 = vpop.f32.mrb[0].mxu0
    %1389 = vmatprep.mubr.f32.mxu0 0.0
    %1390 = vmatmul.mubr.f32.gmra.mrb[0].mxu0 %v1212
    %v1391 = vpop.f32.mrb[0].mxu0
    %v1392 = vadd.f32 %v1188, %v1391
    %v1393 = vpop.f32.mrb[0].mxu0
    %1394 = vmatprep.mubr.f32.mxu0 0.0
    %1395 = vmatmul.mubr.f32.gmra.mrb[0].mxu0 %v1215
    %v1396 = vpop.f32.mrb[0].mxu0
    %v1397 = vadd.f32 %v1188, %v1396
    %v1398 = vpop.f32.mrb[0].mxu0
    %1399 = vmatprep.mubr.f32.mxu0 0.0
    %1400 = vmatmul.mubr.f32.gmra.mrb[0].mxu0 %v1218
    %v1401 = vpop.f32.mrb[0].mxu0
    %v1402 = vadd.f32 %v1188, %v1401
    %v1403 = vpop.f32.mrb[0].mxu0
    %1404 = vmatprep.mubr.f32.mxu0 0.0
    %1405 = vmatmul.mubr.f32.gmra.mrb[0].mxu0 %v1221
    %v1406 = vpop.f32.mrb[0].mxu0
    %v1407 = vadd.f32 %v1188, %v1406
    %v1408 = vpop.f32.mrb[0].mxu0
    %1409 = vmatprep.mubr.f32.mxu0 0.0
    %1410 = vmatmul.mubr.f32.gmra.mrb[0].mxu0 %v1224
    %v1411 = vpop.f32.mrb[0].mxu0
    %v1412 = vadd.f32 %v1188, %v1411
    %v1413 = vpop.f32.mrb[0].mxu0
    %1414 = vmatprep.mubr.f32.mxu0 0.0
    %1415 = vmatmul.mubr.f32.gmra.mrb[0].mxu0 %v1227
    %v1416 = vpop.f32.mrb[0].mxu0
    %v1417 = vadd.f32 %v1188, %v1416
    %v1418 = vpop.f32.mrb[0].mxu0
    %1419 = vmatprep.mubr.f32.mxu0 0.0
    %1420 = vmatmul.mubr.f32.gmra.mrb[0].mxu0 %v1230
    %v1421 = vpop.f32.mrb[0].mxu0
    %v1422 = vadd.f32 %v1188, %v1421
    %v1423 = vpop.f32.mrb[0].mxu0
    %1424 = vmatprep.mubr.f32.mxu0 0.0
    %1425 = vmatmul.mubr.f32.gmra.mrb[0].mxu0 %v1233
    %v1426 = vpop.f32.mrb[0].mxu0
    %v1427 = vadd.f32 %v1188, %v1426
    %v1428 = vpop.f32.mrb[0].mxu0
    %1429 = vmatprep.mubr.f32.mxu0 0.0
    %1430 = vmatmul.mubr.f32.gmra.mrb[0].mxu0 %v1236
    %v1431 = vpop.f32.mrb[0].mxu0
    %v1432 = vadd.f32 %v1188, %v1431
    %v1433 = vpop.f32.mrb[0].mxu0
    %1434 = vmatprep.mubr.f32.mxu0 0.0
    %1435 = vmatmul.mubr.f32.gmra.mrb[0].mxu0 %v1239
    %v1436 = vpop.f32.mrb[0].mxu0
    %v1437 = vadd.f32 %v1188, %v1436
    %v1438 = vpop.f32.mrb[0].mxu0
    %1439 = vmatprep.mubr.f32.mxu0 0.0
    %1440 = vmatmul.mubr.f32.gmra.mrb[0].mxu0 %v1242
    %v1441 = vpop.f32.mrb[0].mxu0
    %v1442 = vadd.f32 %v1188, %v1441
    %v1443 = vpop.f32.mrb[0].mxu0
    %1444 = vmatprep.mubr.f32.mxu0 0.0
    %1445 = vmatmul.mubr.f32.gmra.mrb[0].mxu0 %v1245
    %v1446 = vpop.f32.mrb[0].mxu0
    %v1447 = vadd.f32 %v1188, %v1446
    %v1448 = vpop.f32.mrb[0].mxu0
    %1449 = vmatprep.mubr.f32.mxu0 0.0
    %1450 = vmatmul.mubr.f32.gmra.mrb[0].mxu0 %v1248
    %v1451 = vpop.f32.mrb[0].mxu0
    %v1452 = vadd.f32 %v1188, %v1451
    %v1453 = vpop.f32.mrb[0].mxu0
    %1454 = vmatprep.mubr.f32.mxu0 0.0
    %1455 = vmatmul.mubr.f32.gmra.mrb[0].mxu0 %v1251
    %v1456 = vpop.f32.mrb[0].mxu0
    %v1457 = vadd.f32 %v1188, %v1456
    %v1458 = vpop.f32.mrb[0].mxu0
    %1459 = vmatprep.mubr.f32.mxu0 0.0
    %1460 = vmatmul.mubr.f32.gmra.mrb[0].mxu0 %v1254
    %v1461 = vpop.f32.mrb[0].mxu0
    %v1462 = vadd.f32 %v1188, %v1461
    %v1463 = vpop.f32.mrb[0].mxu0
    %1464 = vmatprep.mubr.f32.mxu0 0.0
    %1465 = vmatmul.mubr.f32.gmra.mrb[0].mxu0 %v1257
    %v1466 = vpop.f32.mrb[0].mxu0
    %v1467 = vadd.f32 %v1188, %v1466
    %v1468 = vpop.f32.mrb[0].mxu0
    %1469 = vmatprep.mubr.f32.mxu0 0.0
    %1470 = vmatmul.mubr.f32.gmra.mrb[0].mxu0 %v1260
    %v1471 = vpop.f32.mrb[0].mxu0
    %v1472 = vadd.f32 %v1188, %v1471
    %v1473 = vpop.f32.mrb[0].mxu0
    %1474 = vmatprep.mubr.f32.mxu0 0.0
    %1475 = vmatmul.mubr.f32.gmra.mrb[0].mxu0 %v1263
    %v1476 = vpop.f32.mrb[0].mxu0
    %v1477 = vadd.f32 %v1188, %v1476
    %v1478 = vpop.f32.mrb[0].mxu0
    %1479 = vmatprep.mubr.f32.mxu0 0.0
    %1480 = vmatmul.mubr.f32.gmra.mrb[0].mxu0 %v1266
    %v1481 = vpop.f32.mrb[0].mxu0
    %v1482 = vadd.f32 %v1188, %v1481
    %v1483 = vpop.f32.mrb[0].mxu0
    %1484 = vmatprep.mubr.f32.mxu0 0.0
    %1485 = vmatmul.mubr.f32.gmra.mrb[0].mxu0 %v1269
    %v1486 = vpop.f32.mrb[0].mxu0
    %v1487 = vadd.f32 %v1188, %v1486
    %v1488 = vpop.f32.mrb[0].mxu0
    %1489 = vmatprep.mubr.f32.mxu0 0.0
    %1490 = vmatmul.mubr.f32.gmra.mrb[0].mxu0 %v1272
    %v1491 = vpop.f32.mrb[0].mxu0
    %v1492 = vadd.f32 %v1188, %v1491
    %v1493 = vpop.f32.mrb[0].mxu0
    %1494 = vmatprep.mubr.f32.mxu0 0.0
    %1495 = vmatmul.mubr.f32.gmra.mrb[0].mxu0 %v1275
    %v1496 = vpop.f32.mrb[0].mxu0
    %v1497 = vadd.f32 %v1188, %v1496
    %v1498 = vpop.f32.mrb[0].mxu0
    %1499 = vmatprep.mubr.f32.mxu0 0.0
    %1500 = vmatmul.mubr.f32.gmra.mrb[0].mxu0 %v1278
    %v1501 = vpop.f32.mrb[0].mxu0
    %v1502 = vadd.f32 %v1188, %v1501
    %v1503 = vpop.f32.mrb[0].mxu0
    %1504 = vmatprep.mubr.f32.mxu0 0.0
    %1505 = vmatmul.mubr.f32.gmra.mrb[0].mxu0 %v1281
    %v1506 = vpop.f32.mrb[0].mxu0
    %v1507 = vadd.f32 %v1188, %v1506
    %v1508 = vpop.f32.mrb[0].mxu0
    %1509 = vmatprep.mubr.f32.mxu0 0.0
    %1510 = vmatmul.mubr.f32.gmra.mrb[0].mxu0 %v1284
    %v1511 = vpop.f32.mrb[0].mxu0
    %v1512 = vadd.f32 %v1188, %v1511
    %v1513 = vpop.f32.mrb[0].mxu0
    %1514 = vdwg.mxu0
    %vm1515 = vcmask 261120
    %v1516 = vsel %vm1515, %v1357, 0.0
    %v1517 = vsel %vm1515, %v1362, 0.0
    %v1518 = vadd.f32 %v1516, %v1517
    %v1519 = vsel %vm1515, %v1367, 0.0
    %v1520 = vadd.f32 %v1518, %v1519
    %v1521 = vsel %vm1515, %v1372, 0.0
    %v1522 = vadd.f32 %v1520, %v1521
    %v1523 = vsel %vm1515, %v1377, 0.0
    %v1524 = vadd.f32 %v1522, %v1523
    %v1525 = vsel %vm1515, %v1382, 0.0
    %v1526 = vadd.f32 %v1524, %v1525
    %v1527 = vsel %vm1515, %v1387, 0.0
    %v1528 = vadd.f32 %v1526, %v1527
    %v1529 = vsel %vm1515, %v1392, 0.0
    %v1530 = vadd.f32 %v1528, %v1529
    %v1531 = vsel %vm1515, %v1397, 0.0
    %v1532 = vadd.f32 %v1530, %v1531
    %v1533 = vsel %vm1515, %v1402, 0.0
    %v1534 = vadd.f32 %v1532, %v1533
    %v1535 = vsel %vm1515, %v1407, 0.0
    %v1536 = vadd.f32 %v1534, %v1535
    %v1537 = vsel %vm1515, %v1412, 0.0
    %v1538 = vadd.f32 %v1536, %v1537
    %v1539 = vsel %vm1515, %v1417, 0.0
    %v1540 = vadd.f32 %v1538, %v1539
    %v1541 = vsel %vm1515, %v1422, 0.0
    %v1542 = vadd.f32 %v1540, %v1541
    %v1543 = vsel %vm1515, %v1427, 0.0
    %v1544 = vadd.f32 %v1542, %v1543
    %v1545 = vsel %vm1515, %v1432, 0.0
    %v1546 = vadd.f32 %v1544, %v1545
    %v1547 = vsel %vm1515, %v1437, 0.0
    %v1548 = vadd.f32 %v1546, %v1547
    %v1549 = vsel %vm1515, %v1442, 0.0
    %v1550 = vadd.f32 %v1548, %v1549
    %v1551 = vsel %vm1515, %v1447, 0.0
    %v1552 = vadd.f32 %v1550, %v1551
    %v1553 = vsel %vm1515, %v1452, 0.0
    %v1554 = vadd.f32 %v1552, %v1553
    %v1555 = vsel %vm1515, %v1457, 0.0
    %v1556 = vadd.f32 %v1554, %v1555
    %v1557 = vsel %vm1515, %v1462, 0.0
    %v1558 = vadd.f32 %v1556, %v1557
    %v1559 = vsel %vm1515, %v1467, 0.0
    %v1560 = vadd.f32 %v1558, %v1559
    %v1561 = vsel %vm1515, %v1472, 0.0
    %v1562 = vadd.f32 %v1560, %v1561
    %v1563 = vsel %vm1515, %v1477, 0.0
    %v1564 = vadd.f32 %v1562, %v1563
    %v1565 = vsel %vm1515, %v1482, 0.0
    %v1566 = vadd.f32 %v1564, %v1565
    %v1567 = vsel %vm1515, %v1487, 0.0
    %v1568 = vadd.f32 %v1566, %v1567
    %v1569 = vsel %vm1515, %v1492, 0.0
    %v1570 = vadd.f32 %v1568, %v1569
    %v1571 = vsel %vm1515, %v1497, 0.0
    %v1572 = vadd.f32 %v1570, %v1571
    %v1573 = vsel %vm1515, %v1502, 0.0
    %v1574 = vadd.f32 %v1572, %v1573
    %v1575 = vsel %vm1515, %v1507, 0.0
    %v1576 = vadd.f32 %v1574, %v1575
    %v1577 = vsel %vm1515, %v1512, 0.0
    %v1578 = vadd.f32 %v1576, %v1577
    %v1579 = vrot.slane %v1578, 4
    %v1580 = vadd.f32 %v1578, %v1579
    %v1581 = vrot.slane %v1580, 2
    %v1582 = vadd.f32 %v1580, %v1581
    %v1583 = vrot.slane %v1582, 1
    %v1584 = vadd.f32 %v1582, %v1583
    %v1585 = vmul.f32 %v1584, 0.00390625
    %v1586 = vsub.f32 %v1357, %v1585
    %v1587 = vsub.f32 %v1362, %v1585
    %v1588 = vsub.f32 %v1367, %v1585
    %v1589 = vsub.f32 %v1372, %v1585
    %v1590 = vsub.f32 %v1377, %v1585
    %v1591 = vsub.f32 %v1382, %v1585
    %v1592 = vsub.f32 %v1387, %v1585
    %v1593 = vsub.f32 %v1392, %v1585
    %v1594 = vsub.f32 %v1397, %v1585
    %v1595 = vsub.f32 %v1402, %v1585
    %v1596 = vsub.f32 %v1407, %v1585
    %v1597 = vsub.f32 %v1412, %v1585
    %v1598 = vsub.f32 %v1417, %v1585
    %v1599 = vsub.f32 %v1422, %v1585
    %v1600 = vsub.f32 %v1427, %v1585
    %v1601 = vsub.f32 %v1432, %v1585
    %v1602 = vsub.f32 %v1437, %v1585
    %v1603 = vsub.f32 %v1442, %v1585
    %v1604 = vsub.f32 %v1447, %v1585
    %v1605 = vsub.f32 %v1452, %v1585
    %v1606 = vsub.f32 %v1457, %v1585
    %v1607 = vsub.f32 %v1462, %v1585
    %v1608 = vsub.f32 %v1467, %v1585
    %v1609 = vsub.f32 %v1472, %v1585
    %v1610 = vsub.f32 %v1477, %v1585
    %v1611 = vsub.f32 %v1482, %v1585
    %v1612 = vsub.f32 %v1487, %v1585
    %v1613 = vsub.f32 %v1492, %v1585
    %v1614 = vsub.f32 %v1497, %v1585
    %v1615 = vsub.f32 %v1502, %v1585
    %v1616 = vsub.f32 %v1507, %v1585
    %v1617 = vsub.f32 %v1512, %v1585
    %v1618 = vmul.f32 %v1586, %v1586
    %v1619 = vmul.f32 %v1587, %v1587
    %v1620 = vmul.f32 %v1588, %v1588
    %v1621 = vmul.f32 %v1589, %v1589
    %v1622 = vmul.f32 %v1590, %v1590
    %v1623 = vmul.f32 %v1591, %v1591
    %v1624 = vmul.f32 %v1592, %v1592
    %v1625 = vmul.f32 %v1593, %v1593
    %v1626 = vmul.f32 %v1594, %v1594
    %v1627 = vmul.f32 %v1595, %v1595
    %v1628 = vmul.f32 %v1596, %v1596
    %v1629 = vmul.f32 %v1597, %v1597
    %v1630 = vmul.f32 %v1598, %v1598
    %v1631 = vmul.f32 %v1599, %v1599
    %v1632 = vmul.f32 %v1600, %v1600
    %v1633 = vmul.f32 %v1601, %v1601
    %v1634 = vmul.f32 %v1602, %v1602
    %v1635 = vmul.f32 %v1603, %v1603
    %v1636 = vmul.f32 %v1604, %v1604
    %v1637 = vmul.f32 %v1605, %v1605
    %v1638 = vmul.f32 %v1606, %v1606
    %v1639 = vmul.f32 %v1607, %v1607
    %v1640 = vmul.f32 %v1608, %v1608
    %v1641 = vmul.f32 %v1609, %v1609
    %v1642 = vmul.f32 %v1610, %v1610
    %v1643 = vmul.f32 %v1611, %v1611
    %v1644 = vmul.f32 %v1612, %v1612
    %v1645 = vmul.f32 %v1613, %v1613
    %v1646 = vmul.f32 %v1614, %v1614
    %v1647 = vmul.f32 %v1615, %v1615
    %v1648 = vmul.f32 %v1616, %v1616
    %v1649 = vmul.f32 %v1617, %v1617
    %v1650 = vsel %vm1515, %v1618, 0.0
    %v1651 = vsel %vm1515, %v1619, 0.0
    %v1652 = vadd.f32 %v1650, %v1651
    %v1653 = vsel %vm1515, %v1620, 0.0
    %v1654 = vadd.f32 %v1652, %v1653
    %v1655 = vsel %vm1515, %v1621, 0.0
    %v1656 = vadd.f32 %v1654, %v1655
    %v1657 = vsel %vm1515, %v1622, 0.0
    %v1658 = vadd.f32 %v1656, %v1657
    %v1659 = vsel %vm1515, %v1623, 0.0
    %v1660 = vadd.f32 %v1658, %v1659
    %v1661 = vsel %vm1515, %v1624, 0.0
    %v1662 = vadd.f32 %v1660, %v1661
    %v1663 = vsel %vm1515, %v1625, 0.0
    %v1664 = vadd.f32 %v1662, %v1663
    %v1665 = vsel %vm1515, %v1626, 0.0
    %v1666 = vadd.f32 %v1664, %v1665
    %v1667 = vsel %vm1515, %v1627, 0.0
    %v1668 = vadd.f32 %v1666, %v1667
    %v1669 = vsel %vm1515, %v1628, 0.0
    %v1670 = vadd.f32 %v1668, %v1669
    %v1671 = vsel %vm1515, %v1629, 0.0
    %v1672 = vadd.f32 %v1670, %v1671
    %v1673 = vsel %vm1515, %v1630, 0.0
    %v1674 = vadd.f32 %v1672, %v1673
    %v1675 = vsel %vm1515, %v1631, 0.0
    %v1676 = vadd.f32 %v1674, %v1675
    %v1677 = vsel %vm1515, %v1632, 0.0
    %v1678 = vadd.f32 %v1676, %v1677
    %v1679 = vsel %vm1515, %v1633, 0.0
    %v1680 = vadd.f32 %v1678, %v1679
    %v1681 = vsel %vm1515, %v1634, 0.0
    %v1682 = vadd.f32 %v1680, %v1681
    %v1683 = vsel %vm1515, %v1635, 0.0
    %v1684 = vadd.f32 %v1682, %v1683
    %v1685 = vsel %vm1515, %v1636, 0.0
    %v1686 = vadd.f32 %v1684, %v1685
    %v1687 = vsel %vm1515, %v1637, 0.0
    %v1688 = vadd.f32 %v1686, %v1687
    %v1689 = vsel %vm1515, %v1638, 0.0
    %v1690 = vadd.f32 %v1688, %v1689
    %v1691 = vsel %vm1515, %v1639, 0.0
    %v1692 = vadd.f32 %v1690, %v1691
    %v1693 = vsel %vm1515, %v1640, 0.0
    %v1694 = vadd.f32 %v1692, %v1693
    %v1695 = vsel %vm1515, %v1641, 0.0
    %v1696 = vadd.f32 %v1694, %v1695
    %v1697 = vsel %vm1515, %v1642, 0.0
    %v1698 = vadd.f32 %v1696, %v1697
    %v1699 = vsel %vm1515, %v1643, 0.0
    %v1700 = vadd.f32 %v1698, %v1699
    %v1701 = vsel %vm1515, %v1644, 0.0
    %v1702 = vadd.f32 %v1700, %v1701
    %v1703 = vsel %vm1515, %v1645, 0.0
    %v1704 = vadd.f32 %v1702, %v1703
    %v1705 = vsel %vm1515, %v1646, 0.0
    %v1706 = vadd.f32 %v1704, %v1705
    %v1707 = vsel %vm1515, %v1647, 0.0
    %v1708 = vadd.f32 %v1706, %v1707
    %v1709 = vsel %vm1515, %v1648, 0.0
    %v1710 = vadd.f32 %v1708, %v1709
    %v1711 = vsel %vm1515, %v1649, 0.0
    %v1712 = vadd.f32 %v1710, %v1711
    %v1713 = vrot.slane %v1712, 4
    %v1714 = vadd.f32 %v1712, %v1713
    %v1715 = vrot.slane %v1714, 2
    %v1716 = vadd.f32 %v1714, %v1715
    %v1717 = vrot.slane %v1716, 1
    %v1718 = vadd.f32 %v1716, %v1717
    %v1719 = vmul.f32 %v1718, 0.00390625
    %v1720 = vadd.f32 %v1719, 1e-05
    %v1721 = vrsqrt.pop %v1720
    %v1722 = vmul.f32 %v1586, %v1721
    %v1723 = vmul.f32 %v1587, %v1721
    %v1724 = vmul.f32 %v1588, %v1721
    %v1725 = vmul.f32 %v1589, %v1721
    %v1726 = vmul.f32 %v1590, %v1721
    %v1727 = vmul.f32 %v1591, %v1721
    %v1728 = vmul.f32 %v1592, %v1721
    %v1729 = vmul.f32 %v1593, %v1721
    %v1730 = vmul.f32 %v1594, %v1721
    %v1731 = vmul.f32 %v1595, %v1721
    %v1732 = vmul.f32 %v1596, %v1721
    %v1733 = vmul.f32 %v1597, %v1721
    %v1734 = vmul.f32 %v1598, %v1721
    %v1735 = vmul.f32 %v1599, %v1721
    %v1736 = vmul.f32 %v1600, %v1721
    %v1737 = vmul.f32 %v1601, %v1721
    %v1738 = vmul.f32 %v1602, %v1721
    %v1739 = vmul.f32 %v1603, %v1721
    %v1740 = vmul.f32 %v1604, %v1721
    %v1741 = vmul.f32 %v1605, %v1721
    %v1742 = vmul.f32 %v1606, %v1721
    %v1743 = vmul.f32 %v1607, %v1721
    %v1744 = vmul.f32 %v1608, %v1721
    %v1745 = vmul.f32 %v1609, %v1721
    %v1746 = vmul.f32 %v1610, %v1721
    %v1747 = vmul.f32 %v1611, %v1721
    %v1748 = vmul.f32 %v1612, %v1721
    %v1749 = vmul.f32 %v1613, %v1721
    %v1750 = vmul.f32 %v1614, %v1721
    %v1751 = vmul.f32 %v1615, %v1721
    %v1752 = vmul.f32 %v1616, %v1721
    %v1753 = vmul.f32 %v1617, %v1721
    %v1754 = vld [vmem:[#allocation7 + $0x8e1] ss:$0 sm:$0xff]
    %v1755 = vld [vmem:[#allocation7 + $0x8e2] ss:$0 sm:$0xff]
    %v1756 = vmul.f32 %v1754, %v1722
    %v1757 = vmul.f32 %v1754, %v1723
    %v1758 = vmul.f32 %v1754, %v1724
    %v1759 = vmul.f32 %v1754, %v1725
    %v1760 = vmul.f32 %v1754, %v1726
    %v1761 = vmul.f32 %v1754, %v1727
    %v1762 = vmul.f32 %v1754, %v1728
    %v1763 = vmul.f32 %v1754, %v1729
    %v1764 = vmul.f32 %v1754, %v1730
    %v1765 = vmul.f32 %v1754, %v1731
    %v1766 = vmul.f32 %v1754, %v1732
    %v1767 = vmul.f32 %v1754, %v1733
    %v1768 = vmul.f32 %v1754, %v1734
    %v1769 = vmul.f32 %v1754, %v1735
    %v1770 = vmul.f32 %v1754, %v1736
    %v1771 = vmul.f32 %v1754, %v1737
    %v1772 = vmul.f32 %v1754, %v1738
    %v1773 = vmul.f32 %v1754, %v1739
    %v1774 = vmul.f32 %v1754, %v1740
    %v1775 = vmul.f32 %v1754, %v1741
    %v1776 = vmul.f32 %v1754, %v1742
    %v1777 = vmul.f32 %v1754, %v1743
    %v1778 = vmul.f32 %v1754, %v1744
    %v1779 = vmul.f32 %v1754, %v1745
    %v1780 = vmul.f32 %v1754, %v1746
    %v1781 = vmul.f32 %v1754, %v1747
    %v1782 = vmul.f32 %v1754, %v1748
    %v1783 = vmul.f32 %v1754, %v1749
    %v1784 = vmul.f32 %v1754, %v1750
    %v1785 = vmul.f32 %v1754, %v1751
    %v1786 = vmul.f32 %v1754, %v1752
    %v1787 = vmul.f32 %v1754, %v1753
    %v1788 = vadd.f32 %v1756, %v1755
    %v1789 = vadd.f32 %v1757, %v1755
    %v1790 = vadd.f32 %v1758, %v1755
    %v1791 = vadd.f32 %v1759, %v1755
    %v1792 = vadd.f32 %v1760, %v1755
    %v1793 = vadd.f32 %v1761, %v1755
    %v1794 = vadd.f32 %v1762, %v1755
    %v1795 = vadd.f32 %v1763, %v1755
    %v1796 = vadd.f32 %v1764, %v1755
    %v1797 = vadd.f32 %v1765, %v1755
    %v1798 = vadd.f32 %v1766, %v1755
    %v1799 = vadd.f32 %v1767, %v1755
    %v1800 = vadd.f32 %v1768, %v1755
    %v1801 = vadd.f32 %v1769, %v1755
    %v1802 = vadd.f32 %v1770, %v1755
    %v1803 = vadd.f32 %v1771, %v1755
    %v1804 = vadd.f32 %v1772, %v1755
    %v1805 = vadd.f32 %v1773, %v1755
    %v1806 = vadd.f32 %v1774, %v1755
    %v1807 = vadd.f32 %v1775, %v1755
    %v1808 = vadd.f32 %v1776, %v1755
    %v1809 = vadd.f32 %v1777, %v1755
    %v1810 = vadd.f32 %v1778, %v1755
    %v1811 = vadd.f32 %v1779, %v1755
    %v1812 = vadd.f32 %v1780, %v1755
    %v1813 = vadd.f32 %v1781, %v1755
    %v1814 = vadd.f32 %v1782, %v1755
    %v1815 = vadd.f32 %v1783, %v1755
    %v1816 = vadd.f32 %v1784, %v1755
    %v1817 = vadd.f32 %v1785, %v1755
    %v1818 = vadd.f32 %v1786, %v1755
    %v1819 = vadd.f32 %v1787, %v1755
    %v1820 = vtanh.pop %v1788
    %v1821 = vtanh.pop %v1789
    %v1822 = vtanh.pop %v1790
    %v1823 = vtanh.pop %v1791
    %v1824 = vtanh.pop %v1792
    %v1825 = vtanh.pop %v1793
    %v1826 = vtanh.pop %v1794
    %v1827 = vtanh.pop %v1795
    %v1828 = vtanh.pop %v1796
    %v1829 = vtanh.pop %v1797
    %v1830 = vtanh.pop %v1798
    %v1831 = vtanh.pop %v1799
    %v1832 = vtanh.pop %v1800
    %v1833 = vtanh.pop %v1801
    %v1834 = vtanh.pop %v1802
    %v1835 = vtanh.pop %v1803
    %v1836 = vtanh.pop %v1804
    %v1837 = vtanh.pop %v1805
    %v1838 = vtanh.pop %v1806
    %v1839 = vtanh.pop %v1807
    %v1840 = vtanh.pop %v1808
    %v1841 = vtanh.pop %v1809
    %v1842 = vtanh.pop %v1810
    %v1843 = vtanh.pop %v1811
    %v1844 = vtanh.pop %v1812
    %v1845 = vtanh.pop %v1813
    %v1846 = vtanh.pop %v1814
    %v1847 = vtanh.pop %v1815
    %v1848 = vtanh.pop %v1816
    %v1849 = vtanh.pop %v1817
    %v1850 = vtanh.pop %v1818
    %v1851 = vtanh.pop %v1819
    %vm1852 = vcmask 254976
    %1853 = vst.msk [vmem:[#allocation3] sm:$0x3] %vm1852, 0.0
    %1854 = vst.msk [vmem:[#allocation3 + $0x88] sm:$0x3] %vm1852, 0.0
    %1855 = vst.msk [vmem:[#allocation3 + $0x82] sm:$0x3] %vm1852, 0.0
    %1856 = vst.msk [vmem:[#allocation3 + $0x10a] sm:$0x3] %vm1852, 0.0
    %1857 = vst.msk [vmem:[#allocation3 + $0x2] sm:$0xff] %vm1515, %v1820
    %1858 = vst.msk [vmem:[#allocation3 + $0xa] sm:$0xff] %vm1515, %v1821
    %1859 = vst.msk [vmem:[#allocation3 + $0x12] sm:$0xff] %vm1515, %v1822
    %1860 = vst.msk [vmem:[#allocation3 + $0x1a] sm:$0xff] %vm1515, %v1823
    %1861 = vst.msk [vmem:[#allocation3 + $0x22] sm:$0xff] %vm1515, %v1824
    %1862 = vst.msk [vmem:[#allocation3 + $0x2a] sm:$0xff] %vm1515, %v1825
    %1863 = vst.msk [vmem:[#allocation3 + $0x32] sm:$0xff] %vm1515, %v1826
    %1864 = vst.msk [vmem:[#allocation3 + $0x3a] sm:$0xff] %vm1515, %v1827
    %1865 = vst.msk [vmem:[#allocation3 + $0x42] sm:$0xff] %vm1515, %v1828
    %1866 = vst.msk [vmem:[#allocation3 + $0x4a] sm:$0xff] %vm1515, %v1829
    %1867 = vst.msk [vmem:[#allocation3 + $0x52] sm:$0xff] %vm1515, %v1830
    %1868 = vst.msk [vmem:[#allocation3 + $0x5a] sm:$0xff] %vm1515, %v1831
    %1869 = vst.msk [vmem:[#allocation3 + $0x62] sm:$0xff] %vm1515, %v1832
    %1870 = vst.msk [vmem:[#allocation3 + $0x6a] sm:$0xff] %vm1515, %v1833
    %1871 = vst.msk [vmem:[#allocation3 + $0x72] sm:$0xff] %vm1515, %v1834
    %1872 = vst.msk [vmem:[#allocation3 + $0x7a] sm:$0xff] %vm1515, %v1835
    %1873 = vst.msk [vmem:[#allocation3 + $0x8a] sm:$0xff] %vm1515, %v1836
    %1874 = vst.msk [vmem:[#allocation3 + $0x92] sm:$0xff] %vm1515, %v1837
    %1875 = vst.msk [vmem:[#allocation3 + $0x9a] sm:$0xff] %vm1515, %v1838
    %1876 = vst.msk [vmem:[#allocation3 + $0xa2] sm:$0xff] %vm1515, %v1839
    %1877 = vst.msk [vmem:[#allocation3 + $0xaa] sm:$0xff] %vm1515, %v1840
    %1878 = vst.msk [vmem:[#allocation3 + $0xb2] sm:$0xff] %vm1515, %v1841
    %1879 = vst.msk [vmem:[#allocation3 + $0xba] sm:$0xff] %vm1515, %v1842
    %1880 = vst.msk [vmem:[#allocation3 + $0xc2] sm:$0xff] %vm1515, %v1843
    %1881 = vst.msk [vmem:[#allocation3 + $0xca] sm:$0xff] %vm1515, %v1844
    %1882 = vst.msk [vmem:[#allocation3 + $0xd2] sm:$0xff] %vm1515, %v1845
    %1883 = vst.msk [vmem:[#allocation3 + $0xda] sm:$0xff] %vm1515, %v1846
    %1884 = vst.msk [vmem:[#allocation3 + $0xe2] sm:$0xff] %vm1515, %v1847
    %1885 = vst.msk [vmem:[#allocation3 + $0xea] sm:$0xff] %vm1515, %v1848
    %1886 = vst.msk [vmem:[#allocation3 + $0xf2] sm:$0xff] %vm1515, %v1849
    %1887 = vst.msk [vmem:[#allocation3 + $0xfa] sm:$0xff] %vm1515, %v1850
    %1888 = vst.msk [vmem:[#allocation3 + $0x102] sm:$0xff] %vm1515, %v1851
    %v1889 = vld [vmem:[#allocation3] ss:$2 sm:$0xff]
    %s1890 = scalar_lea.vmem [#allocation3], 16
    %v1891 = vld [vmem:[%s1890] ss:$2 sm:$0xff]
    %s1892 = scalar_lea.vmem [#allocation3], 32
    %v1893 = vld [vmem:[%s1892] ss:$2 sm:$0xff]
    %s1894 = scalar_lea.vmem [#allocation3], 48
    %v1895 = vld [vmem:[%s1894] ss:$2 sm:$0xff]
    %s1896 = scalar_lea.vmem [#allocation3], 64
    %v1897 = vld [vmem:[%s1896] ss:$2 sm:$0xff]
    %s1898 = scalar_lea.vmem [#allocation3], 80
    %v1899 = vld [vmem:[%s1898] ss:$2 sm:$0xff]
    %s1900 = scalar_lea.vmem [#allocation3], 96
    %v1901 = vld [vmem:[%s1900] ss:$2 sm:$0xff]
    %s1902 = scalar_lea.vmem [#allocation3], 112
    %v1903 = vld [vmem:[%s1902] ss:$2 sm:$0xff]
    %s1904 = scalar_lea.vmem [#allocation3], 136
    %v1905 = vld [vmem:[%s1904] ss:$2 sm:$0xff]
    %s1906 = scalar_lea.vmem [#allocation3], 152
    %v1907 = vld [vmem:[%s1906] ss:$2 sm:$0xff]
    %s1908 = scalar_lea.vmem [#allocation3], 168
    %v1909 = vld [vmem:[%s1908] ss:$2 sm:$0xff]
    %s1910 = scalar_lea.vmem [#allocation3], 184
    %v1911 = vld [vmem:[%s1910] ss:$2 sm:$0xff]
    %s1912 = scalar_lea.vmem [#allocation3], 200
    %v1913 = vld [vmem:[%s1912] ss:$2 sm:$0xff]
    %s1914 = scalar_lea.vmem [#allocation3], 216
    %v1915 = vld [vmem:[%s1914] ss:$2 sm:$0xff]
    %s1916 = scalar_lea.vmem [#allocation3], 232
    %v1917 = vld [vmem:[%s1916] ss:$2 sm:$0xff]
    %s1918 = scalar_lea.vmem [#allocation3], 248
    %v1919 = vld [vmem:[%s1918] ss:$2 sm:$0xff]
    %1920 = vst.msk [vmem:[#allocation6] sm:$0xff] %vm1515, %v1889
    %1921 = vst.msk [vmem:[#allocation6 + $0x28] sm:$0xff] %vm1515, %v1891
    %1922 = vst.msk [vmem:[#allocation6 + $0x50] sm:$0xff] %vm1515, %v1893
    %1923 = vst.msk [vmem:[#allocation6 + $0x78] sm:$0xff] %vm1515, %v1895
    %1924 = vst.msk [vmem:[#allocation6 + $0xa0] sm:$0xff] %vm1515, %v1897
    %1925 = vst.msk [vmem:[#allocation6 + $0xc8] sm:$0xff] %vm1515, %v1899
    %1926 = vst.msk [vmem:[#allocation6 + $0xf0] sm:$0xff] %vm1515, %v1901
    %1927 = vst.msk [vmem:[#allocation6 + $0x118] sm:$0xff] %vm1515, %v1903
    %1928 = vst.msk [vmem:[#allocation6 + $0x140] sm:$0xff] %vm1515, %v1905
    %1929 = vst.msk [vmem:[#allocation6 + $0x168] sm:$0xff] %vm1515, %v1907
    %1930 = vst.msk [vmem:[#allocation6 + $0x190] sm:$0xff] %vm1515, %v1909
    %1931 = vst.msk [vmem:[#allocation6 + $0x1b8] sm:$0xff] %vm1515, %v1911
    %1932 = vst.msk [vmem:[#allocation6 + $0x1e0] sm:$0xff] %vm1515, %v1913
    %1933 = vst.msk [vmem:[#allocation6 + $0x208] sm:$0xff] %vm1515, %v1915
    %1934 = vst.msk [vmem:[#allocation6 + $0x230] sm:$0xff] %vm1515, %v1917
    %1935 = vst.msk [vmem:[#allocation6 + $0x258] sm:$0xff] %vm1515, %v1919
    %s1936 = scalar_lea.vmem [#allocation3], 1
    %v1937 = vld [vmem:[%s1936] ss:$2 sm:$0xff]
    %s1938 = scalar_lea.vmem [#allocation3], 17
    %v1939 = vld [vmem:[%s1938] ss:$2 sm:$0xff]
    %s1940 = scalar_lea.vmem [#allocation3], 33
    %v1941 = vld [vmem:[%s1940] ss:$2 sm:$0xff]
    %s1942 = scalar_lea.vmem [#allocation3], 49
    %v1943 = vld [vmem:[%s1942] ss:$2 sm:$0xff]
    %s1944 = scalar_lea.vmem [#allocation3], 65
    %v1945 = vld [vmem:[%s1944] ss:$2 sm:$0xff]
    %s1946 = scalar_lea.vmem [#allocation3], 81
    %v1947 = vld [vmem:[%s1946] ss:$2 sm:$0xff]
    %s1948 = scalar_lea.vmem [#allocation3], 97
    %v1949 = vld [vmem:[%s1948] ss:$2 sm:$0xff]
    %s1950 = scalar_lea.vmem [#allocation3], 113
    %v1951 = vld [vmem:[%s1950] ss:$2 sm:$0xff]
    %s1952 = scalar_lea.vmem [#allocation3], 137
    %v1953 = vld [vmem:[%s1952] ss:$2 sm:$0xff]
    %s1954 = scalar_lea.vmem [#allocation3], 153
    %v1955 = vld [vmem:[%s1954] ss:$2 sm:$0xff]
    %s1956 = scalar_lea.vmem [#allocation3], 169
    %v1957 = vld [vmem:[%s1956] ss:$2 sm:$0xff]
    %s1958 = scalar_lea.vmem [#allocation3], 185
    %v1959 = vld [vmem:[%s1958] ss:$2 sm:$0xff]
    %s1960 = scalar_lea.vmem [#allocation3], 201
    %v1961 = vld [vmem:[%s1960] ss:$2 sm:$0xff]
    %s1962 = scalar_lea.vmem [#allocation3], 217
    %v1963 = vld [vmem:[%s1962] ss:$2 sm:$0xff]
    %s1964 = scalar_lea.vmem [#allocation3], 233
    %v1965 = vld [vmem:[%s1964] ss:$2 sm:$0xff]
    %s1966 = scalar_lea.vmem [#allocation3], 249
    %v1967 = vld [vmem:[%s1966] ss:$2 sm:$0xff]
    %1984 = vrot.lane.b32.xlu0 %v1937, 32
    %v1985 = vpop.permute.xlu0 %1984
    %1986 = vrot.lane.b32.xlu0 %v1939, 32
    %v1987 = vpop.permute.xlu0 %1986
    %1988 = vrot.lane.b32.xlu0 %v1941, 32
    %v1989 = vpop.permute.xlu0 %1988
    %1990 = vrot.lane.b32.xlu0 %v1943, 32
    %v1991 = vpop.permute.xlu0 %1990
    %1992 = vrot.lane.b32.xlu0 %v1945, 32
    %v1993 = vpop.permute.xlu0 %1992
    %1994 = vrot.lane.b32.xlu0 %v1947, 32
    %v1995 = vpop.permute.xlu0 %1994
    %1996 = vrot.lane.b32.xlu0 %v1949, 32
    %v1997 = vpop.permute.xlu0 %1996
    %1998 = vrot.lane.b32.xlu0 %v1951, 32
    %v1999 = vpop.permute.xlu0 %1998
    %2000 = vrot.lane.b32.xlu0 %v1953, 32
    %v2001 = vpop.permute.xlu0 %2000
    %2002 = vrot.lane.b32.xlu0 %v1955, 32
    %v2003 = vpop.permute.xlu0 %2002
    %2004 = vrot.lane.b32.xlu0 %v1957, 32
    %v2005 = vpop.permute.xlu0 %2004
    %2006 = vrot.lane.b32.xlu0 %v1959, 32
    %v2007 = vpop.permute.xlu0 %2006
    %2008 = vrot.lane.b32.xlu0 %v1961, 32
    %v2009 = vpop.permute.xlu0 %2008
    %2010 = vrot.lane.b32.xlu0 %v1963, 32
    %v2011 = vpop.permute.xlu0 %2010
    %2012 = vrot.lane.b32.xlu0 %v1965, 32
    %v2013 = vpop.permute.xlu0 %2012
    %2014 = vrot.lane.b32.xlu0 %v1967, 32
    %v2015 = vpop.permute.xlu0 %2014
    %vm2032 = vcmask 523520
    %2033 = vst.msk [vmem:[#allocation6] sm:$0xff] %vm2032, %v1985
    %2034 = vst.msk [vmem:[#allocation6 + $0x28] sm:$0xff] %vm2032, %v1987
    %2035 = vst.msk [vmem:[#allocation6 + $0x50] sm:$0xff] %vm2032, %v1989
    %2036 = vst.msk [vmem:[#allocation6 + $0x78] sm:$0xff] %vm2032, %v1991
    %2037 = vst.msk [vmem:[#allocation6 + $0xa0] sm:$0xff] %vm2032, %v1993
    %2038 = vst.msk [vmem:[#allocation6 + $0xc8] sm:$0xff] %vm2032, %v1995
    %2039 = vst.msk [vmem:[#allocation6 + $0xf0] sm:$0xff] %vm2032, %v1997
    %2040 = vst.msk [vmem:[#allocation6 + $0x118] sm:$0xff] %vm2032, %v1999
    %2041 = vst.msk [vmem:[#allocation6 + $0x140] sm:$0xff] %vm2032, %v2001
    %2042 = vst.msk [vmem:[#allocation6 + $0x168] sm:$0xff] %vm2032, %v2003
    %2043 = vst.msk [vmem:[#allocation6 + $0x190] sm:$0xff] %vm2032, %v2005
    %2044 = vst.msk [vmem:[#allocation6 + $0x1b8] sm:$0xff] %vm2032, %v2007
    %2045 = vst.msk [vmem:[#allocation6 + $0x1e0] sm:$0xff] %vm2032, %v2009
    %2046 = vst.msk [vmem:[#allocation6 + $0x208] sm:$0xff] %vm2032, %v2011
    %2047 = vst.msk [vmem:[#allocation6 + $0x230] sm:$0xff] %vm2032, %v2013
    %2048 = vst.msk [vmem:[#allocation6 + $0x258] sm:$0xff] %vm2032, %v2015
    %s2049 = scalar_lea.vmem [#allocation3], 2
    %v2050 = vld [vmem:[%s2049] ss:$2 sm:$0xff]
    %s2051 = scalar_lea.vmem [#allocation3], 18
    %v2052 = vld [vmem:[%s2051] ss:$2 sm:$0xff]
    %s2053 = scalar_lea.vmem [#allocation3], 34
    %v2054 = vld [vmem:[%s2053] ss:$2 sm:$0xff]
    %s2055 = scalar_lea.vmem [#allocation3], 50
    %v2056 = vld [vmem:[%s2055] ss:$2 sm:$0xff]
    %s2057 = scalar_lea.vmem [#allocation3], 66
    %v2058 = vld [vmem:[%s2057] ss:$2 sm:$0xff]
    %s2059 = scalar_lea.vmem [#allocation3], 82
    %v2060 = vld [vmem:[%s2059] ss:$2 sm:$0xff]
    %s2061 = scalar_lea.vmem [#allocation3], 98
    %v2062 = vld [vmem:[%s2061] ss:$2 sm:$0xff]
    %s2063 = scalar_lea.vmem [#allocation3], 114
    %v2064 = vld [vmem:[%s2063] ss:$2 sm:$0xff]
    %s2065 = scalar_lea.vmem [#allocation3], 138
    %v2066 = vld [vmem:[%s2065] ss:$2 sm:$0xff]
    %s2067 = scalar_lea.vmem [#allocation3], 154
    %v2068 = vld [vmem:[%s2067] ss:$2 sm:$0xff]
    %s2069 = scalar_lea.vmem [#allocation3], 170
    %v2070 = vld [vmem:[%s2069] ss:$2 sm:$0xff]
    %s2071 = scalar_lea.vmem [#allocation3], 186
    %v2072 = vld [vmem:[%s2071] ss:$2 sm:$0xff]
    %s2073 = scalar_lea.vmem [#allocation3], 202
    %v2074 = vld [vmem:[%s2073] ss:$2 sm:$0xff]
    %s2075 = scalar_lea.vmem [#allocation3], 218
    %v2076 = vld [vmem:[%s2075] ss:$2 sm:$0xff]
    %s2077 = scalar_lea.vmem [#allocation3], 234
    %v2078 = vld [vmem:[%s2077] ss:$2 sm:$0xff]
    %s2079 = scalar_lea.vmem [#allocation3], 250
    %v2080 = vld [vmem:[%s2079] ss:$2 sm:$0xff]
    %2097 = vrot.lane.b32.xlu0 %v2050, 64
    %v2098 = vpop.permute.xlu0 %2097
    %2099 = vrot.lane.b32.xlu0 %v2052, 64
    %v2100 = vpop.permute.xlu0 %2099
    %2101 = vrot.lane.b32.xlu0 %v2054, 64
    %v2102 = vpop.permute.xlu0 %2101
    %2103 = vrot.lane.b32.xlu0 %v2056, 64
    %v2104 = vpop.permute.xlu0 %2103
    %2105 = vrot.lane.b32.xlu0 %v2058, 64
    %v2106 = vpop.permute.xlu0 %2105
    %2107 = vrot.lane.b32.xlu0 %v2060, 64
    %v2108 = vpop.permute.xlu0 %2107
    %2109 = vrot.lane.b32.xlu0 %v2062, 64
    %v2110 = vpop.permute.xlu0 %2109
    %2111 = vrot.lane.b32.xlu0 %v2064, 64
    %v2112 = vpop.permute.xlu0 %2111
    %2113 = vrot.lane.b32.xlu0 %v2066, 64
    %v2114 = vpop.permute.xlu0 %2113
    %2115 = vrot.lane.b32.xlu0 %v2068, 64
    %v2116 = vpop.permute.xlu0 %2115
    %2117 = vrot.lane.b32.xlu0 %v2070, 64
    %v2118 = vpop.permute.xlu0 %2117
    %2119 = vrot.lane.b32.xlu0 %v2072, 64
    %v2120 = vpop.permute.xlu0 %2119
    %2121 = vrot.lane.b32.xlu0 %v2074, 64
    %v2122 = vpop.permute.xlu0 %2121
    %2123 = vrot.lane.b32.xlu0 %v2076, 64
    %v2124 = vpop.permute.xlu0 %2123
    %2125 = vrot.lane.b32.xlu0 %v2078, 64
    %v2126 = vpop.permute.xlu0 %2125
    %2127 = vrot.lane.b32.xlu0 %v2080, 64
    %v2128 = vpop.permute.xlu0 %2127
    %vm2145 = vcmask 785920
    %2146 = vst.msk [vmem:[#allocation6] sm:$0xff] %vm2145, %v2098
    %2147 = vst.msk [vmem:[#allocation6 + $0x28] sm:$0xff] %vm2145, %v2100
    %2148 = vst.msk [vmem:[#allocation6 + $0x50] sm:$0xff] %vm2145, %v2102
    %2149 = vst.msk [vmem:[#allocation6 + $0x78] sm:$0xff] %vm2145, %v2104
    %2150 = vst.msk [vmem:[#allocation6 + $0xa0] sm:$0xff] %vm2145, %v2106
    %2151 = vst.msk [vmem:[#allocation6 + $0xc8] sm:$0xff] %vm2145, %v2108
    %2152 = vst.msk [vmem:[#allocation6 + $0xf0] sm:$0xff] %vm2145, %v2110
    %2153 = vst.msk [vmem:[#allocation6 + $0x118] sm:$0xff] %vm2145, %v2112
    %2154 = vst.msk [vmem:[#allocation6 + $0x140] sm:$0xff] %vm2145, %v2114
    %2155 = vst.msk [vmem:[#allocation6 + $0x168] sm:$0xff] %vm2145, %v2116
    %2156 = vst.msk [vmem:[#allocation6 + $0x190] sm:$0xff] %vm2145, %v2118
    %2157 = vst.msk [vmem:[#allocation6 + $0x1b8] sm:$0xff] %vm2145, %v2120
    %2158 = vst.msk [vmem:[#allocation6 + $0x1e0] sm:$0xff] %vm2145, %v2122
    %2159 = vst.msk [vmem:[#allocation6 + $0x208] sm:$0xff] %vm2145, %v2124
    %2160 = vst.msk [vmem:[#allocation6 + $0x230] sm:$0xff] %vm2145, %v2126
    %2161 = vst.msk [vmem:[#allocation6 + $0x258] sm:$0xff] %vm2145, %v2128
    %s2162 = scalar_lea.vmem [#allocation3], 3
    %v2163 = vld [vmem:[%s2162] ss:$2 sm:$0xff]
    %s2164 = scalar_lea.vmem [#allocation3], 19
    %v2165 = vld [vmem:[%s2164] ss:$2 sm:$0xff]
    %s2166 = scalar_lea.vmem [#allocation3], 35
    %v2167 = vld [vmem:[%s2166] ss:$2 sm:$0xff]
    %s2168 = scalar_lea.vmem [#allocation3], 51
    %v2169 = vld [vmem:[%s2168] ss:$2 sm:$0xff]
    %s2170 = scalar_lea.vmem [#allocation3], 67
    %v2171 = vld [vmem:[%s2170] ss:$2 sm:$0xff]
    %s2172 = scalar_lea.vmem [#allocation3], 83
    %v2173 = vld [vmem:[%s2172] ss:$2 sm:$0xff]
    %s2174 = scalar_lea.vmem [#allocation3], 99
    %v2175 = vld [vmem:[%s2174] ss:$2 sm:$0xff]
    %s2176 = scalar_lea.vmem [#allocation3], 115
    %v2177 = vld [vmem:[%s2176] ss:$2 sm:$0xff]
    %s2178 = scalar_lea.vmem [#allocation3], 139
    %v2179 = vld [vmem:[%s2178] ss:$2 sm:$0xff]
    %s2180 = scalar_lea.vmem [#allocation3], 155
    %v2181 = vld [vmem:[%s2180] ss:$2 sm:$0xff]
    %s2182 = scalar_lea.vmem [#allocation3], 171
    %v2183 = vld [vmem:[%s2182] ss:$2 sm:$0xff]
    %s2184 = scalar_lea.vmem [#allocation3], 187
    %v2185 = vld [vmem:[%s2184] ss:$2 sm:$0xff]
    %s2186 = scalar_lea.vmem [#allocation3], 203
    %v2187 = vld [vmem:[%s2186] ss:$2 sm:$0xff]
    %s2188 = scalar_lea.vmem [#allocation3], 219
    %v2189 = vld [vmem:[%s2188] ss:$2 sm:$0xff]
    %s2190 = scalar_lea.vmem [#allocation3], 235
    %v2191 = vld [vmem:[%s2190] ss:$2 sm:$0xff]
    %s2192 = scalar_lea.vmem [#allocation3], 251
    %v2193 = vld [vmem:[%s2192] ss:$2 sm:$0xff]
    %2210 = vrot.lane.b32.xlu0 %v2163, 96
    %v2211 = vpop.permute.xlu0 %2210
    %2212 = vrot.lane.b32.xlu0 %v2165, 96
    %v2213 = vpop.permute.xlu0 %2212
    %2214 = vrot.lane.b32.xlu0 %v2167, 96
    %v2215 = vpop.permute.xlu0 %2214
    %2216 = vrot.lane.b32.xlu0 %v2169, 96
    %v2217 = vpop.permute.xlu0 %2216
    %2218 = vrot.lane.b32.xlu0 %v2171, 96
    %v2219 = vpop.permute.xlu0 %2218
    %2220 = vrot.lane.b32.xlu0 %v2173, 96
    %v2221 = vpop.permute.xlu0 %2220
    %2222 = vrot.lane.b32.xlu0 %v2175, 96
    %v2223 = vpop.permute.xlu0 %2222
    %2224 = vrot.lane.b32.xlu0 %v2177, 96
    %v2225 = vpop.permute.xlu0 %2224
    %2226 = vrot.lane.b32.xlu0 %v2179, 96
    %v2227 = vpop.permute.xlu0 %2226
    %2228 = vrot.lane.b32.xlu0 %v2181, 96
    %v2229 = vpop.permute.xlu0 %2228
    %2230 = vrot.lane.b32.xlu0 %v2183, 96
    %v2231 = vpop.permute.xlu0 %2230
    %2232 = vrot.lane.b32.xlu0 %v2185, 96
    %v2233 = vpop.permute.xlu0 %2232
    %2234 = vrot.lane.b32.xlu0 %v2187, 96
    %v2235 = vpop.permute.xlu0 %2234
    %2236 = vrot.lane.b32.xlu0 %v2189, 96
    %v2237 = vpop.permute.xlu0 %2236
    %2238 = vrot.lane.b32.xlu0 %v2191, 96
    %v2239 = vpop.permute.xlu0 %2238
    %2240 = vrot.lane.b32.xlu0 %v2193, 96
    %v2241 = vpop.permute.xlu0 %2240
    %vm2258 = vcmask 1048320
    %2259 = vst.msk [vmem:[#allocation6] sm:$0xff] %vm2258, %v2211
    %2260 = vst.msk [vmem:[#allocation6 + $0x28] sm:$0xff] %vm2258, %v2213
    %2261 = vst.msk [vmem:[#allocation6 + $0x50] sm:$0xff] %vm2258, %v2215
    %2262 = vst.msk [vmem:[#allocation6 + $0x78] sm:$0xff] %vm2258, %v2217
    %2263 = vst.msk [vmem:[#allocation6 + $0xa0] sm:$0xff] %vm2258, %v2219
    %2264 = vst.msk [vmem:[#allocation6 + $0xc8] sm:$0xff] %vm2258, %v2221
    %2265 = vst.msk [vmem:[#allocation6 + $0xf0] sm:$0xff] %vm2258, %v2223
    %2266 = vst.msk [vmem:[#allocation6 + $0x118] sm:$0xff] %vm2258, %v2225
    %2267 = vst.msk [vmem:[#allocation6 + $0x140] sm:$0xff] %vm2258, %v2227
    %2268 = vst.msk [vmem:[#allocation6 + $0x168] sm:$0xff] %vm2258, %v2229
    %2269 = vst.msk [vmem:[#allocation6 + $0x190] sm:$0xff] %vm2258, %v2231
    %2270 = vst.msk [vmem:[#allocation6 + $0x1b8] sm:$0xff] %vm2258, %v2233
    %2271 = vst.msk [vmem:[#allocation6 + $0x1e0] sm:$0xff] %vm2258, %v2235
    %2272 = vst.msk [vmem:[#allocation6 + $0x208] sm:$0xff] %vm2258, %v2237
    %2273 = vst.msk [vmem:[#allocation6 + $0x230] sm:$0xff] %vm2258, %v2239
    %2274 = vst.msk [vmem:[#allocation6 + $0x258] sm:$0xff] %vm2258, %v2241
    %s2275 = scalar_lea.vmem [#allocation3], 4
    %v2276 = vld [vmem:[%s2275] ss:$2 sm:$0xff]
    %s2277 = scalar_lea.vmem [#allocation3], 20
    %v2278 = vld [vmem:[%s2277] ss:$2 sm:$0xff]
    %s2279 = scalar_lea.vmem [#allocation3], 36
    %v2280 = vld [vmem:[%s2279] ss:$2 sm:$0xff]
    %s2281 = scalar_lea.vmem [#allocation3], 52
    %v2282 = vld [vmem:[%s2281] ss:$2 sm:$0xff]
    %s2283 = scalar_lea.vmem [#allocation3], 68
    %v2284 = vld [vmem:[%s2283] ss:$2 sm:$0xff]
    %s2285 = scalar_lea.vmem [#allocation3], 84
    %v2286 = vld [vmem:[%s2285] ss:$2 sm:$0xff]
    %s2287 = scalar_lea.vmem [#allocation3], 100
    %v2288 = vld [vmem:[%s2287] ss:$2 sm:$0xff]
    %s2289 = scalar_lea.vmem [#allocation3], 116
    %v2290 = vld [vmem:[%s2289] ss:$2 sm:$0xff]
    %s2291 = scalar_lea.vmem [#allocation3], 140
    %v2292 = vld [vmem:[%s2291] ss:$2 sm:$0xff]
    %s2293 = scalar_lea.vmem [#allocation3], 156
    %v2294 = vld [vmem:[%s2293] ss:$2 sm:$0xff]
    %s2295 = scalar_lea.vmem [#allocation3], 172
    %v2296 = vld [vmem:[%s2295] ss:$2 sm:$0xff]
    %s2297 = scalar_lea.vmem [#allocation3], 188
    %v2298 = vld [vmem:[%s2297] ss:$2 sm:$0xff]
    %s2299 = scalar_lea.vmem [#allocation3], 204
    %v2300 = vld [vmem:[%s2299] ss:$2 sm:$0xff]
    %s2301 = scalar_lea.vmem [#allocation3], 220
    %v2302 = vld [vmem:[%s2301] ss:$2 sm:$0xff]
    %s2303 = scalar_lea.vmem [#allocation3], 236
    %v2304 = vld [vmem:[%s2303] ss:$2 sm:$0xff]
    %s2305 = scalar_lea.vmem [#allocation3], 252
    %v2306 = vld [vmem:[%s2305] ss:$2 sm:$0xff]
    %2307 = vst.msk [vmem:[#allocation6 + $0x8] sm:$0xff] %vm1515, %v2276
    %2308 = vst.msk [vmem:[#allocation6 + $0x30] sm:$0xff] %vm1515, %v2278
    %2309 = vst.msk [vmem:[#allocation6 + $0x58] sm:$0xff] %vm1515, %v2280
    %2310 = vst.msk [vmem:[#allocation6 + $0x80] sm:$0xff] %vm1515, %v2282
    %2311 = vst.msk [vmem:[#allocation6 + $0xa8] sm:$0xff] %vm1515, %v2284
    %2312 = vst.msk [vmem:[#allocation6 + $0xd0] sm:$0xff] %vm1515, %v2286
    %2313 = vst.msk [vmem:[#allocation6 + $0xf8] sm:$0xff] %vm1515, %v2288
    %2314 = vst.msk [vmem:[#allocation6 + $0x120] sm:$0xff] %vm1515, %v2290
    %2315 = vst.msk [vmem:[#allocation6 + $0x148] sm:$0xff] %vm1515, %v2292
    %2316 = vst.msk [vmem:[#allocation6 + $0x170] sm:$0xff] %vm1515, %v2294
    %2317 = vst.msk [vmem:[#allocation6 + $0x198] sm:$0xff] %vm1515, %v2296
    %2318 = vst.msk [vmem:[#allocation6 + $0x1c0] sm:$0xff] %vm1515, %v2298
    %2319 = vst.msk [vmem:[#allocation6 + $0x1e8] sm:$0xff] %vm1515, %v2300
    %2320 = vst.msk [vmem:[#allocation6 + $0x210] sm:$0xff] %vm1515, %v2302
    %2321 = vst.msk [vmem:[#allocation6 + $0x238] sm:$0xff] %vm1515, %v2304
    %2322 = vst.msk [vmem:[#allocation6 + $0x260] sm:$0xff] %vm1515, %v2306
    %v2323 = vld [vmem:[#allocation6] sm:$0xff]
    %v2324 = vld [vmem:[#allocation6 + $0x8] sm:$0xff]
    %v2325 = vld [vmem:[#allocation6 + $0x28] sm:$0xff]
    %v2326 = vld [vmem:[#allocation6 + $0x30] sm:$0xff]
    %v2327 = vld [vmem:[#allocation6 + $0x50] sm:$0xff]
    %v2328 = vld [vmem:[#allocation6 + $0x58] sm:$0xff]
    %v2329 = vld [vmem:[#allocation6 + $0x78] sm:$0xff]
    %v2330 = vld [vmem:[#allocation6 + $0x80] sm:$0xff]
    %v2331 = vld [vmem:[#allocation6 + $0xa0] sm:$0xff]
    %v2332 = vld [vmem:[#allocation6 + $0xa8] sm:$0xff]
    %v2333 = vld [vmem:[#allocation6 + $0xc8] sm:$0xff]
    %v2334 = vld [vmem:[#allocation6 + $0xd0] sm:$0xff]
    %v2335 = vld [vmem:[#allocation6 + $0xf0] sm:$0xff]
    %v2336 = vld [vmem:[#allocation6 + $0xf8] sm:$0xff]
    %v2337 = vld [vmem:[#allocation6 + $0x118] sm:$0xff]
    %v2338 = vld [vmem:[#allocation6 + $0x120] sm:$0xff]
    %v2339 = vld [vmem:[#allocation6 + $0x140] sm:$0xff]
    %v2340 = vld [vmem:[#allocation6 + $0x148] sm:$0xff]
    %v2341 = vld [vmem:[#allocation6 + $0x168] sm:$0xff]
    %v2342 = vld [vmem:[#allocation6 + $0x170] sm:$0xff]
    %v2343 = vld [vmem:[#allocation6 + $0x190] sm:$0xff]
    %v2344 = vld [vmem:[#allocation6 + $0x198] sm:$0xff]
    %v2345 = vld [vmem:[#allocation6 + $0x1b8] sm:$0xff]
    %v2346 = vld [vmem:[#allocation6 + $0x1c0] sm:$0xff]
    %v2347 = vld [vmem:[#allocation6 + $0x1e0] sm:$0xff]
    %v2348 = vld [vmem:[#allocation6 + $0x1e8] sm:$0xff]
    %v2349 = vld [vmem:[#allocation6 + $0x208] sm:$0xff]
    %v2350 = vld [vmem:[#allocation6 + $0x210] sm:$0xff]
    %v2351 = vld [vmem:[#allocation6 + $0x230] sm:$0xff]
    %v2352 = vld [vmem:[#allocation6 + $0x238] sm:$0xff]
    %v2353 = vld [vmem:[#allocation6 + $0x258] sm:$0xff]
    %v2354 = vld [vmem:[#allocation6 + $0x260] sm:$0xff]
    %v2355 = vld [vmem:[#allocation7 + $0x20] sm:$0xff]
    %v2356 = vld [vmem:[#allocation7 + $0x30] sm:$0xff]
    %v2357 = vld [vmem:[#allocation7 + $0x40] sm:$0xff]
    %v2358 = vld [vmem:[#allocation7 + $0x50] sm:$0xff]
    %v2359 = vld [vmem:[#allocation7 + $0x60] sm:$0xff]
    %v2360 = vld [vmem:[#allocation7 + $0x70] sm:$0xff]
    %v2361 = vld [vmem:[#allocation7 + $0x80] sm:$0xff]
    %v2362 = vld [vmem:[#allocation7 + $0x90] sm:$0xff]
    %v2363 = vld [vmem:[#allocation7 + $0xa0] sm:$0xff]
    %v2364 = vld [vmem:[#allocation7 + $0xb0] sm:$0xff]
    %v2365 = vld [vmem:[#allocation7 + $0xc0] sm:$0xff]
    %v2366 = vld [vmem:[#allocation7 + $0xd0] sm:$0xff]
    %v2367 = vld [vmem:[#allocation7 + $0xe0] sm:$0xff]
    %v2368 = vld [vmem:[#allocation7 + $0xf0] sm:$0xff]
    %v2369 = vld [vmem:[#allocation7 + $0x100] sm:$0xff]
    %v2370 = vld [vmem:[#allocation7 + $0x110] sm:$0xff]
    %v2371 = vld [vmem:[#allocation7 + $0x120] sm:$0xff]
    %v2372 = vld [vmem:[#allocation7 + $0x130] sm:$0xff]
    %v2373 = vld [vmem:[#allocation7 + $0x140] sm:$0xff]
    %v2374 = vld [vmem:[#allocation7 + $0x150] sm:$0xff]
    %v2375 = vld [vmem:[#allocation7 + $0x8f0] ss:$0 sm:$0xff]
    %v2377 = vsel %vm1515, %v2324, 0
    %v2380 = vsel %vm1515, %v2326, 0
    %v2383 = vsel %vm1515, %v2328, 0
    %v2386 = vsel %vm1515, %v2330, 0
    %v2389 = vsel %vm1515, %v2332, 0
    %v2392 = vsel %vm1515, %v2334, 0
    %v2395 = vsel %vm1515, %v2336, 0
    %v2398 = vsel %vm1515, %v2338, 0
    %v2401 = vsel %vm1515, %v2340, 0
    %v2404 = vsel %vm1515, %v2342, 0
    %v2407 = vsel %vm1515, %v2344, 0
    %v2410 = vsel %vm1515, %v2346, 0
    %v2413 = vsel %vm1515, %v2348, 0
    %v2416 = vsel %vm1515, %v2350, 0
    %v2419 = vsel %vm1515, %v2352, 0
    %v2422 = vsel %vm1515, %v2354, 0
    %2424 = vmatprep.subr.mxu0 0.0
    %2425 = vmatpush1.msra.mxu0 %v2355
    %2426 = vmatprep.subr.mxu0 0.0
    %2427 = vmatpush1.msra.mxu0 %v2356
    %2428 = vmatprep.subr.mxu0 0.0
    %2429 = vmatpush1.msra.mxu0 %v2357
    %2430 = vmatprep.subr.mxu0 0.0
    %2431 = vmatpush1.msra.mxu0 %v2358
    %2432 = vmatprep.subr.mxu0 0.0
    %2433 = vmatpush1.msra.mxu0 %v2359
    %2434 = vmatprep.subr.mxu0 0.0
    %2435 = vmatpush1.msra.mxu0 %v2360
    %2436 = vmatprep.subr.mxu0 0.0
    %2437 = vmatpush1.msra.mxu0 %v2361
    %2438 = vmatprep.subr.mxu0 0.0
    %2439 = vmatpush1.msra.mxu0 %v2362
    %2440 = vmatprep.subr.mxu0 0.0
    %2441 = vmatpush1.msra.mxu0 %v2363
    %2442 = vmatprep.subr.mxu0 0.0
    %2443 = vmatpush1.msra.mxu0 %v2364
    %2444 = vmatprep.subr.mxu0 0.0
    %2445 = vmatpush1.msra.mxu0 %v2365
    %2446 = vmatprep.subr.mxu0 0.0
    %2447 = vmatpush1.msra.mxu0 %v2366
    %2448 = vmatprep.subr.mxu0 0.0
    %2449 = vmatpush1.msra.mxu0 %v2367
    %2450 = vmatprep.subr.mxu0 0.0
    %2451 = vmatpush1.msra.mxu0 %v2368
    %2452 = vmatprep.subr.mxu0 0.0
    %2453 = vmatpush1.msra.mxu0 %v2369
    %2454 = vmatprep.subr.mxu0 0.0
    %2455 = vmatpush1.msra.mxu0 %v2370
    %2456 = vmatprep.subr.mxu0 0.0
    %2457 = vmatpush1.msra.mxu0 %v2371
    %2458 = vmatprep.subr.mxu0 0.0
    %2459 = vmatpush1.msra.mxu0 %v2372
    %2460 = vmatprep.subr.mxu0 0.0
    %2461 = vmatpush1.msra.mxu0 %v2373
    %2462 = vmatprep.subr.mxu0 0.0
    %2463 = vmatpush1.msra.mxu0 %v2374
    %2464 = vmatprep.subr.mxu0 0.0
    %2465 = vmatpush1.msra.mxu0 0.0
    %2466 = vmatprep.subr.mxu0 0.0
    %2467 = vmatpush1.msra.mxu0 0.0
    %2468 = vmatprep.subr.mxu0 0.0
    %2469 = vmatpush1.msra.mxu0 0.0
    %2470 = vmatprep.subr.mxu0 0.0
    %2471 = vmatpush1.msra.mxu0 0.0
    %2472 = vmatprep.subr.mxu0 0.0
    %2473 = vmatpush1.msra.mxu0 0.0
    %2474 = vmatprep.subr.mxu0 0.0
    %2475 = vmatpush1.msra.mxu0 0.0
    %2476 = vmatprep.subr.mxu0 0.0
    %2477 = vmatpush1.msra.mxu0 0.0
    %2478 = vmatprep.subr.mxu0 0.0
    %2479 = vmatpush1.msra.mxu0 0.0
    %2480 = vmatprep.subr.mxu0 0.0
    %2481 = vmatpush1.msra.mxu0 0.0
    %2482 = vmatprep.subr.mxu0 0.0
    %2483 = vmatpush1.msra.mxu0 0.0
    %2484 = vmatprep.subr.mxu0 0.0
    %2485 = vmatpush1.msra.mxu0 0.0
    %2486 = vmatprep.subr.mxu0 0.0
    %2487 = vmatpush1.msra.mxu0 0.0
    %2488 = vmatprep.mubr.f32.mxu0 %v2377
    %2489 = vmatmul.mubr.f32.gmra.mrb[0].mxu0 %v2323
    %v2490 = vpop.f32.mrb[0].mxu0
    %v2491 = vadd.f32 %v2375, %v2490
    %v2492 = vpop.f32.mrb[0].mxu0
    %2493 = vmatprep.mubr.f32.mxu0 %v2380
    %2494 = vmatmul.mubr.f32.gmra.mrb[0].mxu0 %v2325
    %v2495 = vpop.f32.mrb[0].mxu0
    %v2496 = vadd.f32 %v2375, %v2495
    %v2497 = vpop.f32.mrb[0].mxu0
    %2498 = vmatprep.mubr.f32.mxu0 %v2383
    %2499 = vmatmul.mubr.f32.gmra.mrb[0].mxu0 %v2327
    %v2500 = vpop.f32.mrb[0].mxu0
    %v2501 = vadd.f32 %v2375, %v2500
    %v2502 = vpop.f32.mrb[0].mxu0
    %2503 = vmatprep.mubr.f32.mxu0 %v2386
    %2504 = vmatmul.mubr.f32.gmra.mrb[0].mxu0 %v2329
    %v2505 = vpop.f32.mrb[0].mxu0
    %v2506 = vadd.f32 %v2375, %v2505
    %v2507 = vpop.f32.mrb[0].mxu0
    %2508 = vmatprep.mubr.f32.mxu0 %v2389
    %2509 = vmatmul.mubr.f32.gmra.mrb[0].mxu0 %v2331
    %v2510 = vpop.f32.mrb[0].mxu0
    %v2511 = vadd.f32 %v2375, %v2510
    %v2512 = vpop.f32.mrb[0].mxu0
    %2513 = vmatprep.mubr.f32.mxu0 %v2392
    %2514 = vmatmul.mubr.f32.gmra.mrb[0].mxu0 %v2333
    %v2515 = vpop.f32.mrb[0].mxu0
    %v2516 = vadd.f32 %v2375, %v2515
    %v2517 = vpop.f32.mrb[0].mxu0
    %2518 = vmatprep.mubr.f32.mxu0 %v2395
    %2519 = vmatmul.mubr.f32.gmra.mrb[0].mxu0 %v2335
    %v2520 = vpop.f32.mrb[0].mxu0
    %v2521 = vadd.f32 %v2375, %v2520
    %v2522 = vpop.f32.mrb[0].mxu0
    %2523 = vmatprep.mubr.f32.mxu0 %v2398
    %2524 = vmatmul.mubr.f32.gmra.mrb[0].mxu0 %v2337
    %v2525 = vpop.f32.mrb[0].mxu0
    %v2526 = vadd.f32 %v2375, %v2525
    %v2527 = vpop.f32.mrb[0].mxu0
    %2528 = vmatprep.mubr.f32.mxu0 %v2401
    %2529 = vmatmul.mubr.f32.gmra.mrb[0].mxu0 %v2339
    %v2530 = vpop.f32.mrb[0].mxu0
    %v2531 = vadd.f32 %v2375, %v2530
    %v2532 = vpop.f32.mrb[0].mxu0
    %2533 = vmatprep.mubr.f32.mxu0 %v2404
    %2534 = vmatmul.mubr.f32.gmra.mrb[0].mxu0 %v2341
    %v2535 = vpop.f32.mrb[0].mxu0
    %v2536 = vadd.f32 %v2375, %v2535
    %v2537 = vpop.f32.mrb[0].mxu0
    %2538 = vmatprep.mubr.f32.mxu0 %v2407
    %2539 = vmatmul.mubr.f32.gmra.mrb[0].mxu0 %v2343
    %v2540 = vpop.f32.mrb[0].mxu0
    %v2541 = vadd.f32 %v2375, %v2540
    %v2542 = vpop.f32.mrb[0].mxu0
    %2543 = vmatprep.mubr.f32.mxu0 %v2410
    %2544 = vmatmul.mubr.f32.gmra.mrb[0].mxu0 %v2345
    %v2545 = vpop.f32.mrb[0].mxu0
    %v2546 = vadd.f32 %v2375, %v2545
    %v2547 = vpop.f32.mrb[0].mxu0
    %2548 = vmatprep.mubr.f32.mxu0 %v2413
    %2549 = vmatmul.mubr.f32.gmra.mrb[0].mxu0 %v2347
    %v2550 = vpop.f32.mrb[0].mxu0
    %v2551 = vadd.f32 %v2375, %v2550
    %v2552 = vpop.f32.mrb[0].mxu0
    %2553 = vmatprep.mubr.f32.mxu0 %v2416
    %2554 = vmatmul.mubr.f32.gmra.mrb[0].mxu0 %v2349
    %v2555 = vpop.f32.mrb[0].mxu0
    %v2556 = vadd.f32 %v2375, %v2555
    %v2557 = vpop.f32.mrb[0].mxu0
    %2558 = vmatprep.mubr.f32.mxu0 %v2419
    %2559 = vmatmul.mubr.f32.gmra.mrb[0].mxu0 %v2351
    %v2560 = vpop.f32.mrb[0].mxu0
    %v2561 = vadd.f32 %v2375, %v2560
    %v2562 = vpop.f32.mrb[0].mxu0
    %2563 = vmatprep.mubr.f32.mxu0 %v2422
    %2564 = vmatmul.mubr.f32.gmra.mrb[0].mxu0 %v2353
    %v2565 = vpop.f32.mrb[0].mxu0
    %v2566 = vadd.f32 %v2375, %v2565
    %v2567 = vpop.f32.mrb[0].mxu0
    %2568 = vdwg.mxu0
    %vm2569 = vcmask 523264
    %v2570 = vsel %vm2569, %v2491, 0.0
    %v2571 = vsel %vm2569, %v2496, 0.0
    %v2572 = vadd.f32 %v2570, %v2571
    %v2573 = vsel %vm2569, %v2501, 0.0
    %v2574 = vadd.f32 %v2572, %v2573
    %v2575 = vsel %vm2569, %v2506, 0.0
    %v2576 = vadd.f32 %v2574, %v2575
    %v2577 = vsel %vm2569, %v2511, 0.0
    %v2578 = vadd.f32 %v2576, %v2577
    %v2579 = vsel %vm2569, %v2516, 0.0
    %v2580 = vadd.f32 %v2578, %v2579
    %v2581 = vsel %vm2569, %v2521, 0.0
    %v2582 = vadd.f32 %v2580, %v2581
    %v2583 = vsel %vm2569, %v2526, 0.0
    %v2584 = vadd.f32 %v2582, %v2583
    %v2585 = vsel %vm2569, %v2531, 0.0
    %v2586 = vadd.f32 %v2584, %v2585
    %v2587 = vsel %vm2569, %v2536, 0.0
    %v2588 = vadd.f32 %v2586, %v2587
    %v2589 = vsel %vm2569, %v2541, 0.0
    %v2590 = vadd.f32 %v2588, %v2589
    %v2591 = vsel %vm2569, %v2546, 0.0
    %v2592 = vadd.f32 %v2590, %v2591
    %v2593 = vsel %vm2569, %v2551, 0.0
    %v2594 = vadd.f32 %v2592, %v2593
    %v2595 = vsel %vm2569, %v2556, 0.0
    %v2596 = vadd.f32 %v2594, %v2595
    %v2597 = vsel %vm2569, %v2561, 0.0
    %v2598 = vadd.f32 %v2596, %v2597
    %v2599 = vsel %vm2569, %v2566, 0.0
    %v2600 = vadd.f32 %v2598, %v2599
    %v2601 = vrot.slane %v2600, 4
    %v2602 = vadd.f32 %v2600, %v2601
    %v2603 = vrot.slane %v2602, 2
    %v2604 = vadd.f32 %v2602, %v2603
    %v2605 = vrot.slane %v2604, 1
    %v2606 = vadd.f32 %v2604, %v2605
    %v2607 = vmul.f32 %v2606, 0.0078125
    %v2608 = vsub.f32 %v2491, %v2607
    %v2609 = vsub.f32 %v2496, %v2607
    %v2610 = vsub.f32 %v2501, %v2607
    %v2611 = vsub.f32 %v2506, %v2607
    %v2612 = vsub.f32 %v2511, %v2607
    %v2613 = vsub.f32 %v2516, %v2607
    %v2614 = vsub.f32 %v2521, %v2607
    %v2615 = vsub.f32 %v2526, %v2607
    %v2616 = vsub.f32 %v2531, %v2607
    %v2617 = vsub.f32 %v2536, %v2607
    %v2618 = vsub.f32 %v2541, %v2607
    %v2619 = vsub.f32 %v2546, %v2607
    %v2620 = vsub.f32 %v2551, %v2607
    %v2621 = vsub.f32 %v2556, %v2607
    %v2622 = vsub.f32 %v2561, %v2607
    %v2623 = vsub.f32 %v2566, %v2607
    %v2624 = vmul.f32 %v2608, %v2608
    %v2625 = vmul.f32 %v2609, %v2609
    %v2626 = vmul.f32 %v2610, %v2610
    %v2627 = vmul.f32 %v2611, %v2611
    %v2628 = vmul.f32 %v2612, %v2612
    %v2629 = vmul.f32 %v2613, %v2613
    %v2630 = vmul.f32 %v2614, %v2614
    %v2631 = vmul.f32 %v2615, %v2615
    %v2632 = vmul.f32 %v2616, %v2616
    %v2633 = vmul.f32 %v2617, %v2617
    %v2634 = vmul.f32 %v2618, %v2618
    %v2635 = vmul.f32 %v2619, %v2619
    %v2636 = vmul.f32 %v2620, %v2620
    %v2637 = vmul.f32 %v2621, %v2621
    %v2638 = vmul.f32 %v2622, %v2622
    %v2639 = vmul.f32 %v2623, %v2623
    %v2640 = vsel %vm2569, %v2624, 0.0
    %v2641 = vsel %vm2569, %v2625, 0.0
    %v2642 = vadd.f32 %v2640, %v2641
    %v2643 = vsel %vm2569, %v2626, 0.0
    %v2644 = vadd.f32 %v2642, %v2643
    %v2645 = vsel %vm2569, %v2627, 0.0
    %v2646 = vadd.f32 %v2644, %v2645
    %v2647 = vsel %vm2569, %v2628, 0.0
    %v2648 = vadd.f32 %v2646, %v2647
    %v2649 = vsel %vm2569, %v2629, 0.0
    %v2650 = vadd.f32 %v2648, %v2649
    %v2651 = vsel %vm2569, %v2630, 0.0
    %v2652 = vadd.f32 %v2650, %v2651
    %v2653 = vsel %vm2569, %v2631, 0.0
    %v2654 = vadd.f32 %v2652, %v2653
    %v2655 = vsel %vm2569, %v2632, 0.0
    %v2656 = vadd.f32 %v2654, %v2655
    %v2657 = vsel %vm2569, %v2633, 0.0
    %v2658 = vadd.f32 %v2656, %v2657
    %v2659 = vsel %vm2569, %v2634, 0.0
    %v2660 = vadd.f32 %v2658, %v2659
    %v2661 = vsel %vm2569, %v2635, 0.0
    %v2662 = vadd.f32 %v2660, %v2661
    %v2663 = vsel %vm2569, %v2636, 0.0
    %v2664 = vadd.f32 %v2662, %v2663
    %v2665 = vsel %vm2569, %v2637, 0.0
    %v2666 = vadd.f32 %v2664, %v2665
    %v2667 = vsel %vm2569, %v2638, 0.0
    %v2668 = vadd.f32 %v2666, %v2667
    %v2669 = vsel %vm2569, %v2639, 0.0
    %v2670 = vadd.f32 %v2668, %v2669
    %v2671 = vrot.slane %v2670, 4
    %v2672 = vadd.f32 %v2670, %v2671
    %v2673 = vrot.slane %v2672, 2
    %v2674 = vadd.f32 %v2672, %v2673
    %v2675 = vrot.slane %v2674, 1
    %v2676 = vadd.f32 %v2674, %v2675
    %v2677 = vmul.f32 %v2676, 0.0078125
    %v2678 = vadd.f32 %v2677, 1e-05
    %v2679 = vrsqrt.pop %v2678
    %v2680 = vmul.f32 %v2608, %v2679
    %v2681 = vmul.f32 %v2609, %v2679
    %v2682 = vmul.f32 %v2610, %v2679
    %v2683 = vmul.f32 %v2611, %v2679
    %v2684 = vmul.f32 %v2612, %v2679
    %v2685 = vmul.f32 %v2613, %v2679
    %v2686 = vmul.f32 %v2614, %v2679
    %v2687 = vmul.f32 %v2615, %v2679
    %v2688 = vmul.f32 %v2616, %v2679
    %v2689 = vmul.f32 %v2617, %v2679
    %v2690 = vmul.f32 %v2618, %v2679
    %v2691 = vmul.f32 %v2619, %v2679
    %v2692 = vmul.f32 %v2620, %v2679
    %v2693 = vmul.f32 %v2621, %v2679
    %v2694 = vmul.f32 %v2622, %v2679
    %v2695 = vmul.f32 %v2623, %v2679
    %v2696 = vld [vmem:[#allocation7 + $0x8f1] ss:$0 sm:$0xff]
    %v2697 = vld [vmem:[#allocation7 + $0x8f2] ss:$0 sm:$0xff]
    %v2698 = vmul.f32 %v2696, %v2680
    %v2699 = vmul.f32 %v2696, %v2681
    %v2700 = vmul.f32 %v2696, %v2682
    %v2701 = vmul.f32 %v2696, %v2683
    %v2702 = vmul.f32 %v2696, %v2684
    %v2703 = vmul.f32 %v2696, %v2685
    %v2704 = vmul.f32 %v2696, %v2686
    %v2705 = vmul.f32 %v2696, %v2687
    %v2706 = vmul.f32 %v2696, %v2688
    %v2707 = vmul.f32 %v2696, %v2689
    %v2708 = vmul.f32 %v2696, %v2690
    %v2709 = vmul.f32 %v2696, %v2691
    %v2710 = vmul.f32 %v2696, %v2692
    %v2711 = vmul.f32 %v2696, %v2693
    %v2712 = vmul.f32 %v2696, %v2694
    %v2713 = vmul.f32 %v2696, %v2695
    %v2714 = vadd.f32 %v2698, %v2697
    %v2715 = vadd.f32 %v2699, %v2697
    %v2716 = vadd.f32 %v2700, %v2697
    %v2717 = vadd.f32 %v2701, %v2697
    %v2718 = vadd.f32 %v2702, %v2697
    %v2719 = vadd.f32 %v2703, %v2697
    %v2720 = vadd.f32 %v2704, %v2697
    %v2721 = vadd.f32 %v2705, %v2697
    %v2722 = vadd.f32 %v2706, %v2697
    %v2723 = vadd.f32 %v2707, %v2697
    %v2724 = vadd.f32 %v2708, %v2697
    %v2725 = vadd.f32 %v2709, %v2697
    %v2726 = vadd.f32 %v2710, %v2697
    %v2727 = vadd.f32 %v2711, %v2697
    %v2728 = vadd.f32 %v2712, %v2697
    %v2729 = vadd.f32 %v2713, %v2697
    %v2730 = vtanh.pop %v2714
    %v2731 = vtanh.pop %v2715
    %v2732 = vtanh.pop %v2716
    %v2733 = vtanh.pop %v2717
    %v2734 = vtanh.pop %v2718
    %v2735 = vtanh.pop %v2719
    %v2736 = vtanh.pop %v2720
    %v2737 = vtanh.pop %v2721
    %v2738 = vtanh.pop %v2722
    %v2739 = vtanh.pop %v2723
    %v2740 = vtanh.pop %v2724
    %v2741 = vtanh.pop %v2725
    %v2742 = vtanh.pop %v2726
    %v2743 = vtanh.pop %v2727
    %v2744 = vtanh.pop %v2728
    %v2745 = vtanh.pop %v2729
    %vm2746 = vcmask 517120
    %2747 = vst.msk [vmem:[#allocation4] sm:$0x3] %vm2746, 0.0
    %2748 = vst.msk [vmem:[#allocation4 + $0x48] sm:$0x3] %vm2746, 0.0
    %2749 = vst.msk [vmem:[#allocation4 + $0x42] sm:$0x3] %vm2746, 0.0
    %2750 = vst.msk [vmem:[#allocation4 + $0x8a] sm:$0x3] %vm2746, 0.0
    %2751 = vst.msk [vmem:[#allocation4 + $0x2] sm:$0xff] %vm2569, %v2730
    %2752 = vst.msk [vmem:[#allocation4 + $0xa] sm:$0xff] %vm2569, %v2731
    %2753 = vst.msk [vmem:[#allocation4 + $0x12] sm:$0xff] %vm2569, %v2732
    %2754 = vst.msk [vmem:[#allocation4 + $0x1a] sm:$0xff] %vm2569, %v2733
    %2755 = vst.msk [vmem:[#allocation4 + $0x22] sm:$0xff] %vm2569, %v2734
    %2756 = vst.msk [vmem:[#allocation4 + $0x2a] sm:$0xff] %vm2569, %v2735
    %2757 = vst.msk [vmem:[#allocation4 + $0x32] sm:$0xff] %vm2569, %v2736
    %2758 = vst.msk [vmem:[#allocation4 + $0x3a] sm:$0xff] %vm2569, %v2737
    %2759 = vst.msk [vmem:[#allocation4 + $0x4a] sm:$0xff] %vm2569, %v2738
    %2760 = vst.msk [vmem:[#allocation4 + $0x52] sm:$0xff] %vm2569, %v2739
    %2761 = vst.msk [vmem:[#allocation4 + $0x5a] sm:$0xff] %vm2569, %v2740
    %2762 = vst.msk [vmem:[#allocation4 + $0x62] sm:$0xff] %vm2569, %v2741
    %2763 = vst.msk [vmem:[#allocation4 + $0x6a] sm:$0xff] %vm2569, %v2742
    %2764 = vst.msk [vmem:[#allocation4 + $0x72] sm:$0xff] %vm2569, %v2743
    %2765 = vst.msk [vmem:[#allocation4 + $0x7a] sm:$0xff] %vm2569, %v2744
    %2766 = vst.msk [vmem:[#allocation4 + $0x82] sm:$0xff] %vm2569, %v2745
    %v2767 = vld [vmem:[#allocation4] ss:$2 sm:$0xff]
    %s2768 = scalar_lea.vmem [#allocation4], 16
    %v2769 = vld [vmem:[%s2768] ss:$2 sm:$0xff]
    %s2770 = scalar_lea.vmem [#allocation4], 32
    %v2771 = vld [vmem:[%s2770] ss:$2 sm:$0xff]
    %s2772 = scalar_lea.vmem [#allocation4], 48
    %v2773 = vld [vmem:[%s2772] ss:$2 sm:$0xff]
    %s2774 = scalar_lea.vmem [#allocation4], 72
    %v2775 = vld [vmem:[%s2774] ss:$2 sm:$0xff]
    %s2776 = scalar_lea.vmem [#allocation4], 88
    %v2777 = vld [vmem:[%s2776] ss:$2 sm:$0xff]
    %s2778 = scalar_lea.vmem [#allocation4], 104
    %v2779 = vld [vmem:[%s2778] ss:$2 sm:$0xff]
    %s2780 = scalar_lea.vmem [#allocation4], 120
    %v2781 = vld [vmem:[%s2780] ss:$2 sm:$0xff]
    %2782 = vst.msk [vmem:[#allocation6] sm:$0xff] %vm2569, %v2767
    %2783 = vst.msk [vmem:[#allocation6 + $0x28] sm:$0xff] %vm2569, %v2769
    %2784 = vst.msk [vmem:[#allocation6 + $0x50] sm:$0xff] %vm2569, %v2771
    %2785 = vst.msk [vmem:[#allocation6 + $0x78] sm:$0xff] %vm2569, %v2773
    %2786 = vst.msk [vmem:[#allocation6 + $0xa0] sm:$0xff] %vm2569, %v2775
    %2787 = vst.msk [vmem:[#allocation6 + $0xc8] sm:$0xff] %vm2569, %v2777
    %2788 = vst.msk [vmem:[#allocation6 + $0xf0] sm:$0xff] %vm2569, %v2779
    %2789 = vst.msk [vmem:[#allocation6 + $0x118] sm:$0xff] %vm2569, %v2781
    %s2790 = scalar_lea.vmem [#allocation4], 1
    %v2791 = vld [vmem:[%s2790] ss:$2 sm:$0xff]
    %s2792 = scalar_lea.vmem [#allocation4], 17
    %v2793 = vld [vmem:[%s2792] ss:$2 sm:$0xff]
    %s2794 = scalar_lea.vmem [#allocation4], 33
    %v2795 = vld [vmem:[%s2794] ss:$2 sm:$0xff]
    %s2796 = scalar_lea.vmem [#allocation4], 49
    %v2797 = vld [vmem:[%s2796] ss:$2 sm:$0xff]
    %s2798 = scalar_lea.vmem [#allocation4], 73
    %v2799 = vld [vmem:[%s2798] ss:$2 sm:$0xff]
    %s2800 = scalar_lea.vmem [#allocation4], 89
    %v2801 = vld [vmem:[%s2800] ss:$2 sm:$0xff]
    %s2802 = scalar_lea.vmem [#allocation4], 105
    %v2803 = vld [vmem:[%s2802] ss:$2 sm:$0xff]
    %s2804 = scalar_lea.vmem [#allocation4], 121
    %v2805 = vld [vmem:[%s2804] ss:$2 sm:$0xff]
    %2814 = vrot.lane.b32.xlu0 %v2791, 64
    %v2815 = vpop.permute.xlu0 %2814
    %2816 = vrot.lane.b32.xlu0 %v2793, 64
    %v2817 = vpop.permute.xlu0 %2816
    %2818 = vrot.lane.b32.xlu0 %v2795, 64
    %v2819 = vpop.permute.xlu0 %2818
    %2820 = vrot.lane.b32.xlu0 %v2797, 64
    %v2821 = vpop.permute.xlu0 %2820
    %2822 = vrot.lane.b32.xlu0 %v2799, 64
    %v2823 = vpop.permute.xlu0 %2822
    %2824 = vrot.lane.b32.xlu0 %v2801, 64
    %v2825 = vpop.permute.xlu0 %2824
    %2826 = vrot.lane.b32.xlu0 %v2803, 64
    %v2827 = vpop.permute.xlu0 %2826
    %2828 = vrot.lane.b32.xlu0 %v2805, 64
    %v2829 = vpop.permute.xlu0 %2828
    %vm2838 = vcmask 1048064
    %2839 = vst.msk [vmem:[#allocation6] sm:$0xff] %vm2838, %v2815
    %2840 = vst.msk [vmem:[#allocation6 + $0x28] sm:$0xff] %vm2838, %v2817
    %2841 = vst.msk [vmem:[#allocation6 + $0x50] sm:$0xff] %vm2838, %v2819
    %2842 = vst.msk [vmem:[#allocation6 + $0x78] sm:$0xff] %vm2838, %v2821
    %2843 = vst.msk [vmem:[#allocation6 + $0xa0] sm:$0xff] %vm2838, %v2823
    %2844 = vst.msk [vmem:[#allocation6 + $0xc8] sm:$0xff] %vm2838, %v2825
    %2845 = vst.msk [vmem:[#allocation6 + $0xf0] sm:$0xff] %vm2838, %v2827
    %2846 = vst.msk [vmem:[#allocation6 + $0x118] sm:$0xff] %vm2838, %v2829
    %s2847 = scalar_lea.vmem [#allocation4], 2
    %v2848 = vld [vmem:[%s2847] ss:$2 sm:$0xff]
    %s2849 = scalar_lea.vmem [#allocation4], 18
    %v2850 = vld [vmem:[%s2849] ss:$2 sm:$0xff]
    %s2851 = scalar_lea.vmem [#allocation4], 34
    %v2852 = vld [vmem:[%s2851] ss:$2 sm:$0xff]
    %s2853 = scalar_lea.vmem [#allocation4], 50
    %v2854 = vld [vmem:[%s2853] ss:$2 sm:$0xff]
    %s2855 = scalar_lea.vmem [#allocation4], 74
    %v2856 = vld [vmem:[%s2855] ss:$2 sm:$0xff]
    %s2857 = scalar_lea.vmem [#allocation4], 90
    %v2858 = vld [vmem:[%s2857] ss:$2 sm:$0xff]
    %s2859 = scalar_lea.vmem [#allocation4], 106
    %v2860 = vld [vmem:[%s2859] ss:$2 sm:$0xff]
    %s2861 = scalar_lea.vmem [#allocation4], 122
    %v2862 = vld [vmem:[%s2861] ss:$2 sm:$0xff]
    %2863 = vst.msk [vmem:[#allocation6 + $0x8] sm:$0xff] %vm2569, %v2848
    %2864 = vst.msk [vmem:[#allocation6 + $0x30] sm:$0xff] %vm2569, %v2850
    %2865 = vst.msk [vmem:[#allocation6 + $0x58] sm:$0xff] %vm2569, %v2852
    %2866 = vst.msk [vmem:[#allocation6 + $0x80] sm:$0xff] %vm2569, %v2854
    %2867 = vst.msk [vmem:[#allocation6 + $0xa8] sm:$0xff] %vm2569, %v2856
    %2868 = vst.msk [vmem:[#allocation6 + $0xd0] sm:$0xff] %vm2569, %v2858
    %2869 = vst.msk [vmem:[#allocation6 + $0xf8] sm:$0xff] %vm2569, %v2860
    %2870 = vst.msk [vmem:[#allocation6 + $0x120] sm:$0xff] %vm2569, %v2862
    %s2871 = scalar_lea.vmem [#allocation4], 3
    %v2872 = vld [vmem:[%s2871] ss:$2 sm:$0xff]
    %s2873 = scalar_lea.vmem [#allocation4], 19
    %v2874 = vld [vmem:[%s2873] ss:$2 sm:$0xff]
    %s2875 = scalar_lea.vmem [#allocation4], 35
    %v2876 = vld [vmem:[%s2875] ss:$2 sm:$0xff]
    %s2877 = scalar_lea.vmem [#allocation4], 51
    %v2878 = vld [vmem:[%s2877] ss:$2 sm:$0xff]
    %s2879 = scalar_lea.vmem [#allocation4], 75
    %v2880 = vld [vmem:[%s2879] ss:$2 sm:$0xff]
    %s2881 = scalar_lea.vmem [#allocation4], 91
    %v2882 = vld [vmem:[%s2881] ss:$2 sm:$0xff]
    %s2883 = scalar_lea.vmem [#allocation4], 107
    %v2884 = vld [vmem:[%s2883] ss:$2 sm:$0xff]
    %s2885 = scalar_lea.vmem [#allocation4], 123
    %v2886 = vld [vmem:[%s2885] ss:$2 sm:$0xff]
    %2895 = vrot.lane.b32.xlu0 %v2872, 64
    %v2896 = vpop.permute.xlu0 %2895
    %2897 = vrot.lane.b32.xlu0 %v2874, 64
    %v2898 = vpop.permute.xlu0 %2897
    %2899 = vrot.lane.b32.xlu0 %v2876, 64
    %v2900 = vpop.permute.xlu0 %2899
    %2901 = vrot.lane.b32.xlu0 %v2878, 64
    %v2902 = vpop.permute.xlu0 %2901
    %2903 = vrot.lane.b32.xlu0 %v2880, 64
    %v2904 = vpop.permute.xlu0 %2903
    %2905 = vrot.lane.b32.xlu0 %v2882, 64
    %v2906 = vpop.permute.xlu0 %2905
    %2907 = vrot.lane.b32.xlu0 %v2884, 64
    %v2908 = vpop.permute.xlu0 %2907
    %2909 = vrot.lane.b32.xlu0 %v2886, 64
    %v2910 = vpop.permute.xlu0 %2909
    %2919 = vst.msk [vmem:[#allocation6 + $0x8] sm:$0xff] %vm2838, %v2896
    %2920 = vst.msk [vmem:[#allocation6 + $0x30] sm:$0xff] %vm2838, %v2898
    %2921 = vst.msk [vmem:[#allocation6 + $0x58] sm:$0xff] %vm2838, %v2900
    %2922 = vst.msk [vmem:[#allocation6 + $0x80] sm:$0xff] %vm2838, %v2902
    %2923 = vst.msk [vmem:[#allocation6 + $0xa8] sm:$0xff] %vm2838, %v2904
    %2924 = vst.msk [vmem:[#allocation6 + $0xd0] sm:$0xff] %vm2838, %v2906
    %2925 = vst.msk [vmem:[#allocation6 + $0xf8] sm:$0xff] %vm2838, %v2908
    %2926 = vst.msk [vmem:[#allocation6 + $0x120] sm:$0xff] %vm2838, %v2910
    %s2927 = scalar_lea.vmem [#allocation4], 4
    %v2928 = vld [vmem:[%s2927] ss:$2 sm:$0xff]
    %s2929 = scalar_lea.vmem [#allocation4], 20
    %v2930 = vld [vmem:[%s2929] ss:$2 sm:$0xff]
    %s2931 = scalar_lea.vmem [#allocation4], 36
    %v2932 = vld [vmem:[%s2931] ss:$2 sm:$0xff]
    %s2933 = scalar_lea.vmem [#allocation4], 52
    %v2934 = vld [vmem:[%s2933] ss:$2 sm:$0xff]
    %s2935 = scalar_lea.vmem [#allocation4], 76
    %v2936 = vld [vmem:[%s2935] ss:$2 sm:$0xff]
    %s2937 = scalar_lea.vmem [#allocation4], 92
    %v2938 = vld [vmem:[%s2937] ss:$2 sm:$0xff]
    %s2939 = scalar_lea.vmem [#allocation4], 108
    %v2940 = vld [vmem:[%s2939] ss:$2 sm:$0xff]
    %s2941 = scalar_lea.vmem [#allocation4], 124
    %v2942 = vld [vmem:[%s2941] ss:$2 sm:$0xff]
    %2943 = vst.msk [vmem:[#allocation6 + $0x10] sm:$0xff] %vm2569, %v2928
    %2944 = vst.msk [vmem:[#allocation6 + $0x38] sm:$0xff] %vm2569, %v2930
    %2945 = vst.msk [vmem:[#allocation6 + $0x60] sm:$0xff] %vm2569, %v2932
    %2946 = vst.msk [vmem:[#allocation6 + $0x88] sm:$0xff] %vm2569, %v2934
    %2947 = vst.msk [vmem:[#allocation6 + $0xb0] sm:$0xff] %vm2569, %v2936
    %2948 = vst.msk [vmem:[#allocation6 + $0xd8] sm:$0xff] %vm2569, %v2938
    %2949 = vst.msk [vmem:[#allocation6 + $0x100] sm:$0xff] %vm2569, %v2940
    %2950 = vst.msk [vmem:[#allocation6 + $0x128] sm:$0xff] %vm2569, %v2942
    %v2951 = vld [vmem:[#allocation6] sm:$0xff]
    %v2952 = vld [vmem:[#allocation6 + $0x8] sm:$0xff]
    %v2953 = vld [vmem:[#allocation6 + $0x10] sm:$0xff]
    %v2954 = vld [vmem:[#allocation6 + $0x28] sm:$0xff]
    %v2955 = vld [vmem:[#allocation6 + $0x30] sm:$0xff]
    %v2956 = vld [vmem:[#allocation6 + $0x38] sm:$0xff]
    %v2957 = vld [vmem:[#allocation6 + $0x50] sm:$0xff]
    %v2958 = vld [vmem:[#allocation6 + $0x58] sm:$0xff]
    %v2959 = vld [vmem:[#allocation6 + $0x60] sm:$0xff]
    %v2960 = vld [vmem:[#allocation6 + $0x78] sm:$0xff]
    %v2961 = vld [vmem:[#allocation6 + $0x80] sm:$0xff]
    %v2962 = vld [vmem:[#allocation6 + $0x88] sm:$0xff]
    %v2963 = vld [vmem:[#allocation6 + $0xa0] sm:$0xff]
    %v2964 = vld [vmem:[#allocation6 + $0xa8] sm:$0xff]
    %v2965 = vld [vmem:[#allocation6 + $0xb0] sm:$0xff]
    %v2966 = vld [vmem:[#allocation6 + $0xc8] sm:$0xff]
    %v2967 = vld [vmem:[#allocation6 + $0xd0] sm:$0xff]
    %v2968 = vld [vmem:[#allocation6 + $0xd8] sm:$0xff]
    %v2969 = vld [vmem:[#allocation6 + $0xf0] sm:$0xff]
    %v2970 = vld [vmem:[#allocation6 + $0xf8] sm:$0xff]
    %v2971 = vld [vmem:[#allocation6 + $0x100] sm:$0xff]
    %v2972 = vld [vmem:[#allocation6 + $0x118] sm:$0xff]
    %v2973 = vld [vmem:[#allocation6 + $0x120] sm:$0xff]
    %v2974 = vld [vmem:[#allocation6 + $0x128] sm:$0xff]
    %v2975 = vld [vmem:[#allocation7 + $0x160] sm:$0xff]
    %v2976 = vld [vmem:[#allocation7 + $0x170] sm:$0xff]
    %v2977 = vld [vmem:[#allocation7 + $0x180] sm:$0xff]
    %v2978 = vld [vmem:[#allocation7 + $0x190] sm:$0xff]
    %v2979 = vld [vmem:[#allocation7 + $0x1a0] sm:$0xff]
    %v2980 = vld [vmem:[#allocation7 + $0x1b0] sm:$0xff]
    %v2981 = vld [vmem:[#allocation7 + $0x1c0] sm:$0xff]
    %v2982 = vld [vmem:[#allocation7 + $0x1d0] sm:$0xff]
    %v2983 = vld [vmem:[#allocation7 + $0x1e0] sm:$0xff]
    %v2984 = vld [vmem:[#allocation7 + $0x1f0] sm:$0xff]
    %v2985 = vld [vmem:[#allocation7 + $0x200] sm:$0xff]
    %v2986 = vld [vmem:[#allocation7 + $0x210] sm:$0xff]
    %v2987 = vld [vmem:[#allocation7 + $0x220] sm:$0xff]
    %v2988 = vld [vmem:[#allocation7 + $0x230] sm:$0xff]
    %v2989 = vld [vmem:[#allocation7 + $0x240] sm:$0xff]
    %v2990 = vld [vmem:[#allocation7 + $0x250] sm:$0xff]
    %v2991 = vld [vmem:[#allocation7 + $0x260] sm:$0xff]
    %v2992 = vld [vmem:[#allocation7 + $0x270] sm:$0xff]
    %v2993 = vld [vmem:[#allocation7 + $0x280] sm:$0xff]
    %v2994 = vld [vmem:[#allocation7 + $0x290] sm:$0xff]
    %v2995 = vld [vmem:[#allocation7 + $0x2a0] sm:$0xff]
    %v2996 = vld [vmem:[#allocation7 + $0x2b0] sm:$0xff]
    %v2997 = vld [vmem:[#allocation7 + $0x2c0] sm:$0xff]
    %v2998 = vld [vmem:[#allocation7 + $0x2d0] sm:$0xff]
    %v2999 = vld [vmem:[#allocation7 + $0x2e0] sm:$0xff]
    %v3000 = vld [vmem:[#allocation7 + $0x2f0] sm:$0xff]
    %v3001 = vld [vmem:[#allocation7 + $0x300] sm:$0xff]
    %v3002 = vld [vmem:[#allocation7 + $0x310] sm:$0xff]
    %v3003 = vld [vmem:[#allocation7 + $0x320] sm:$0xff]
    %v3004 = vld [vmem:[#allocation7 + $0x330] sm:$0xff]
    %v3005 = vld [vmem:[#allocation7 + $0x340] sm:$0xff]
    %v3006 = vld [vmem:[#allocation7 + $0x350] sm:$0xff]
    %v3007 = vld [vmem:[#allocation7 + $0x360] sm:$0xff]
    %v3008 = vld [vmem:[#allocation7 + $0x370] sm:$0xff]
    %v3009 = vld [vmem:[#allocation7 + $0x380] sm:$0xff]
    %v3010 = vld [vmem:[#allocation7 + $0x390] sm:$0xff]
    %v3011 = vld [vmem:[#allocation7 + $0x3a0] sm:$0xff]
    %v3012 = vld [vmem:[#allocation7 + $0x3b0] sm:$0xff]
    %v3013 = vld [vmem:[#allocation7 + $0x3c0] sm:$0xff]
    %v3014 = vld [vmem:[#allocation7 + $0x3d0] sm:$0xff]
    %v3015 = vld [vmem:[#allocation7 + $0x900] ss:$0 sm:$0xff]
    %v3017 = vsel %vm2569, %v2953, 0
    %v3020 = vsel %vm2569, %v2956, 0
    %v3023 = vsel %vm2569, %v2959, 0
    %v3026 = vsel %vm2569, %v2962, 0
    %v3029 = vsel %vm2569, %v2965, 0
    %v3032 = vsel %vm2569, %v2968, 0
    %v3035 = vsel %vm2569, %v2971, 0
    %v3038 = vsel %vm2569, %v2974, 0
    %3040 = vmatprep.subr.mxu0 0.0
    %3041 = vmatpush1.msra.mxu0 %v2975
    %3042 = vmatprep.subr.mxu0 0.0
    %3043 = vmatpush1.msra.mxu0 %v2976
    %3044 = vmatprep.subr.mxu0 0.0
    %3045 = vmatpush1.msra.mxu0 %v2977
    %3046 = vmatprep.subr.mxu0 0.0
    %3047 = vmatpush1.msra.mxu0 %v2978
    %3048 = vmatprep.subr.mxu0 0.0
    %3049 = vmatpush1.msra.mxu0 %v2979
    %3050 = vmatprep.subr.mxu0 0.0
    %3051 = vmatpush1.msra.mxu0 %v2980
    %3052 = vmatprep.subr.mxu0 0.0
    %3053 = vmatpush1.msra.mxu0 %v2981
    %3054 = vmatprep.subr.mxu0 0.0
    %3055 = vmatpush1.msra.mxu0 %v2982
    %3056 = vmatprep.subr.mxu0 0.0
    %3057 = vmatpush1.msra.mxu0 %v2983
    %3058 = vmatprep.subr.mxu0 0.0
    %3059 = vmatpush1.msra.mxu0 %v2984
    %3060 = vmatprep.subr.mxu0 0.0
    %3061 = vmatpush1.msra.mxu0 %v2985
    %3062 = vmatprep.subr.mxu0 0.0
    %3063 = vmatpush1.msra.mxu0 %v2986
    %3064 = vmatprep.subr.mxu0 0.0
    %3065 = vmatpush1.msra.mxu0 %v2987
    %3066 = vmatprep.subr.mxu0 0.0
    %3067 = vmatpush1.msra.mxu0 %v2988
    %3068 = vmatprep.subr.mxu0 0.0
    %3069 = vmatpush1.msra.mxu0 %v2989
    %3070 = vmatprep.subr.mxu0 0.0
    %3071 = vmatpush1.msra.mxu0 %v2990
    %3072 = vmatprep.subr.mxu0 0.0
    %3073 = vmatpush1.msra.mxu0 %v2991
    %3074 = vmatprep.subr.mxu0 0.0
    %3075 = vmatpush1.msra.mxu0 %v2992
    %3076 = vmatprep.subr.mxu0 0.0
    %3077 = vmatpush1.msra.mxu0 %v2993
    %3078 = vmatprep.subr.mxu0 0.0
    %3079 = vmatpush1.msra.mxu0 %v2994
    %3080 = vmatprep.subr.mxu0 0.0
    %3081 = vmatpush1.msra.mxu0 %v2995
    %3082 = vmatprep.subr.mxu0 0.0
    %3083 = vmatpush1.msra.mxu0 %v2996
    %3084 = vmatprep.subr.mxu0 0.0
    %3085 = vmatpush1.msra.mxu0 %v2997
    %3086 = vmatprep.subr.mxu0 0.0
    %3087 = vmatpush1.msra.mxu0 %v2998
    %3088 = vmatprep.subr.mxu0 0.0
    %3089 = vmatpush1.msra.mxu0 %v2999
    %3090 = vmatprep.subr.mxu0 0.0
    %3091 = vmatpush1.msra.mxu0 %v3000
    %3092 = vmatprep.subr.mxu0 0.0
    %3093 = vmatpush1.msra.mxu0 %v3001
    %3094 = vmatprep.subr.mxu0 0.0
    %3095 = vmatpush1.msra.mxu0 %v3002
    %3096 = vmatprep.subr.mxu0 0.0
    %3097 = vmatpush1.msra.mxu0 %v3003
    %3098 = vmatprep.subr.mxu0 0.0
    %3099 = vmatpush1.msra.mxu0 %v3004
    %3100 = vmatprep.subr.mxu0 0.0
    %3101 = vmatpush1.msra.mxu0 %v3005
    %3102 = vmatprep.subr.mxu0 0.0
    %3103 = vmatpush1.msra.mxu0 %v3006
    %3104 = vmatprep.mubr.f32.mxu0 %v2952
    %3105 = vmatmul.mubr.f32.gmra.mrb[0].mxu0 %v2951
    %v3106 = vpop.f32.mrb[0].mxu0
    %v3107 = vadd.f32 %v3015, %v3106
    %v3108 = vpop.f32.mrb[0].mxu0
    %3109 = vmatprep.mubr.f32.mxu0 %v2955
    %3110 = vmatmul.mubr.f32.gmra.mrb[0].mxu0 %v2954
    %v3111 = vpop.f32.mrb[0].mxu0
    %v3112 = vadd.f32 %v3015, %v3111
    %v3113 = vpop.f32.mrb[0].mxu0
    %3114 = vmatprep.mubr.f32.mxu0 %v2958
    %3115 = vmatmul.mubr.f32.gmra.mrb[0].mxu0 %v2957
    %v3116 = vpop.f32.mrb[0].mxu0
    %v3117 = vadd.f32 %v3015, %v3116
    %v3118 = vpop.f32.mrb[0].mxu0
    %3119 = vmatprep.mubr.f32.mxu0 %v2961
    %3120 = vmatmul.mubr.f32.gmra.mrb[0].mxu0 %v2960
    %v3121 = vpop.f32.mrb[0].mxu0
    %v3122 = vadd.f32 %v3015, %v3121
    %v3123 = vpop.f32.mrb[0].mxu0
    %3124 = vmatprep.mubr.f32.mxu0 %v2964
    %3125 = vmatmul.mubr.f32.gmra.mrb[0].mxu0 %v2963
    %v3126 = vpop.f32.mrb[0].mxu0
    %v3127 = vadd.f32 %v3015, %v3126
    %v3128 = vpop.f32.mrb[0].mxu0
    %3129 = vmatprep.mubr.f32.mxu0 %v2967
    %3130 = vmatmul.mubr.f32.gmra.mrb[0].mxu0 %v2966
    %v3131 = vpop.f32.mrb[0].mxu0
    %v3132 = vadd.f32 %v3015, %v3131
    %v3133 = vpop.f32.mrb[0].mxu0
    %3134 = vmatprep.mubr.f32.mxu0 %v2970
    %3135 = vmatmul.mubr.f32.gmra.mrb[0].mxu0 %v2969
    %v3136 = vpop.f32.mrb[0].mxu0
    %v3137 = vadd.f32 %v3015, %v3136
    %v3138 = vpop.f32.mrb[0].mxu0
    %3139 = vmatprep.mubr.f32.mxu0 %v2973
    %3140 = vmatmul.mubr.f32.gmra.mrb[0].mxu0 %v2972
    %v3141 = vpop.f32.mrb[0].mxu0
    %v3142 = vadd.f32 %v3015, %v3141
    %v3143 = vpop.f32.mrb[0].mxu0
    %3144 = vdwg.mxu0
    %3145 = vmatprep.subr.mxu0 0.0
    %3146 = vmatpush1.msra.mxu0 %v3007
    %3147 = vmatprep.subr.mxu0 0.0
    %3148 = vmatpush1.msra.mxu0 %v3008
    %3149 = vmatprep.subr.mxu0 0.0
    %3150 = vmatpush1.msra.mxu0 %v3009
    %3151 = vmatprep.subr.mxu0 0.0
    %3152 = vmatpush1.msra.mxu0 %v3010
    %3153 = vmatprep.subr.mxu0 0.0
    %3154 = vmatpush1.msra.mxu0 %v3011
    %3155 = vmatprep.subr.mxu0 0.0
    %3156 = vmatpush1.msra.mxu0 %v3012
    %3157 = vmatprep.subr.mxu0 0.0
    %3158 = vmatpush1.msra.mxu0 %v3013
    %3159 = vmatprep.subr.mxu0 0.0
    %3160 = vmatpush1.msra.mxu0 %v3014
    %3161 = vmatprep.subr.mxu0 0.0
    %3162 = vmatpush1.msra.mxu0 0.0
    %3163 = vmatprep.subr.mxu0 0.0
    %3164 = vmatpush1.msra.mxu0 0.0
    %3165 = vmatprep.subr.mxu0 0.0
    %3166 = vmatpush1.msra.mxu0 0.0
    %3167 = vmatprep.subr.mxu0 0.0
    %3168 = vmatpush1.msra.mxu0 0.0
    %3169 = vmatprep.subr.mxu0 0.0
    %3170 = vmatpush1.msra.mxu0 0.0
    %3171 = vmatprep.subr.mxu0 0.0
    %3172 = vmatpush1.msra.mxu0 0.0
    %3173 = vmatprep.subr.mxu0 0.0
    %3174 = vmatpush1.msra.mxu0 0.0
    %3175 = vmatprep.subr.mxu0 0.0
    %3176 = vmatpush1.msra.mxu0 0.0
    %3177 = vmatprep.subr.mxu0 0.0
    %3178 = vmatpush1.msra.mxu0 0.0
    %3179 = vmatprep.subr.mxu0 0.0
    %3180 = vmatpush1.msra.mxu0 0.0
    %3181 = vmatprep.subr.mxu0 0.0
    %3182 = vmatpush1.msra.mxu0 0.0
    %3183 = vmatprep.subr.mxu0 0.0
    %3184 = vmatpush1.msra.mxu0 0.0
    %3185 = vmatprep.subr.mxu0 0.0
    %3186 = vmatpush1.msra.mxu0 0.0
    %3187 = vmatprep.subr.mxu0 0.0
    %3188 = vmatpush1.msra.mxu0 0.0
    %3189 = vmatprep.subr.mxu0 0.0
    %3190 = vmatpush1.msra.mxu0 0.0
    %3191 = vmatprep.subr.mxu0 0.0
    %3192 = vmatpush1.msra.mxu0 0.0
    %3193 = vmatprep.subr.mxu0 0.0
    %3194 = vmatpush1.msra.mxu0 0.0
    %3195 = vmatprep.subr.mxu0 0.0
    %3196 = vmatpush1.msra.mxu0 0.0
    %3197 = vmatprep.subr.mxu0 0.0
    %3198 = vmatpush1.msra.mxu0 0.0
    %3199 = vmatprep.subr.mxu0 0.0
    %3200 = vmatpush1.msra.mxu0 0.0
    %3201 = vmatprep.subr.mxu0 0.0
    %3202 = vmatpush1.msra.mxu0 0.0
    %3203 = vmatprep.subr.mxu0 0.0
    %3204 = vmatpush1.msra.mxu0 0.0
    %3205 = vmatprep.subr.mxu0 0.0
    %3206 = vmatpush1.msra.mxu0 0.0
    %3207 = vmatprep.subr.mxu0 0.0
    %3208 = vmatpush1.msra.mxu0 0.0
    %3209 = vmatprep.mubr.f32.mxu0 0.0
    %3210 = vmatmul.mubr.f32.gmra.mrb[0].mxu0 %v3017
    %v3211 = vpop.f32.mrb[0].mxu0
    %v3212 = vadd.f32 %v3107, %v3211
    %v3213 = vpop.f32.mrb[0].mxu0
    %3214 = vmatprep.mubr.f32.mxu0 0.0
    %3215 = vmatmul.mubr.f32.gmra.mrb[0].mxu0 %v3020
    %v3216 = vpop.f32.mrb[0].mxu0
    %v3217 = vadd.f32 %v3112, %v3216
    %v3218 = vpop.f32.mrb[0].mxu0
    %3219 = vmatprep.mubr.f32.mxu0 0.0
    %3220 = vmatmul.mubr.f32.gmra.mrb[0].mxu0 %v3023
    %v3221 = vpop.f32.mrb[0].mxu0
    %v3222 = vadd.f32 %v3117, %v3221
    %v3223 = vpop.f32.mrb[0].mxu0
    %3224 = vmatprep.mubr.f32.mxu0 0.0
    %3225 = vmatmul.mubr.f32.gmra.mrb[0].mxu0 %v3026
    %v3226 = vpop.f32.mrb[0].mxu0
    %v3227 = vadd.f32 %v3122, %v3226
    %v3228 = vpop.f32.mrb[0].mxu0
    %3229 = vmatprep.mubr.f32.mxu0 0.0
    %3230 = vmatmul.mubr.f32.gmra.mrb[0].mxu0 %v3029
    %v3231 = vpop.f32.mrb[0].mxu0
    %v3232 = vadd.f32 %v3127, %v3231
    %v3233 = vpop.f32.mrb[0].mxu0
    %3234 = vmatprep.mubr.f32.mxu0 0.0
    %3235 = vmatmul.mubr.f32.gmra.mrb[0].mxu0 %v3032
    %v3236 = vpop.f32.mrb[0].mxu0
    %v3237 = vadd.f32 %v3132, %v3236
    %v3238 = vpop.f32.mrb[0].mxu0
    %3239 = vmatprep.mubr.f32.mxu0 0.0
    %3240 = vmatmul.mubr.f32.gmra.mrb[0].mxu0 %v3035
    %v3241 = vpop.f32.mrb[0].mxu0
    %v3242 = vadd.f32 %v3137, %v3241
    %v3243 = vpop.f32.mrb[0].mxu0
    %3244 = vmatprep.mubr.f32.mxu0 0.0
    %3245 = vmatmul.mubr.f32.gmra.mrb[0].mxu0 %v3038
    %v3246 = vpop.f32.mrb[0].mxu0
    %v3247 = vadd.f32 %v3142, %v3246
    %v3248 = vpop.f32.mrb[0].mxu0
    %3249 = vdwg.mxu0
    %v3250 = vadd.f32 %v3212, %v3217
    %v3251 = vadd.f32 %v3250, %v3222
    %v3252 = vadd.f32 %v3251, %v3227
    %v3253 = vadd.f32 %v3252, %v3232
    %v3254 = vadd.f32 %v3253, %v3237
    %v3255 = vadd.f32 %v3254, %v3242
    %v3256 = vadd.f32 %v3255, %v3247
    %v3257 = vrot.slane %v3256, 4
    %v3258 = vadd.f32 %v3256, %v3257
    %v3259 = vrot.slane %v3258, 2
    %v3260 = vadd.f32 %v3258, %v3259
    %v3261 = vrot.slane %v3260, 1
    %v3262 = vadd.f32 %v3260, %v3261
    %v3263 = vmul.f32 %v3262, 0.015625
    %v3264 = vsub.f32 %v3212, %v3263
    %v3265 = vsub.f32 %v3217, %v3263
    %v3266 = vsub.f32 %v3222, %v3263
    %v3267 = vsub.f32 %v3227, %v3263
    %v3268 = vsub.f32 %v3232, %v3263
    %v3269 = vsub.f32 %v3237, %v3263
    %v3270 = vsub.f32 %v3242, %v3263
    %v3271 = vsub.f32 %v3247, %v3263
    %v3272 = vmul.f32 %v3264, %v3264
    %v3273 = vmul.f32 %v3265, %v3265
    %v3274 = vmul.f32 %v3266, %v3266
    %v3275 = vmul.f32 %v3267, %v3267
    %v3276 = vmul.f32 %v3268, %v3268
    %v3277 = vmul.f32 %v3269, %v3269
    %v3278 = vmul.f32 %v3270, %v3270
    %v3279 = vmul.f32 %v3271, %v3271
    %v3280 = vadd.f32 %v3272, %v3273
    %v3281 = vadd.f32 %v3280, %v3274
    %v3282 = vadd.f32 %v3281, %v3275
    %v3283 = vadd.f32 %v3282, %v3276
    %v3284 = vadd.f32 %v3283, %v3277
    %v3285 = vadd.f32 %v3284, %v3278
    %v3286 = vadd.f32 %v3285, %v3279
    %v3287 = vrot.slane %v3286, 4
    %v3288 = vadd.f32 %v3286, %v3287
    %v3289 = vrot.slane %v3288, 2
    %v3290 = vadd.f32 %v3288, %v3289
    %v3291 = vrot.slane %v3290, 1
    %v3292 = vadd.f32 %v3290, %v3291
    %v3293 = vmul.f32 %v3292, 0.015625
    %v3294 = vadd.f32 %v3293, 1e-05
    %v3295 = vrsqrt.pop %v3294
    %v3296 = vmul.f32 %v3264, %v3295
    %v3297 = vmul.f32 %v3265, %v3295
    %v3298 = vmul.f32 %v3266, %v3295
    %v3299 = vmul.f32 %v3267, %v3295
    %v3300 = vmul.f32 %v3268, %v3295
    %v3301 = vmul.f32 %v3269, %v3295
    %v3302 = vmul.f32 %v3270, %v3295
    %v3303 = vmul.f32 %v3271, %v3295
    %v3304 = vld [vmem:[#allocation7 + $0x901] ss:$0 sm:$0xff]
    %v3305 = vld [vmem:[#allocation7 + $0x902] ss:$0 sm:$0xff]
    %v3306 = vmul.f32 %v3304, %v3296
    %v3307 = vmul.f32 %v3304, %v3297
    %v3308 = vmul.f32 %v3304, %v3298
    %v3309 = vmul.f32 %v3304, %v3299
    %v3310 = vmul.f32 %v3304, %v3300
    %v3311 = vmul.f32 %v3304, %v3301
    %v3312 = vmul.f32 %v3304, %v3302
    %v3313 = vmul.f32 %v3304, %v3303
    %v3314 = vadd.f32 %v3306, %v3305
    %v3315 = vadd.f32 %v3307, %v3305
    %v3316 = vadd.f32 %v3308, %v3305
    %v3317 = vadd.f32 %v3309, %v3305
    %v3318 = vadd.f32 %v3310, %v3305
    %v3319 = vadd.f32 %v3311, %v3305
    %v3320 = vadd.f32 %v3312, %v3305
    %v3321 = vadd.f32 %v3313, %v3305
    %v3322 = vtanh.pop %v3314
    %v3323 = vtanh.pop %v3315
    %v3324 = vtanh.pop %v3316
    %v3325 = vtanh.pop %v3317
    %v3326 = vtanh.pop %v3318
    %v3327 = vtanh.pop %v3319
    %v3328 = vtanh.pop %v3320
    %v3329 = vtanh.pop %v3321
    %3330 = vst [vmem:[#allocation5] sm:$0x3] 0.0
    %3331 = vst [vmem:[#allocation5 + $0x28] sm:$0x3] 0.0
    %3332 = vst [vmem:[#allocation5 + $0x22] sm:$0x3] 0.0
    %3333 = vst [vmem:[#allocation5 + $0x4a] sm:$0x3] 0.0
    %3334 = vst [vmem:[#allocation5 + $0x2] sm:$0xff] %v3322
    %3335 = vst [vmem:[#allocation5 + $0xa] sm:$0xff] %v3323
    %3336 = vst [vmem:[#allocation5 + $0x12] sm:$0xff] %v3324
    %3337 = vst [vmem:[#allocation5 + $0x1a] sm:$0xff] %v3325
    %3338 = vst [vmem:[#allocation5 + $0x2a] sm:$0xff] %v3326
    %3339 = vst [vmem:[#allocation5 + $0x32] sm:$0xff] %v3327
    %3340 = vst [vmem:[#allocation5 + $0x3a] sm:$0xff] %v3328
    %3341 = vst [vmem:[#allocation5 + $0x42] sm:$0xff] %v3329
    %v3342 = vld [vmem:[#allocation5] ss:$2 sm:$0xff]
    %s3343 = scalar_lea.vmem [#allocation5], 16
    %v3344 = vld [vmem:[%s3343] ss:$2 sm:$0xff]
    %s3345 = scalar_lea.vmem [#allocation5], 40
    %v3346 = vld [vmem:[%s3345] ss:$2 sm:$0xff]
    %s3347 = scalar_lea.vmem [#allocation5], 56
    %v3348 = vld [vmem:[%s3347] ss:$2 sm:$0xff]
    %3349 = vst [vmem:[#allocation6] sm:$0xff] %v3342
    %3350 = vst [vmem:[#allocation6 + $0x28] sm:$0xff] %v3344
    %3351 = vst [vmem:[#allocation6 + $0x50] sm:$0xff] %v3346
    %3352 = vst [vmem:[#allocation6 + $0x78] sm:$0xff] %v3348
    %s3353 = scalar_lea.vmem [#allocation5], 1
    %v3354 = vld [vmem:[%s3353] ss:$2 sm:$0xff]
    %s3355 = scalar_lea.vmem [#allocation5], 17
    %v3356 = vld [vmem:[%s3355] ss:$2 sm:$0xff]
    %s3357 = scalar_lea.vmem [#allocation5], 41
    %v3358 = vld [vmem:[%s3357] ss:$2 sm:$0xff]
    %s3359 = scalar_lea.vmem [#allocation5], 57
    %v3360 = vld [vmem:[%s3359] ss:$2 sm:$0xff]
    %3361 = vst [vmem:[#allocation6 + $0x8] sm:$0xff] %v3354
    %3362 = vst [vmem:[#allocation6 + $0x30] sm:$0xff] %v3356
    %3363 = vst [vmem:[#allocation6 + $0x58] sm:$0xff] %v3358
    %3364 = vst [vmem:[#allocation6 + $0x80] sm:$0xff] %v3360
    %s3365 = scalar_lea.vmem [#allocation5], 2
    %v3366 = vld [vmem:[%s3365] ss:$2 sm:$0xff]
    %s3367 = scalar_lea.vmem [#allocation5], 18
    %v3368 = vld [vmem:[%s3367] ss:$2 sm:$0xff]
    %s3369 = scalar_lea.vmem [#allocation5], 42
    %v3370 = vld [vmem:[%s3369] ss:$2 sm:$0xff]
    %s3371 = scalar_lea.vmem [#allocation5], 58
    %v3372 = vld [vmem:[%s3371] ss:$2 sm:$0xff]
    %3373 = vst [vmem:[#allocation6 + $0x10] sm:$0xff] %v3366
    %3374 = vst [vmem:[#allocation6 + $0x38] sm:$0xff] %v3368
    %3375 = vst [vmem:[#allocation6 + $0x60] sm:$0xff] %v3370
    %3376 = vst [vmem:[#allocation6 + $0x88] sm:$0xff] %v3372
    %s3377 = scalar_lea.vmem [#allocation5], 3
    %v3378 = vld [vmem:[%s3377] ss:$2 sm:$0xff]
    %s3379 = scalar_lea.vmem [#allocation5], 19
    %v3380 = vld [vmem:[%s3379] ss:$2 sm:$0xff]
    %s3381 = scalar_lea.vmem [#allocation5], 43
    %v3382 = vld [vmem:[%s3381] ss:$2 sm:$0xff]
    %s3383 = scalar_lea.vmem [#allocation5], 59
    %v3384 = vld [vmem:[%s3383] ss:$2 sm:$0xff]
    %3385 = vst [vmem:[#allocation6 + $0x18] sm:$0xff] %v3378
    %3386 = vst [vmem:[#allocation6 + $0x40] sm:$0xff] %v3380
    %3387 = vst [vmem:[#allocation6 + $0x68] sm:$0xff] %v3382
    %3388 = vst [vmem:[#allocation6 + $0x90] sm:$0xff] %v3384
    %s3389 = scalar_lea.vmem [#allocation5], 4
    %v3390 = vld [vmem:[%s3389] ss:$2 sm:$0xff]
    %s3391 = scalar_lea.vmem [#allocation5], 20
    %v3392 = vld [vmem:[%s3391] ss:$2 sm:$0xff]
    %s3393 = scalar_lea.vmem [#allocation5], 44
    %v3394 = vld [vmem:[%s3393] ss:$2 sm:$0xff]
    %s3395 = scalar_lea.vmem [#allocation5], 60
    %v3396 = vld [vmem:[%s3395] ss:$2 sm:$0xff]
    %3397 = vst [vmem:[#allocation6 + $0x20] sm:$0xff] %v3390
    %3398 = vst [vmem:[#allocation6 + $0x48] sm:$0xff] %v3392
    %3399 = vst [vmem:[#allocation6 + $0x70] sm:$0xff] %v3394
    %3400 = vst [vmem:[#allocation6 + $0x98] sm:$0xff] %v3396
    %v3401 = vld [vmem:[#allocation6] sm:$0xff]
    %v3402 = vld [vmem:[#allocation6 + $0x8] sm:$0xff]
    %v3403 = vld [vmem:[#allocation6 + $0x10] sm:$0xff]
    %v3404 = vld [vmem:[#allocation6 + $0x18] sm:$0xff]
    %v3405 = vld [vmem:[#allocation6 + $0x20] sm:$0xff]
    %v3406 = vld [vmem:[#allocation6 + $0x28] sm:$0xff]
    %v3407 = vld [vmem:[#allocation6 + $0x30] sm:$0xff]
    %v3408 = vld [vmem:[#allocation6 + $0x38] sm:$0xff]
    %v3409 = vld [vmem:[#allocation6 + $0x40] sm:$0xff]
    %v3410 = vld [vmem:[#allocation6 + $0x48] sm:$0xff]
    %v3411 = vld [vmem:[#allocation6 + $0x50] sm:$0xff]
    %v3412 = vld [vmem:[#allocation6 + $0x58] sm:$0xff]
    %v3413 = vld [vmem:[#allocation6 + $0x60] sm:$0xff]
    %v3414 = vld [vmem:[#allocation6 + $0x68] sm:$0xff]
    %v3415 = vld [vmem:[#allocation6 + $0x70] sm:$0xff]
    %v3416 = vld [vmem:[#allocation6 + $0x78] sm:$0xff]
    %v3417 = vld [vmem:[#allocation6 + $0x80] sm:$0xff]
    %v3418 = vld [vmem:[#allocation6 + $0x88] sm:$0xff]
    %v3419 = vld [vmem:[#allocation6 + $0x90] sm:$0xff]
    %v3420 = vld [vmem:[#allocation6 + $0x98] sm:$0xff]
    %v3421 = vld [vmem:[#allocation7 + $0x3e0] sm:$0xff]
    %v3422 = vld [vmem:[#allocation7 + $0x3e8] sm:$0xff]
    %v3423 = vld [vmem:[#allocation7 + $0x3f0] sm:$0xff]
    %v3424 = vld [vmem:[#allocation7 + $0x3f8] sm:$0xff]
    %v3425 = vld [vmem:[#allocation7 + $0x400] sm:$0xff]
    %v3426 = vld [vmem:[#allocation7 + $0x408] sm:$0xff]
    %v3427 = vld [vmem:[#allocation7 + $0x410] sm:$0xff]
    %v3428 = vld [vmem:[#allocation7 + $0x418] sm:$0xff]
    %v3429 = vld [vmem:[#allocation7 + $0x420] sm:$0xff]
    %v3430 = vld [vmem:[#allocation7 + $0x428] sm:$0xff]
    %v3431 = vld [vmem:[#allocation7 + $0x430] sm:$0xff]
    %v3432 = vld [vmem:[#allocation7 + $0x438] sm:$0xff]
    %v3433 = vld [vmem:[#allocation7 + $0x440] sm:$0xff]
    %v3434 = vld [vmem:[#allocation7 + $0x448] sm:$0xff]
    %v3435 = vld [vmem:[#allocation7 + $0x450] sm:$0xff]
    %v3436 = vld [vmem:[#allocation7 + $0x458] sm:$0xff]
    %v3437 = vld [vmem:[#allocation7 + $0x460] sm:$0xff]
    %v3438 = vld [vmem:[#allocation7 + $0x468] sm:$0xff]
    %v3439 = vld [vmem:[#allocation7 + $0x470] sm:$0xff]
    %v3440 = vld [vmem:[#allocation7 + $0x478] sm:$0xff]
    %v3441 = vld [vmem:[#allocation7 + $0x480] sm:$0xff]
    %v3442 = vld [vmem:[#allocation7 + $0x488] sm:$0xff]
    %v3443 = vld [vmem:[#allocation7 + $0x490] sm:$0xff]
    %v3444 = vld [vmem:[#allocation7 + $0x498] sm:$0xff]
    %v3445 = vld [vmem:[#allocation7 + $0x4a0] sm:$0xff]
    %v3446 = vld [vmem:[#allocation7 + $0x4a8] sm:$0xff]
    %v3447 = vld [vmem:[#allocation7 + $0x4b0] sm:$0xff]
    %v3448 = vld [vmem:[#allocation7 + $0x4b8] sm:$0xff]
    %v3449 = vld [vmem:[#allocation7 + $0x4c0] sm:$0xff]
    %v3450 = vld [vmem:[#allocation7 + $0x4c8] sm:$0xff]
    %v3451 = vld [vmem:[#allocation7 + $0x4d0] sm:$0xff]
    %v3452 = vld [vmem:[#allocation7 + $0x4d8] sm:$0xff]
    %v3453 = vld [vmem:[#allocation7 + $0x4e0] sm:$0xff]
    %v3454 = vld [vmem:[#allocation7 + $0x4e8] sm:$0xff]
    %v3455 = vld [vmem:[#allocation7 + $0x4f0] sm:$0xff]
    %v3456 = vld [vmem:[#allocation7 + $0x4f8] sm:$0xff]
    %v3457 = vld [vmem:[#allocation7 + $0x500] sm:$0xff]
    %v3458 = vld [vmem:[#allocation7 + $0x508] sm:$0xff]
    %v3459 = vld [vmem:[#allocation7 + $0x510] sm:$0xff]
    %v3460 = vld [vmem:[#allocation7 + $0x518] sm:$0xff]
    %v3461 = vld [vmem:[#allocation7 + $0x520] sm:$0xff]
    %v3462 = vld [vmem:[#allocation7 + $0x528] sm:$0xff]
    %v3463 = vld [vmem:[#allocation7 + $0x530] sm:$0xff]
    %v3464 = vld [vmem:[#allocation7 + $0x538] sm:$0xff]
    %v3465 = vld [vmem:[#allocation7 + $0x540] sm:$0xff]
    %v3466 = vld [vmem:[#allocation7 + $0x548] sm:$0xff]
    %v3467 = vld [vmem:[#allocation7 + $0x550] sm:$0xff]
    %v3468 = vld [vmem:[#allocation7 + $0x558] sm:$0xff]
    %v3469 = vld [vmem:[#allocation7 + $0x560] sm:$0xff]
    %v3470 = vld [vmem:[#allocation7 + $0x568] sm:$0xff]
    %v3471 = vld [vmem:[#allocation7 + $0x570] sm:$0xff]
    %v3472 = vld [vmem:[#allocation7 + $0x578] sm:$0xff]
    %v3473 = vld [vmem:[#allocation7 + $0x580] sm:$0xff]
    %v3474 = vld [vmem:[#allocation7 + $0x588] sm:$0xff]
    %v3475 = vld [vmem:[#allocation7 + $0x590] sm:$0xff]
    %v3476 = vld [vmem:[#allocation7 + $0x598] sm:$0xff]
    %v3477 = vld [vmem:[#allocation7 + $0x5a0] sm:$0xff]
    %v3478 = vld [vmem:[#allocation7 + $0x5a8] sm:$0xff]
    %v3479 = vld [vmem:[#allocation7 + $0x5b0] sm:$0xff]
    %v3480 = vld [vmem:[#allocation7 + $0x5b8] sm:$0xff]
    %v3481 = vld [vmem:[#allocation7 + $0x5c0] sm:$0xff]
    %v3482 = vld [vmem:[#allocation7 + $0x5c8] sm:$0xff]
    %v3483 = vld [vmem:[#allocation7 + $0x5d0] sm:$0xff]
    %v3484 = vld [vmem:[#allocation7 + $0x5d8] sm:$0xff]
    %v3485 = vld [vmem:[#allocation7 + $0x5e0] sm:$0xff]
    %v3486 = vld [vmem:[#allocation7 + $0x5e8] sm:$0xff]
    %v3487 = vld [vmem:[#allocation7 + $0x5f0] sm:$0xff]
    %v3488 = vld [vmem:[#allocation7 + $0x5f8] sm:$0xff]
    %v3489 = vld [vmem:[#allocation7 + $0x600] sm:$0xff]
    %v3490 = vld [vmem:[#allocation7 + $0x608] sm:$0xff]
    %v3491 = vld [vmem:[#allocation7 + $0x610] sm:$0xff]
    %v3492 = vld [vmem:[#allocation7 + $0x618] sm:$0xff]
    %v3493 = vld [vmem:[#allocation7 + $0x620] sm:$0xff]
    %v3494 = vld [vmem:[#allocation7 + $0x628] sm:$0xff]
    %v3495 = vld [vmem:[#allocation7 + $0x630] sm:$0xff]
    %v3496 = vld [vmem:[#allocation7 + $0x638] sm:$0xff]
    %v3497 = vld [vmem:[#allocation7 + $0x640] sm:$0xff]
    %v3498 = vld [vmem:[#allocation7 + $0x648] sm:$0xff]
    %v3499 = vld [vmem:[#allocation7 + $0x650] sm:$0xff]
    %v3500 = vld [vmem:[#allocation7 + $0x658] sm:$0xff]
    %v3501 = vld [vmem:[#allocation7 + $0x660] sm:$0xff]
    %v3502 = vld [vmem:[#allocation7 + $0x668] sm:$0xff]
    %v3503 = vld [vmem:[#allocation7 + $0x670] sm:$0xff]
    %v3504 = vld [vmem:[#allocation7 + $0x678] sm:$0xff]
    %v3505 = vld [vmem:[#allocation7 + $0x680] sm:$0xff]
    %v3506 = vld [vmem:[#allocation7 + $0x688] sm:$0xff]
    %v3507 = vld [vmem:[#allocation7 + $0x690] sm:$0xff]
    %v3508 = vld [vmem:[#allocation7 + $0x698] sm:$0xff]
    %v3509 = vld [vmem:[#allocation7 + $0x6a0] sm:$0xff]
    %v3510 = vld [vmem:[#allocation7 + $0x6a8] sm:$0xff]
    %v3511 = vld [vmem:[#allocation7 + $0x6b0] sm:$0xff]
    %v3512 = vld [vmem:[#allocation7 + $0x6b8] sm:$0xff]
    %v3513 = vld [vmem:[#allocation7 + $0x6c0] sm:$0xff]
    %v3514 = vld [vmem:[#allocation7 + $0x6c8] sm:$0xff]
    %v3515 = vld [vmem:[#allocation7 + $0x6d0] sm:$0xff]
    %v3516 = vld [vmem:[#allocation7 + $0x6d8] sm:$0xff]
    %v3517 = vld [vmem:[#allocation7 + $0x6e0] sm:$0xff]
    %v3518 = vld [vmem:[#allocation7 + $0x6e8] sm:$0xff]
    %v3519 = vld [vmem:[#allocation7 + $0x6f0] sm:$0xff]
    %v3520 = vld [vmem:[#allocation7 + $0x6f8] sm:$0xff]
    %v3521 = vld [vmem:[#allocation7 + $0x700] sm:$0xff]
    %v3522 = vld [vmem:[#allocation7 + $0x708] sm:$0xff]
    %v3523 = vld [vmem:[#allocation7 + $0x710] sm:$0xff]
    %v3524 = vld [vmem:[#allocation7 + $0x718] sm:$0xff]
    %v3525 = vld [vmem:[#allocation7 + $0x720] sm:$0xff]
    %v3526 = vld [vmem:[#allocation7 + $0x728] sm:$0xff]
    %v3527 = vld [vmem:[#allocation7 + $0x730] sm:$0xff]
    %v3528 = vld [vmem:[#allocation7 + $0x738] sm:$0xff]
    %v3529 = vld [vmem:[#allocation7 + $0x740] sm:$0xff]
    %v3530 = vld [vmem:[#allocation7 + $0x748] sm:$0xff]
    %v3531 = vld [vmem:[#allocation7 + $0x750] sm:$0xff]
    %v3532 = vld [vmem:[#allocation7 + $0x758] sm:$0xff]
    %v3533 = vld [vmem:[#allocation7 + $0x760] sm:$0xff]
    %v3534 = vld [vmem:[#allocation7 + $0x768] sm:$0xff]
    %v3535 = vld [vmem:[#allocation7 + $0x770] sm:$0xff]
    %v3536 = vld [vmem:[#allocation7 + $0x778] sm:$0xff]
    %v3537 = vld [vmem:[#allocation7 + $0x780] sm:$0xff]
    %v3538 = vld [vmem:[#allocation7 + $0x788] sm:$0xff]
    %v3539 = vld [vmem:[#allocation7 + $0x790] sm:$0xff]
    %v3540 = vld [vmem:[#allocation7 + $0x798] sm:$0xff]
    %v3541 = vld [vmem:[#allocation7 + $0x7a0] sm:$0xff]
    %v3542 = vld [vmem:[#allocation7 + $0x7a8] sm:$0xff]
    %v3543 = vld [vmem:[#allocation7 + $0x7b0] sm:$0xff]
    %v3544 = vld [vmem:[#allocation7 + $0x7b8] sm:$0xff]
    %v3545 = vld [vmem:[#allocation7 + $0x7c0] sm:$0xff]
    %v3546 = vld [vmem:[#allocation7 + $0x7c8] sm:$0xff]
    %v3547 = vld [vmem:[#allocation7 + $0x7d0] sm:$0xff]
    %v3548 = vld [vmem:[#allocation7 + $0x7d8] sm:$0xff]
    %v3549 = vld [vmem:[#allocation7 + $0x7e0] sm:$0xff]
    %v3550 = vld [vmem:[#allocation7 + $0x7e8] sm:$0xff]
    %v3551 = vld [vmem:[#allocation7 + $0x7f0] sm:$0xff]
    %v3552 = vld [vmem:[#allocation7 + $0x7f8] sm:$0xff]
    %v3553 = vld [vmem:[#allocation7 + $0x800] sm:$0xff]
    %v3554 = vld [vmem:[#allocation7 + $0x808] sm:$0xff]
    %v3555 = vld [vmem:[#allocation7 + $0x810] sm:$0xff]
    %v3556 = vld [vmem:[#allocation7 + $0x818] sm:$0xff]
    %v3557 = vld [vmem:[#allocation7 + $0x820] sm:$0xff]
    %v3558 = vld [vmem:[#allocation7 + $0x828] sm:$0xff]
    %v3559 = vld [vmem:[#allocation7 + $0x830] sm:$0xff]
    %v3560 = vld [vmem:[#allocation7 + $0x838] sm:$0xff]
    %v3561 = vld [vmem:[#allocation7 + $0x840] sm:$0xff]
    %v3562 = vld [vmem:[#allocation7 + $0x848] sm:$0xff]
    %v3563 = vld [vmem:[#allocation7 + $0x850] sm:$0xff]
    %v3564 = vld [vmem:[#allocation7 + $0x858] sm:$0xff]
    %v3565 = vld [vmem:[#allocation7 + $0x860] sm:$0xff]
    %v3566 = vld [vmem:[#allocation7 + $0x868] sm:$0xff]
    %v3567 = vld [vmem:[#allocation7 + $0x870] sm:$0xff]
    %v3568 = vld [vmem:[#allocation7 + $0x878] sm:$0xff]
    %v3569 = vld [vmem:[#allocation7 + $0x880] sm:$0xff]
    %v3570 = vld [vmem:[#allocation7 + $0x888] sm:$0xff]
    %v3571 = vld [vmem:[#allocation7 + $0x890] sm:$0xff]
    %v3572 = vld [vmem:[#allocation7 + $0x898] sm:$0xff]
    %v3573 = vld [vmem:[#allocation7 + $0x8a0] sm:$0xff]
    %v3574 = vld [vmem:[#allocation7 + $0x8a8] sm:$0xff]
    %v3575 = vld [vmem:[#allocation7 + $0x8b0] sm:$0xff]
    %v3576 = vld [vmem:[#allocation7 + $0x8b8] sm:$0xff]
    %v3577 = vld [vmem:[#allocation7 + $0x8c0] sm:$0xff]
    %v3578 = vld [vmem:[#allocation7 + $0x8c8] sm:$0xff]
    %v3579 = vld [vmem:[#allocation7 + $0x8d0] sm:$0xff]
    %v3580 = vld [vmem:[#allocation7 + $0x8d8] sm:$0xff]
    %s3581 = scalar_lea.vmem [#allocation7], 2320
    %v3582 = vld [vmem:[%s3581] ss:$8 sm:$0x3]
    %v3584 = vlaneseq
    %v3585 = vshrl.u32 %v3584, 7
    %v3586 = vsub.s32 0, %v3585
    %v3587 = vrot.slane %v3582, %v3586
    %v3588 = vlaneseq
    %v3589 = vshrl.u32 %v3588, 7
    %v3590 = vsub.s32 1, %v3589
    %v3591 = vrot.slane %v3582, %v3590
    %3594 = vmatprep.subr.mxu0 %v3422
    %3595 = vmatpush1.msra.mxu0 %v3421
    %3596 = vmatprep.subr.mxu0 %v3424
    %3597 = vmatpush1.msra.mxu0 %v3423
    %3598 = vmatprep.subr.mxu0 %v3426
    %3599 = vmatpush1.msra.mxu0 %v3425
    %3600 = vmatprep.subr.mxu0 %v3428
    %3601 = vmatpush1.msra.mxu0 %v3427
    %3602 = vmatprep.subr.mxu0 %v3430
    %3603 = vmatpush1.msra.mxu0 %v3429
    %3604 = vmatprep.subr.mxu0 %v3432
    %3605 = vmatpush1.msra.mxu0 %v3431
    %3606 = vmatprep.subr.mxu0 %v3434
    %3607 = vmatpush1.msra.mxu0 %v3433
    %3608 = vmatprep.subr.mxu0 %v3436
    %3609 = vmatpush1.msra.mxu0 %v3435
    %3610 = vmatprep.subr.mxu0 %v3438
    %3611 = vmatpush1.msra.mxu0 %v3437
    %3612 = vmatprep.subr.mxu0 %v3440
    %3613 = vmatpush1.msra.mxu0 %v3439
    %3614 = vmatprep.subr.mxu0 %v3442
    %3615 = vmatpush1.msra.mxu0 %v3441
    %3616 = vmatprep.subr.mxu0 %v3444
    %3617 = vmatpush1.msra.mxu0 %v3443
    %3618 = vmatprep.subr.mxu0 %v3446
    %3619 = vmatpush1.msra.mxu0 %v3445
    %3620 = vmatprep.subr.mxu0 %v3448
    %3621 = vmatpush1.msra.mxu0 %v3447
    %3622 = vmatprep.subr.mxu0 %v3450
    %3623 = vmatpush1.msra.mxu0 %v3449
    %3624 = vmatprep.subr.mxu0 %v3452
    %3625 = vmatpush1.msra.mxu0 %v3451
    %3626 = vmatprep.subr.mxu0 %v3454
    %3627 = vmatpush1.msra.mxu0 %v3453
    %3628 = vmatprep.subr.mxu0 %v3456
    %3629 = vmatpush1.msra.mxu0 %v3455
    %3630 = vmatprep.subr.mxu0 %v3458
    %3631 = vmatpush1.msra.mxu0 %v3457
    %3632 = vmatprep.subr.mxu0 %v3460
    %3633 = vmatpush1.msra.mxu0 %v3459
    %3634 = vmatprep.subr.mxu0 %v3462
    %3635 = vmatpush1.msra.mxu0 %v3461
    %3636 = vmatprep.subr.mxu0 %v3464
    %3637 = vmatpush1.msra.mxu0 %v3463
    %3638 = vmatprep.subr.mxu0 %v3466
    %3639 = vmatpush1.msra.mxu0 %v3465
    %3640 = vmatprep.subr.mxu0 %v3468
    %3641 = vmatpush1.msra.mxu0 %v3467
    %3642 = vmatprep.subr.mxu0 %v3470
    %3643 = vmatpush1.msra.mxu0 %v3469
    %3644 = vmatprep.subr.mxu0 %v3472
    %3645 = vmatpush1.msra.mxu0 %v3471
    %3646 = vmatprep.subr.mxu0 %v3474
    %3647 = vmatpush1.msra.mxu0 %v3473
    %3648 = vmatprep.subr.mxu0 %v3476
    %3649 = vmatpush1.msra.mxu0 %v3475
    %3650 = vmatprep.subr.mxu0 %v3478
    %3651 = vmatpush1.msra.mxu0 %v3477
    %3652 = vmatprep.subr.mxu0 %v3480
    %3653 = vmatpush1.msra.mxu0 %v3479
    %3654 = vmatprep.subr.mxu0 %v3482
    %3655 = vmatpush1.msra.mxu0 %v3481
    %3656 = vmatprep.subr.mxu0 %v3484
    %3657 = vmatpush1.msra.mxu0 %v3483
    %3658 = vmatprep.mubr.f32.mxu0 %v3402
    %3659 = vmatmul.mubr.f32.gmra.mrb[0].mxu0 %v3401
    %v3660 = vpop.f32.mrb[0].mxu0
    %v3661 = vadd.f32 %v3587, %v3660
    %v3662 = vpop.f32.mrb[0].mxu0
    %v3663 = vadd.f32 %v3591, %v3662
    %3664 = vmatprep.mubr.f32.mxu0 %v3407
    %3665 = vmatmul.mubr.f32.gmra.mrb[0].mxu0 %v3406
    %v3666 = vpop.f32.mrb[0].mxu0
    %v3667 = vadd.f32 %v3587, %v3666
    %v3668 = vpop.f32.mrb[0].mxu0
    %v3669 = vadd.f32 %v3591, %v3668
    %3670 = vmatprep.mubr.f32.mxu0 %v3412
    %3671 = vmatmul.mubr.f32.gmra.mrb[0].mxu0 %v3411
    %v3672 = vpop.f32.mrb[0].mxu0
    %v3673 = vadd.f32 %v3587, %v3672
    %v3674 = vpop.f32.mrb[0].mxu0
    %v3675 = vadd.f32 %v3591, %v3674
    %3676 = vmatprep.mubr.f32.mxu0 %v3417
    %3677 = vmatmul.mubr.f32.gmra.mrb[0].mxu0 %v3416
    %v3678 = vpop.f32.mrb[0].mxu0
    %v3679 = vadd.f32 %v3587, %v3678
    %v3680 = vpop.f32.mrb[0].mxu0
    %v3681 = vadd.f32 %v3591, %v3680
    %3682 = vdwg.mxu0
    %3683 = vmatprep.subr.mxu0 %v3486
    %3684 = vmatpush1.msra.mxu0 %v3485
    %3685 = vmatprep.subr.mxu0 %v3488
    %3686 = vmatpush1.msra.mxu0 %v3487
    %3687 = vmatprep.subr.mxu0 %v3490
    %3688 = vmatpush1.msra.mxu0 %v3489
    %3689 = vmatprep.subr.mxu0 %v3492
    %3690 = vmatpush1.msra.mxu0 %v3491
    %3691 = vmatprep.subr.mxu0 %v3494
    %3692 = vmatpush1.msra.mxu0 %v3493
    %3693 = vmatprep.subr.mxu0 %v3496
    %3694 = vmatpush1.msra.mxu0 %v3495
    %3695 = vmatprep.subr.mxu0 %v3498
    %3696 = vmatpush1.msra.mxu0 %v3497
    %3697 = vmatprep.subr.mxu0 %v3500
    %3698 = vmatpush1.msra.mxu0 %v3499
    %3699 = vmatprep.subr.mxu0 %v3502
    %3700 = vmatpush1.msra.mxu0 %v3501
    %3701 = vmatprep.subr.mxu0 %v3504
    %3702 = vmatpush1.msra.mxu0 %v3503
    %3703 = vmatprep.subr.mxu0 %v3506
    %3704 = vmatpush1.msra.mxu0 %v3505
    %3705 = vmatprep.subr.mxu0 %v3508
    %3706 = vmatpush1.msra.mxu0 %v3507
    %3707 = vmatprep.subr.mxu0 %v3510
    %3708 = vmatpush1.msra.mxu0 %v3509
    %3709 = vmatprep.subr.mxu0 %v3512
    %3710 = vmatpush1.msra.mxu0 %v3511
    %3711 = vmatprep.subr.mxu0 %v3514
    %3712 = vmatpush1.msra.mxu0 %v3513
    %3713 = vmatprep.subr.mxu0 %v3516
    %3714 = vmatpush1.msra.mxu0 %v3515
    %3715 = vmatprep.subr.mxu0 %v3518
    %3716 = vmatpush1.msra.mxu0 %v3517
    %3717 = vmatprep.subr.mxu0 %v3520
    %3718 = vmatpush1.msra.mxu0 %v3519
    %3719 = vmatprep.subr.mxu0 %v3522
    %3720 = vmatpush1.msra.mxu0 %v3521
    %3721 = vmatprep.subr.mxu0 %v3524
    %3722 = vmatpush1.msra.mxu0 %v3523
    %3723 = vmatprep.subr.mxu0 %v3526
    %3724 = vmatpush1.msra.mxu0 %v3525
    %3725 = vmatprep.subr.mxu0 %v3528
    %3726 = vmatpush1.msra.mxu0 %v3527
    %3727 = vmatprep.subr.mxu0 %v3530
    %3728 = vmatpush1.msra.mxu0 %v3529
    %3729 = vmatprep.subr.mxu0 %v3532
    %3730 = vmatpush1.msra.mxu0 %v3531
    %3731 = vmatprep.subr.mxu0 %v3534
    %3732 = vmatpush1.msra.mxu0 %v3533
    %3733 = vmatprep.subr.mxu0 %v3536
    %3734 = vmatpush1.msra.mxu0 %v3535
    %3735 = vmatprep.subr.mxu0 %v3538
    %3736 = vmatpush1.msra.mxu0 %v3537
    %3737 = vmatprep.subr.mxu0 %v3540
    %3738 = vmatpush1.msra.mxu0 %v3539
    %3739 = vmatprep.subr.mxu0 %v3542
    %3740 = vmatpush1.msra.mxu0 %v3541
    %3741 = vmatprep.subr.mxu0 %v3544
    %3742 = vmatpush1.msra.mxu0 %v3543
    %3743 = vmatprep.subr.mxu0 %v3546
    %3744 = vmatpush1.msra.mxu0 %v3545
    %3745 = vmatprep.subr.mxu0 %v3548
    %3746 = vmatpush1.msra.mxu0 %v3547
    %3747 = vmatprep.mubr.f32.mxu0 %v3404
    %3748 = vmatmul.mubr.f32.gmra.mrb[0].mxu0 %v3403
    %v3749 = vpop.f32.mrb[0].mxu0
    %v3750 = vadd.f32 %v3661, %v3749
    %v3751 = vpop.f32.mrb[0].mxu0
    %v3752 = vadd.f32 %v3663, %v3751
    %3753 = vmatprep.mubr.f32.mxu0 %v3409
    %3754 = vmatmul.mubr.f32.gmra.mrb[0].mxu0 %v3408
    %v3755 = vpop.f32.mrb[0].mxu0
    %v3756 = vadd.f32 %v3667, %v3755
    %v3757 = vpop.f32.mrb[0].mxu0
    %v3758 = vadd.f32 %v3669, %v3757
    %3759 = vmatprep.mubr.f32.mxu0 %v3414
    %3760 = vmatmul.mubr.f32.gmra.mrb[0].mxu0 %v3413
    %v3761 = vpop.f32.mrb[0].mxu0
    %v3762 = vadd.f32 %v3673, %v3761
    %v3763 = vpop.f32.mrb[0].mxu0
    %v3764 = vadd.f32 %v3675, %v3763
    %3765 = vmatprep.mubr.f32.mxu0 %v3419
    %3766 = vmatmul.mubr.f32.gmra.mrb[0].mxu0 %v3418
    %v3767 = vpop.f32.mrb[0].mxu0
    %v3768 = vadd.f32 %v3679, %v3767
    %v3769 = vpop.f32.mrb[0].mxu0
    %v3770 = vadd.f32 %v3681, %v3769
    %3771 = vdwg.mxu0
    %3772 = vmatprep.subr.mxu0 %v3550
    %3773 = vmatpush1.msra.mxu0 %v3549
    %3774 = vmatprep.subr.mxu0 %v3552
    %3775 = vmatpush1.msra.mxu0 %v3551
    %3776 = vmatprep.subr.mxu0 %v3554
    %3777 = vmatpush1.msra.mxu0 %v3553
    %3778 = vmatprep.subr.mxu0 %v3556
    %3779 = vmatpush1.msra.mxu0 %v3555
    %3780 = vmatprep.subr.mxu0 %v3558
    %3781 = vmatpush1.msra.mxu0 %v3557
    %3782 = vmatprep.subr.mxu0 %v3560
    %3783 = vmatpush1.msra.mxu0 %v3559
    %3784 = vmatprep.subr.mxu0 %v3562
    %3785 = vmatpush1.msra.mxu0 %v3561
    %3786 = vmatprep.subr.mxu0 %v3564
    %3787 = vmatpush1.msra.mxu0 %v3563
    %3788 = vmatprep.subr.mxu0 %v3566
    %3789 = vmatpush1.msra.mxu0 %v3565
    %3790 = vmatprep.subr.mxu0 %v3568
    %3791 = vmatpush1.msra.mxu0 %v3567
    %3792 = vmatprep.subr.mxu0 %v3570
    %3793 = vmatpush1.msra.mxu0 %v3569
    %3794 = vmatprep.subr.mxu0 %v3572
    %3795 = vmatpush1.msra.mxu0 %v3571
    %3796 = vmatprep.subr.mxu0 %v3574
    %3797 = vmatpush1.msra.mxu0 %v3573
    %3798 = vmatprep.subr.mxu0 %v3576
    %3799 = vmatpush1.msra.mxu0 %v3575
    %3800 = vmatprep.subr.mxu0 %v3578
    %3801 = vmatpush1.msra.mxu0 %v3577
    %3802 = vmatprep.subr.mxu0 %v3580
    %3803 = vmatpush1.msra.mxu0 %v3579
    %3804 = vmatprep.subr.mxu0 0.0
    %3805 = vmatpush1.msra.mxu0 0.0
    %3806 = vmatprep.subr.mxu0 0.0
    %3807 = vmatpush1.msra.mxu0 0.0
    %3808 = vmatprep.subr.mxu0 0.0
    %3809 = vmatpush1.msra.mxu0 0.0
    %3810 = vmatprep.subr.mxu0 0.0
    %3811 = vmatpush1.msra.mxu0 0.0
    %3812 = vmatprep.subr.mxu0 0.0
    %3813 = vmatpush1.msra.mxu0 0.0
    %3814 = vmatprep.subr.mxu0 0.0
    %3815 = vmatpush1.msra.mxu0 0.0
    %3816 = vmatprep.subr.mxu0 0.0
    %3817 = vmatpush1.msra.mxu0 0.0
    %3818 = vmatprep.subr.mxu0 0.0
    %3819 = vmatpush1.msra.mxu0 0.0
    %3820 = vmatprep.subr.mxu0 0.0
    %3821 = vmatpush1.msra.mxu0 0.0
    %3822 = vmatprep.subr.mxu0 0.0
    %3823 = vmatpush1.msra.mxu0 0.0
    %3824 = vmatprep.subr.mxu0 0.0
    %3825 = vmatpush1.msra.mxu0 0.0
    %3826 = vmatprep.subr.mxu0 0.0
    %3827 = vmatpush1.msra.mxu0 0.0
    %3828 = vmatprep.subr.mxu0 0.0
    %3829 = vmatpush1.msra.mxu0 0.0
    %3830 = vmatprep.subr.mxu0 0.0
    %3831 = vmatpush1.msra.mxu0 0.0
    %3832 = vmatprep.subr.mxu0 0.0
    %3833 = vmatpush1.msra.mxu0 0.0
    %3834 = vmatprep.subr.mxu0 0.0
    %3835 = vmatpush1.msra.mxu0 0.0
    %3836 = vmatprep.mubr.f32.mxu0 0.0
    %3837 = vmatmul.mubr.f32.gmra.mrb[0].mxu0 %v3405
    %v3838 = vpop.f32.mrb[0].mxu0
    %v3839 = vadd.f32 %v3750, %v3838
    %v3840 = vpop.f32.mrb[0].mxu0
    %v3841 = vadd.f32 %v3752, %v3840
    %3842 = vmatprep.mubr.f32.mxu0 0.0
    %3843 = vmatmul.mubr.f32.gmra.mrb[0].mxu0 %v3410
    %v3844 = vpop.f32.mrb[0].mxu0
    %v3845 = vadd.f32 %v3756, %v3844
    %v3846 = vpop.f32.mrb[0].mxu0
    %v3847 = vadd.f32 %v3758, %v3846
    %3848 = vmatprep.mubr.f32.mxu0 0.0
    %3849 = vmatmul.mubr.f32.gmra.mrb[0].mxu0 %v3415
    %v3850 = vpop.f32.mrb[0].mxu0
    %v3851 = vadd.f32 %v3762, %v3850
    %v3852 = vpop.f32.mrb[0].mxu0
    %v3853 = vadd.f32 %v3764, %v3852
    %3854 = vmatprep.mubr.f32.mxu0 0.0
    %3855 = vmatmul.mubr.f32.gmra.mrb[0].mxu0 %v3420
    %v3856 = vpop.f32.mrb[0].mxu0
    %v3857 = vadd.f32 %v3768, %v3856
    %v3858 = vpop.f32.mrb[0].mxu0
    %v3859 = vadd.f32 %v3770, %v3858
    %3860 = vdwg.mxu0
    %v3861 = vadd.f32 %v3839, %v3845
    %v3862 = vadd.f32 %v3861, %v3851
    %v3863 = vadd.f32 %v3862, %v3857
    %v3864 = vrot.slane %v3863, 4
    %v3865 = vadd.f32 %v3863, %v3864
    %v3866 = vrot.slane %v3865, 2
    %v3867 = vadd.f32 %v3865, %v3866
    %v3868 = vrot.slane %v3867, 1
    %v3869 = vadd.f32 %v3867, %v3868
    %v3870 = vadd.f32 %v3841, %v3847
    %v3871 = vadd.f32 %v3870, %v3853
    %v3872 = vadd.f32 %v3871, %v3859
    %v3873 = vrot.slane %v3872, 4
    %v3874 = vadd.f32 %v3872, %v3873
    %v3875 = vrot.slane %v3874, 2
    %v3876 = vadd.f32 %v3874, %v3875
    %v3877 = vrot.slane %v3876, 1
    %v3878 = vadd.f32 %v3876, %v3877
    %v3879 = vmul.f32 %v3869, 0.03125
    %v3880 = vmul.f32 %v3878, 0.03125
    %v3881 = vsub.f32 %v3839, %v3879
    %v3882 = vsub.f32 %v3841, %v3880
    %v3883 = vsub.f32 %v3845, %v3879
    %v3884 = vsub.f32 %v3847, %v3880
    %v3885 = vsub.f32 %v3851, %v3879
    %v3886 = vsub.f32 %v3853, %v3880
    %v3887 = vsub.f32 %v3857, %v3879
    %v3888 = vsub.f32 %v3859, %v3880
    %v3889 = vmul.f32 %v3881, %v3881
    %v3890 = vmul.f32 %v3882, %v3882
    %v3891 = vmul.f32 %v3883, %v3883
    %v3892 = vmul.f32 %v3884, %v3884
    %v3893 = vmul.f32 %v3885, %v3885
    %v3894 = vmul.f32 %v3886, %v3886
    %v3895 = vmul.f32 %v3887, %v3887
    %v3896 = vmul.f32 %v3888, %v3888
    %v3897 = vadd.f32 %v3889, %v3891
    %v3898 = vadd.f32 %v3897, %v3893
    %v3899 = vadd.f32 %v3898, %v3895
    %v3900 = vrot.slane %v3899, 4
    %v3901 = vadd.f32 %v3899, %v3900
    %v3902 = vrot.slane %v3901, 2
    %v3903 = vadd.f32 %v3901, %v3902
    %v3904 = vrot.slane %v3903, 1
    %v3905 = vadd.f32 %v3903, %v3904
    %v3906 = vadd.f32 %v3890, %v3892
    %v3907 = vadd.f32 %v3906, %v3894
    %v3908 = vadd.f32 %v3907, %v3896
    %v3909 = vrot.slane %v3908, 4
    %v3910 = vadd.f32 %v3908, %v3909
    %v3911 = vrot.slane %v3910, 2
    %v3912 = vadd.f32 %v3910, %v3911
    %v3913 = vrot.slane %v3912, 1
    %v3914 = vadd.f32 %v3912, %v3913
    %v3915 = vmul.f32 %v3905, 0.03125
    %v3916 = vmul.f32 %v3914, 0.03125
    %v3917 = vadd.f32 %v3915, 1e-05
    %v3918 = vadd.f32 %v3916, 1e-05
    %v3919 = vrsqrt.pop %v3917
    %v3920 = vrsqrt.pop %v3918
    %v3921 = vmul.f32 %v3881, %v3919
    %v3922 = vmul.f32 %v3882, %v3920
    %v3923 = vmul.f32 %v3883, %v3919
    %v3924 = vmul.f32 %v3884, %v3920
    %v3925 = vmul.f32 %v3885, %v3919
    %v3926 = vmul.f32 %v3886, %v3920
    %v3927 = vmul.f32 %v3887, %v3919
    %v3928 = vmul.f32 %v3888, %v3920
    %s3929 = scalar_lea.vmem [#allocation7], 2321
    %v3930 = vld [vmem:[%s3929] ss:$8 sm:$0x3]
    %s3931 = scalar_lea.vmem [#allocation7], 2322
    %v3932 = vld [vmem:[%s3931] ss:$8 sm:$0x3]
    %v3934 = vlaneseq
    %v3935 = vshrl.u32 %v3934, 7
    %v3936 = vsub.s32 0, %v3935
    %v3937 = vrot.slane %v3930, %v3936
    %v3938 = vlaneseq
    %v3939 = vshrl.u32 %v3938, 7
    %v3940 = vsub.s32 1, %v3939
    %v3941 = vrot.slane %v3930, %v3940
    %v3944 = vmul.f32 %v3937, %v3921
    %v3945 = vmul.f32 %v3941, %v3922
    %v3946 = vmul.f32 %v3937, %v3923
    %v3947 = vmul.f32 %v3941, %v3924
    %v3948 = vmul.f32 %v3937, %v3925
    %v3949 = vmul.f32 %v3941, %v3926
    %v3950 = vmul.f32 %v3937, %v3927
    %v3951 = vmul.f32 %v3941, %v3928
    %v3953 = vlaneseq
    %v3954 = vshrl.u32 %v3953, 7
    %v3955 = vsub.s32 0, %v3954
    %v3956 = vrot.slane %v3932, %v3955
    %v3957 = vlaneseq
    %v3958 = vshrl.u32 %v3957, 7
    %v3959 = vsub.s32 1, %v3958
    %v3960 = vrot.slane %v3932, %v3959
    %v3963 = vadd.f32 %v3944, %v3956
    %v3964 = vadd.f32 %v3945, %v3960
    %v3965 = vadd.f32 %v3946, %v3956
    %v3966 = vadd.f32 %v3947, %v3960
    %v3967 = vadd.f32 %v3948, %v3956
    %v3968 = vadd.f32 %v3949, %v3960
    %v3969 = vadd.f32 %v3950, %v3956
    %v3970 = vadd.f32 %v3951, %v3960
    %v3971 = vtanh.pop %v3963
    %v3972 = vtanh.pop %v3964
    %v3973 = vtanh.pop %v3965
    %v3974 = vtanh.pop %v3966
    %v3975 = vtanh.pop %v3967
    %v3976 = vtanh.pop %v3968
    %v3977 = vtanh.pop %v3969
    %v3978 = vtanh.pop %v3970
    %v3979 = vld [vmem:[#allocation7 + $0x920] sm:$0xff]
    %v3980 = vld [vmem:[#allocation7 + $0x928] sm:$0xff]
    %v3981 = vld [vmem:[#allocation7 + $0x930] sm:$0xff]
    %v3982 = vld [vmem:[#allocation7 + $0x938] sm:$0xff]
    %v3983 = vmul.f32 %v3971, %v3979
    %v3984 = vmul.f32 %v3972, %v3980
    %v3985 = vmul.f32 %v3973, %v3981
    %v3986 = vmul.f32 %v3974, %v3982
    %v3987 = vmul.f32 %v3975, %v3979
    %v3988 = vmul.f32 %v3976, %v3980
    %v3989 = vmul.f32 %v3977, %v3981
    %v3990 = vmul.f32 %v3978, %v3982
    %v3991 = vadd.f32 %v3983, %v3984
    %3992 = vadd.xlane.f32.xlu0 %v3991
    %v3993 = vpop.xlane.xlu0 %3992
    %v3994 = vadd.f32 %v3985, %v3986
    %3995 = vadd.xlane.f32.xlu0 %v3994
    %v3996 = vpop.xlane.xlu0 %3995
    %v3997 = vadd.f32 %v3987, %v3988
    %3998 = vadd.xlane.f32.xlu0 %v3997
    %v3999 = vpop.xlane.xlu0 %3998
    %v4000 = vadd.f32 %v3989, %v3990
    %4001 = vadd.xlane.f32.xlu0 %v4000
    %v4002 = vpop.xlane.xlu0 %4001
    %v4007 = vlaneseq
    %v4008 = vand.u32 %v4007, 127
    %v4009 = vlaneseq
    %v4010 = vshrl.u32 %v4009, 7
    %v4011 = vsub.s32 %v4008, %v4010
    %v4012 = vrot.slane %v3993, %v4011
    %v4013 = vadd.s32 %v4008, 4294967288
    %v4014 = vlaneseq
    %v4015 = vshrl.u32 %v4014, 7
    %v4016 = vsub.s32 %v4013, %v4015
    %v4017 = vrot.slane %v3996, %v4016
    %vm4018 = vcmask 130112
    %v4019 = vsel %vm4018, %v4017, %v4012
    %v4020 = vlaneseq
    %v4021 = vshrl.u32 %v4020, 7
    %v4022 = vsub.s32 %v4008, %v4021
    %v4023 = vrot.slane %v3999, %v4022
    %v4024 = vlaneseq
    %v4025 = vshrl.u32 %v4024, 7
    %v4026 = vsub.s32 %v4013, %v4025
    %v4027 = vrot.slane %v4002, %v4026
    %v4028 = vsel %vm4018, %v4027, %v4023
    %vm4029 = vcmask 1041409
    %v4030 = vsel %vm4029, %v4028, %v4019
    %vm4032 = vcmask 123904
    %v4033 = vsel %vm4032, %v4030, 0.0
    %4034 = vadd.xlane.f32.xlu0 %v4033
    %v4035 = vpop.xlane.xlu0 %4034
    %v4036 = vld [vmem:[#allocation7 + $0x940] ss:$0 sm:$0xff]
    %v4037 = vadd.f32 %v4035, %v4036
    %vm4038 = vcmask 1024
    %4039 = vst.msk [vmem:[%s2] sm:$0x3] %vm4038, %v4037
    // Predicated region
    $region14: #{discriminator_forward.1} parent=1 // pred_check
      _
    $region15: #{discriminator_forward.1} parent=1 // pred_check_branch
      %4041 = sbr.rel (0) target = $region17
    $region16: #{discriminator_forward.1} parent=1 // pred_region
      _
    $region17: #{discriminator_forward.1} parent=1 // pred_fallthru
      _
    // Predicated region
    $region18: #{discriminator_forward.1} parent=1 // pred_check
      _
    $region19: #{discriminator_forward.1} parent=1 // pred_check_branch
      %4043 = sbr.rel (0) target = $region21
    $region20: #{discriminator_forward.1} parent=1 // pred_region
      _
    $region21: #{discriminator_forward.1} parent=1 // pred_fallthru
      _
    %4044 = vsyncpa [#allocation8], 1

</llo_original>
